<compile_context>
chip_gen: v6e
topology: v6e:2x2x1
jax: 0.10.0
libtpu: 0.0.40
codegen_flags: <defaults>
</compile_context>

<pallas_src>
from functools import partial

import numpy as np
import jax
import jax.numpy as jnp
from jax import lax
from jax.experimental import pallas as pl
from jax.experimental.pallas import tpu as pltpu


# ---------------------------------------------------------------------------
# deterministic "module parameters" (OKS sigmas for num_keypoints keypoints)
# ---------------------------------------------------------------------------
def make_sigmas(num_keypoints: int) -> np.ndarray:
    base = np.array(
        [.26, .25, .25, .35, .35, .79, .79, .72, .72, .62, .62,
         1.07, 1.07, .87, .87, .89, .89], dtype=np.float32)
    reps = int(np.ceil(num_keypoints / len(base)))
    return (np.tile(base, reps)[:num_keypoints] / 10.0).astype(np.float32)


# ---------------------------------------------------------------------------
# Pallas kernel: one (TILE_Q, T_pad) block of the per-batch cost matrix.
# The body loops over SUB-row sub-tiles so the per-keypoint accumulator chain
# stays small (vreg-resident) instead of being a (TILE_Q, T_pad) live range.
# ---------------------------------------------------------------------------
def _cost_kernel(logits_ref,    # VMEM (1, TILE_Q, C)        prediction logits (native dtype)
                 bbox_ref,      # VMEM (1, TILE_Q, 4)        cxcywh (normalized)
                 kpt_ref,       # VMEM (1, TILE_Q, 2*K8)     [x_0..x_K-1 | y_0..y_K-1] padded
                 misc_ref,      # VMEM (1, MR, T)  rows: [0:C]=onehot*w_class, [C:C+4]=gt cxcywh,
                                #                        [C+4]=l1pad * w_kpt/max(2nv,1)
                 kdat_ref,      # VMEM (1, 6*K8, T) sections: gx | gy | vL1 | vOKS(-) | -isx | -isy
                 out_ref,       # VMEM (1, TILE_Q, T)
                 *,
                 num_keypoints, k8, num_classes, sub_rows,
                 w_bbox, w_giou,
                 focal_loss, focal_alpha, focal_gamma):
    f32 = jnp.float32
    K, K8, C, SUB = num_keypoints, k8, num_classes, sub_rows
    TQ = out_ref.shape[1]
    T = out_ref.shape[2]
    n_sub = TQ // SUB
    eps = 1e-7

    def sub_body(r, carry):
        r0 = pl.multiple_of(r * SUB, SUB)

        # ------------- classification cost (gather as one-hot matmul; w_class folded in onehot)
        logits = logits_ref[0, pl.ds(r0, SUB), :].astype(f32)              # (SUB, C)
        if focal_loss:
            prob = jax.nn.sigmoid(logits)
            neg_log_p = jax.nn.softplus(-logits)        # -log(sigmoid(x))
            neg_log_1mp = jax.nn.softplus(logits)       # -log(1 - sigmoid(x))
            if focal_gamma == 2.0:
                pg = prob * prob
                qg = (1.0 - prob) * (1.0 - prob)
            else:
                pg = prob ** focal_gamma
                qg = (1.0 - prob) ** focal_gamma
            cls_mat = (focal_alpha * qg * neg_log_p
                       - (1.0 - focal_alpha) * pg * neg_log_1mp)
        else:
            m = jnp.max(logits, axis=-1, keepdims=True)
            e = jnp.exp(logits - m)
            inv = pl.reciprocal(jnp.sum(e, axis=-1, keepdims=True))        # (SUB,1), exact
            cls_mat = -(e * inv)
        onehot = misc_ref[0, 0:C, :]                                        # (C, T), *w_class
        acc = jnp.dot(cls_mat, onehot, preferred_element_type=f32)          # (SUB, T)

        # ------------- bbox L1 cost (cdist, p=1)
        bbox = bbox_ref[0, pl.ds(r0, SUB), :].astype(f32)                   # (SUB, 4)
        pcx, pcy = bbox[:, 0:1], bbox[:, 1:2]
        pw, ph = bbox[:, 2:3], bbox[:, 3:4]
        gcx = misc_ref[0, C + 0:C + 1, :]
        gcy = misc_ref[0, C + 1:C + 2, :]
        gw = misc_ref[0, C + 2:C + 3, :]
        gh = misc_ref[0, C + 3:C + 4, :]
        acc = acc + w_bbox * (jnp.abs(pcx - gcx) + jnp.abs(pcy - gcy)
                              + jnp.abs(pw - gw) + jnp.abs(ph - gh))

        # ------------- GIoU cost (epsilon-guarded; divides -> EUP approx reciprocal)
        px1, py1 = pcx - 0.5 * pw, pcy - 0.5 * ph
        px2, py2 = pcx + 0.5 * pw, pcy + 0.5 * ph
        gx1, gy1 = gcx - 0.5 * gw, gcy - 0.5 * gh
        gx2, gy2 = gcx + 0.5 * gw, gcy + 0.5 * gh
        area_p = (px2 - px1) * (py2 - py1)                                  # (SUB,1)
        area_g = (gx2 - gx1) * (gy2 - gy1)                                  # (1,T)
        iw = jnp.maximum(jnp.minimum(px2, gx2) - jnp.maximum(px1, gx1), 0.0)
        ih = jnp.maximum(jnp.minimum(py2, gy2) - jnp.maximum(py1, gy1), 0.0)
        inter = iw * ih                                                     # (SUB,T)
        union = area_p + area_g - inter
        cw = jnp.maximum(px2, gx2) - jnp.minimum(px1, gx1)
        ch = jnp.maximum(py2, gy2) - jnp.minimum(py1, gy1)
        area_c = cw * ch
        giou = (inter * pl.reciprocal(union + eps, approx=True)
                - (area_c - union) * pl.reciprocal(area_c + eps, approx=True))
        acc = acc - w_giou * giou

        # ------------- keypoint L1 + OKS cost (signs / normalizers / weights pre-folded)
        kxy = kpt_ref[0, pl.ds(r0, SUB), :].astype(f32)                     # (SUB, 2*K8)
        kpt_acc = jnp.zeros((SUB, T), f32)
        oks_acc = jnp.zeros((SUB, T), f32)
        for k in range(K):
            px = kxy[:, k:k + 1]                                            # (SUB,1)
            py = kxy[:, K8 + k:K8 + k + 1]                                  # (SUB,1)
            gx = kdat_ref[0, 0 * K8 + k:0 * K8 + k + 1, :]                  # (1,T)
            gy = kdat_ref[0, 1 * K8 + k:1 * K8 + k + 1, :]
            vl1 = kdat_ref[0, 2 * K8 + k:2 * K8 + k + 1, :]                 # vis * w_kpt/max(2nv,1)
            vok = kdat_ref[0, 3 * K8 + k:3 * K8 + k + 1, :]                 # -vis * w_oks/max(nv,1)
            nsx = kdat_ref[0, 4 * K8 + k:4 * K8 + k + 1, :]                 # -img_w^2/(2 var area)
            nsy = kdat_ref[0, 5 * K8 + k:5 * K8 + k + 1, :]
            dx = px - gx
            dy = py - gy
            kpt_acc = kpt_acc + vl1 * (jnp.abs(dx) + jnp.abs(dy))
            oks_acc = oks_acc + vok * jnp.exp(dx * dx * nsx + dy * dy * nsy)
        l1pad = misc_ref[0, C + 4:C + 5, :]                                 # already scaled
        acc = acc + kpt_acc + oks_acc + l1pad

        out_ref[0, pl.ds(r0, SUB), :] = acc.astype(out_ref.dtype)
        return carry

    lax.fori_loop(0, n_sub, sub_body, 0)


# ---------------------------------------------------------------------------
# wrapper: numpy host precompute (fold constants, pad, pack) + pallas_call
# ---------------------------------------------------------------------------
def hungarian_cost_matrix(pred_logits, pred_bboxes, pred_kpts,
                          tgt_ids, tgt_bbox, tgt_kpt, tgt_area, orig_size, sizes,
                          *, num_keypoints, sigmas,
                          cost_class=1.0, cost_bbox=1.0, cost_giou=1.0,
                          kpt_cost=1.0, oks_cost=1.0,
                          focal_loss=False, focal_alpha=0.25, focal_gamma=2.0):
    """Returns a (B, Q, T_pad) cost matrix; batch b's real targets are columns
    [0, sizes[b]).  pred_kpts must be (B, Q, K, 2)."""
    B, Q, C = pred_logits.shape
    K = num_keypoints
    K8 = ((K + 7) // 8) * 8
    assert sum(sizes) == tgt_bbox.shape[0]

    # ---- lane-dense target padding (multiple of 128 -> unmasked vector stores)
    T_max = max(max(sizes) if len(sizes) else 1, 1)
    T_pad = ((T_max + 127) // 128) * 128

    # ---- query-row sub-tile: 2 f32 accumulators of (SUB, T_pad) kept small
    # (<= ~8 vregs each) so the unrolled K-loop chain stays vreg-resident.
    q8 = ((Q + 7) // 8) * 8
    SUB = min(32, q8)
    while SUB > 8 and SUB * T_pad > 8 * 1024:
        SUB //= 2

    # ---- query tile: as large as reasonable (few grid steps, minimal tail waste);
    # VMEM per step is far below the scoped limit even at TILE_Q=512.
    max_tile = 512
    n_q = max(1, -(-Q // max_tile))
    TILE_Q = -(-Q // (n_q * SUB)) * SUB
    Q_pad = n_q * TILE_Q

    # ---- predictions: native dtype, de-interleave keypoint x/y, pad Q.
    kx = pred_kpts[..., 0]                                   # (B, Q, K)
    ky = pred_kpts[..., 1]
    if K8 != K:
        kx = jnp.pad(kx, ((0, 0), (0, 0), (0, K8 - K)))
        ky = jnp.pad(ky, ((0, 0), (0, 0), (0, K8 - K)))
    kpts = jnp.concatenate([kx, ky], axis=-1)                # (B, Q, 2*K8)
    logits = pred_logits
    bboxes = pred_bboxes
    if Q_pad != Q:
        pq = Q_pad - Q
        logits = jnp.pad(logits, ((0, 0), (0, pq), (0, 0)))
        bboxes = jnp.pad(bboxes, ((0, 0), (0, pq), (0, 0)))
        kpts = jnp.pad(kpts, ((0, 0), (0, pq), (0, 0)))

    # ---- target-side precompute entirely on the host in numpy (tiny data),
    # packed into two arrays to keep per-grid-step DMA descriptor count low.
    img_h, img_w = float(orig_size[0]), float(orig_size[1])
    sig = np.asarray(sigmas, dtype=np.float64)
    var2 = 2.0 * (2.0 * sig) ** 2                            # 2 * variances, (K,)

    ids_np = np.asarray(tgt_ids).astype(np.int64)
    bbox_np = np.asarray(tgt_bbox, dtype=np.float32)
    kpt_np = np.asarray(tgt_kpt, dtype=np.float32).reshape(-1, K, 3)
    area_np = np.asarray(tgt_area, dtype=np.float64)

    MR = ((C + 5 + 7) // 8) * 8
    misc = np.zeros((B, MR, T_pad), np.float32)
    kdat = np.zeros((B, 6 * K8, T_pad), np.float32)
    # padded target columns: safe dummy box so GIoU stays finite; all masks zero.
    misc[:, C + 0, :] = 0.5
    misc[:, C + 1, :] = 0.5
    misc[:, C + 2, :] = 1.0
    misc[:, C + 3, :] = 1.0

    off = 0
    for b, s in enumerate(sizes):
        if s == 0:
            continue
        ids = ids_np[off:off + s]
        bb = bbox_np[off:off + s]                            # (s,4)
        kk = kpt_np[off:off + s]                             # (s,K,3)
        ar = area_np[off:off + s]                            # (s,)
        off += s

        misc[b, ids, np.arange(s)] = float(cost_class)       # one-hot, pre-scaled by w_class
        misc[b, C:C + 4, :s] = bb.T

        gxy = kk[..., :2].astype(np.float64)                 # (s,K,2)
        vis = (kk[..., 2] > 0.0).astype(np.float64)          # (s,K)
        nv = vis.sum(axis=1)                                 # (s,)
        inv2 = float(kpt_cost) / np.maximum(2.0 * nv, 1.0)   # folds w_kpt
        inv1 = float(oks_cost) / np.maximum(nv, 1.0)         # folds w_oks
        l1p = ((1.0 - vis) * (np.abs(gxy[..., 0]) + np.abs(gxy[..., 1]))).sum(axis=1)
        misc[b, C + 4, :s] = (inv2 * l1p).astype(np.float32)

        denom = np.maximum(ar, 1e-6)[:, None] * var2[None, :]           # (s,K)
        kdat[b, 0 * K8:0 * K8 + K, :s] = gxy[..., 0].T
        kdat[b, 1 * K8:1 * K8 + K, :s] = gxy[..., 1].T
        kdat[b, 2 * K8:2 * K8 + K, :s] = (vis * inv2[:, None]).T
        kdat[b, 3 * K8:3 * K8 + K, :s] = (-(vis * inv1[:, None])).T     # sign folded
        kdat[b, 4 * K8:4 * K8 + K, :s] = (-(img_w * img_w) / denom).T   # sign folded
        kdat[b, 5 * K8:5 * K8 + K, :s] = (-(img_h * img_h) / denom).T

    kernel = partial(_cost_kernel,
                     num_keypoints=K, k8=K8, num_classes=C, sub_rows=SUB,
                     w_bbox=float(cost_bbox), w_giou=float(cost_giou),
                     focal_loss=bool(focal_loss),
                     focal_alpha=float(focal_alpha),
                     focal_gamma=float(focal_gamma))

    pred_map = lambda b, i: (b, i, 0)
    tgt_map = lambda b, i: (b, 0, 0)

    cost = pl.pallas_call(
        kernel,
        out_shape=jax.ShapeDtypeStruct((B, Q_pad, T_pad), jnp.float32),
        grid=(B, n_q),
        in_specs=[
            pl.BlockSpec((1, TILE_Q, C), pred_map),
            pl.BlockSpec((1, TILE_Q, 4), pred_map),
            pl.BlockSpec((1, TILE_Q, 2 * K8), pred_map),
            pl.BlockSpec((1, MR, T_pad), tgt_map),
            pl.BlockSpec((1, 6 * K8, T_pad), tgt_map),
        ],
        out_specs=pl.BlockSpec((1, TILE_Q, T_pad), pred_map),
        compiler_params=pltpu.CompilerParams(
            dimension_semantics=("parallel", "parallel")),
    )(logits, bboxes, kpts, jnp.asarray(misc), jnp.asarray(kdat))

    return cost[:, :Q, :]                                    # (B, Q, T_pad)


# ---------------------------------------------------------------------------
# host-side Hungarian (linear_sum_assignment has no Pallas equivalent)
# ---------------------------------------------------------------------------
def _linear_sum_assignment_np(cost):
    """Shortest-augmenting-path Hungarian (minimization), rectangular OK."""
    cost = np.asarray(cost, dtype=np.float64)
    transposed = cost.shape[0] > cost.shape[1]
    if transposed:
        cost = cost.T
    n, m = cost.shape
    INF = float("inf")
    u = np.zeros(n + 1)
    v = np.zeros(m + 1)
    p = np.zeros(m + 1, dtype=np.int64)
    way = np.zeros(m + 1, dtype=np.int64)
    for i in range(1, n + 1):
        p[0] = i
        j0 = 0
        minv = np.full(m + 1, INF)
        used = np.zeros(m + 1, dtype=bool)
        while True:
            used[j0] = True
            i0 = p[j0]
            delta = INF
            j1 = 0
            for j in range(1, m + 1):
                if not used[j]:
                    cur = cost[i0 - 1, j - 1] - u[i0] - v[j]
                    if cur < minv[j]:
                        minv[j] = cur
                        way[j] = j0
                    if minv[j] < delta:
                        delta = minv[j]
                        j1 = j
            for j in range(m + 1):
                if used[j]:
                    u[p[j]] += delta
                    v[j] -= delta
                else:
                    minv[j] -= delta
            j0 = j1
            if p[j0] == 0:
                break
        while True:
            j1 = way[j0]
            p[j0] = p[j1]
            j0 = j1
            if j0 == 0:
                break
    rows = np.array([p[j] - 1 for j in range(1, m + 1) if p[j] != 0], dtype=np.int64)
    cols = np.array([j - 1 for j in range(1, m + 1) if p[j] != 0], dtype=np.int64)
    if transposed:
        rows, cols = cols, rows
    order = np.argsort(rows)
    return rows[order], cols[order]


def hungarian_match(cost_matrix, sizes):
    # TODO(synk): linear_sum_assignment is sequential/combinatorial (no Pallas
    # equivalent); executed on host in numpy on the Pallas-produced cost matrix.
    cm = np.asarray(cost_matrix)
    indices = []
    for b, s in enumerate(sizes):
        c = cm[b, :, :s]                  # per-batch layout: real targets first
        i, j = _linear_sum_assignment_np(c)
        indices.append((i.astype(np.int64), j.astype(np.int64)))
    return indices


# ---------------------------------------------------------------------------
# pure-numpy reference (mirrors the torch forward), concatenated-T layout
# ---------------------------------------------------------------------------
def reference_cost_matrix(pred_logits, pred_bboxes, pred_kpts,
                          tgt_ids, tgt_bbox, tgt_kpt, tgt_area, orig_size,
                          sigmas, K):
    B, Q, C = pred_logits.shape
    N = B * Q
    T = tgt_bbox.shape[0]
    logits = pred_logits.reshape(N, C).astype(np.float64)
    e = np.exp(logits - logits.max(-1, keepdims=True))
    prob = e / e.sum(-1, keepdims=True)
    cost_class = -prob[:, tgt_ids]

    out_bbox = pred_bboxes.reshape(N, 4).astype(np.float64)
    tb = tgt_bbox.astype(np.float64)
    cost_bbox = np.abs(out_bbox[:, None, :] - tb[None, :, :]).sum(-1)

    def to_xyxy(b):
        cx, cy, w, h = b[:, 0], b[:, 1], b[:, 2], b[:, 3]
        return np.stack([cx - 0.5 * w, cy - 0.5 * h, cx + 0.5 * w, cy + 0.5 * h], -1)

    p = to_xyxy(out_bbox)
    g = to_xyxy(tb)
    area_p = (p[:, 2] - p[:, 0]) * (p[:, 3] - p[:, 1])
    area_g = (g[:, 2] - g[:, 0]) * (g[:, 3] - g[:, 1])
    lt = np.maximum(p[:, None, :2], g[None, :, :2])
    rb = np.minimum(p[:, None, 2:], g[None, :, 2:])
    wh = np.clip(rb - lt, 0.0, None)
    inter = wh[..., 0] * wh[..., 1]
    union = area_p[:, None] + area_g[None, :] - inter
    iou = inter / union
    clt = np.minimum(p[:, None, :2], g[None, :, :2])
    crb = np.maximum(p[:, None, 2:], g[None, :, 2:])
    cwh = np.clip(crb - clt, 0.0, None)
    areac = cwh[..., 0] * cwh[..., 1]
    cost_giou = -(iou - (areac - union) / areac)

    kpt = pred_kpts.reshape(N, K, 2).astype(np.float64)
    gt = tgt_kpt.reshape(T, K, 3).astype(np.float64)
    valid = gt[..., 2]
    gxy = gt[..., :2]
    img_h, img_w = orig_size

    kpt_cost = np.zeros((N, T))
    for i in range(T):
        vf = valid[i] > 0
        pred_tmp = kpt.copy()
        pred_tmp[:, ~vf, :] = 0.0
        c = np.abs(pred_tmp.reshape(N, -1) - gxy[i].reshape(1, -1)).sum(-1)
        kpt_cost[:, i] = c / max(vf.sum() * 2.0, 1.0)

    variances = (np.asarray(sigmas, dtype=np.float64) * 2.0) ** 2
    pk = kpt * np.array([img_w, img_h])
    gk = gxy * np.array([img_w, img_h])
    oks_cost = np.zeros((N, T))
    for i in range(T):
        d2 = (pk[:, :, 0] - gk[i, :, 0][None]) ** 2 + (pk[:, :, 1] - gk[i, :, 1][None]) ** 2
        vis = valid[i] > 0
        d0 = d2 / (tgt_area[i] * variances * 2.0)
        oks = np.exp(-d0[:, vis]).sum(-1) / vis.sum()
        oks_cost[:, i] = -oks

    total = cost_bbox + cost_class + cost_giou + kpt_cost + oks_cost
    return total.reshape(B, Q, T)


# ---------------------------------------------------------------------------
if __name__ == "__main__":
    key = jax.random.PRNGKey(0)
    B, Q, C, K = 2, 8, 8, 19
    sizes = [3, 2]
    T = sum(sizes)
    orig_size = (480.0, 640.0)  # (img_h, img_w)

    ks = jax.random.split(key, 10)
    pred_logits = jax.random.normal(ks[0], (B, Q, C), jnp.float32)
    ctr = jax.random.uniform(ks[1], (B, Q, 2), minval=0.2, maxval=0.8)
    wh = jax.random.uniform(ks[2], (B, Q, 2), minval=0.05, maxval=0.4)
    pred_bboxes = jnp.concatenate([ctr, wh], axis=-1)
    pred_kpts = jax.random.uniform(ks[3], (B, Q, K, 2))

    tgt_ids = jax.random.randint(ks[4], (T,), 0, C)
    tctr = jax.random.uniform(ks[5], (T, 2), minval=0.25, maxval=0.75)
    twh = jax.random.uniform(ks[6], (T, 2), minval=0.1, maxval=0.4)
    tgt_bbox = jnp.concatenate([tctr, twh], axis=-1)
    tkxy = jax.random.uniform(ks[7], (T, K, 2))
    tvis = (jax.random.uniform(ks[8], (T, K)) > 0.3).astype(jnp.float32) * 2.0
    tvis = tvis.at[:, 0].set(2.0)                       # >= 1 visible kpt / target
    tkxy = tkxy * (tvis[..., None] > 0)                 # invalid gt kpts set to 0
    tgt_kpt = jnp.concatenate([tkxy, tvis[..., None]], axis=-1).reshape(T, 3 * K)
    tgt_area = jax.random.uniform(ks[9], (T,), minval=2000.0, maxval=20000.0)

    sigmas = make_sigmas(K)

    cost = hungarian_cost_matrix(
        pred_logits, pred_bboxes, pred_kpts,
        tgt_ids, tgt_bbox, tgt_kpt, tgt_area, orig_size, sizes,
        num_keypoints=K, sigmas=sigmas)
    cost = jax.block_until_ready(cost)
    cost_np = np.asarray(cost)
    assert np.isfinite(cost_np).all()                   # padded columns stay finite

    ref = reference_cost_matrix(
        np.asarray(pred_logits), np.asarray(pred_bboxes), np.asarray(pred_kpts),
        np.asarray(tgt_ids), np.asarray(tgt_bbox), np.asarray(tgt_kpt),
        np.asarray(tgt_area), orig_size, sigmas, K)
    off = 0
    # tolerance slightly looser than before: GIoU now uses EUP approx reciprocals.
    for b, s in enumerate(sizes):
        np.testing.assert_allclose(cost_np[b, :, :s], ref[b, :, off:off + s],
                                   rtol=5e-3, atol=5e-3)
        off += s

    indices = hungarian_match(cost_np, sizes)
    assert len(indices) == B
    for (i_idx, j_idx), s in zip(indices, sizes):
        assert len(i_idx) == len(j_idx) == min(Q, s)

    print("KERNEL_OK")
</pallas_src>

<mosaic_0001>
module attributes {stable_mosaic.version = 11 : i64} {
  func.func @_cost_kernel(%arg0: i32, %arg1: i32, %arg2: memref<1x8x8xf32, #tpu.memory_space<vmem>>, %arg3: memref<1x8x4xf32, #tpu.memory_space<vmem>>, %arg4: memref<1x8x48xf32, #tpu.memory_space<vmem>>, %arg5: memref<1x16x128xf32, #tpu.memory_space<vmem>>, %arg6: memref<1x144x128xf32, #tpu.memory_space<vmem>>, %arg7: memref<1x8x128xf32, #tpu.memory_space<vmem>>) attributes {dimension_semantics = [#tpu.dimension_semantics<parallel>, #tpu.dimension_semantics<parallel>], iteration_bounds = array<i64: 2, 1>, scalar_prefetch = 0 : i64, scratch_operands = 0 : i64, tpu.core_type = #tpu.core_type<tc>, window_params = [{transform_indices = @transform_0, window_bounds = array<i64: 1, 8, 8>}, {transform_indices = @transform_1, window_bounds = array<i64: 1, 8, 4>}, {transform_indices = @transform_2, window_bounds = array<i64: 1, 8, 48>}, {transform_indices = @transform_3, window_bounds = array<i64: 1, 16, 128>}, {transform_indices = @transform_4, window_bounds = array<i64: 1, 144, 128>}, {transform_indices = @transform_5, window_bounds = array<i64: 1, 8, 128>}]} {
    %c0_i32 = arith.constant 0 : i32
    %c8_i32 = arith.constant 8 : i32
    %0 = arith.muli %c0_i32, %c8_i32 : i32
    %1 = tpu.assume_multiple %0, 8 : i32
    %c0 = arith.constant 0 : index
    %2 = arith.index_cast %1 : i32 to index
    %c0_0 = arith.constant 0 : index
    %3 = vector.load %arg2[%c0, %2, %c0_0] : memref<1x8x8xf32, #tpu.memory_space<vmem>>, vector<1x8x8xf32>
    %4 = vector.shape_cast %3 : vector<1x8x8xf32> to vector<8x8xf32>
    %cst = arith.constant dense<0xFF800000> : vector<8xf32>
    %5 = vector.multi_reduction <maximumf>, %4, %cst [1] : vector<8x8xf32> to vector<8xf32>
    %6 = vector.shape_cast %5 : vector<8xf32> to vector<8x1xf32>
    %7 = vector.broadcast %6 : vector<8x1xf32> to vector<8x8xf32>
    %8 = arith.subf %4, %7 : vector<8x8xf32>
    %9 = math.exp %8 : vector<8x8xf32>
    %cst_1 = arith.constant dense<0.000000e+00> : vector<8xf32>
    %10 = vector.multi_reduction <add>, %9, %cst_1 [1] : vector<8x8xf32> to vector<8xf32>
    %11 = vector.shape_cast %10 : vector<8xf32> to vector<8x1xf32>
    %12 = tpu.reciprocal %11 : vector<8x1xf32> -> vector<8x1xf32>
    %13 = vector.broadcast %12 : vector<8x1xf32> to vector<8x8xf32>
    %14 = arith.mulf %9, %13 : vector<8x8xf32>
    %cst_2 = arith.constant 0.000000e+00 : f32
    %15 = vector.broadcast %cst_2 : f32 to vector<8x8xf32>
    %16 = arith.subf %15, %14 : vector<8x8xf32>
    %c0_3 = arith.constant 0 : index
    %c0_4 = arith.constant 0 : index
    %c0_5 = arith.constant 0 : index
    %17 = vector.load %arg5[%c0_3, %c0_4, %c0_5] : memref<1x16x128xf32, #tpu.memory_space<vmem>>, vector<1x8x128xf32>
    %18 = vector.shape_cast %17 : vector<1x8x128xf32> to vector<8x128xf32>
    %cst_6 = arith.constant dense<0.000000e+00> : vector<8x128xf32>
    %19 = tpu.matmul %16, %18, %cst_6 {dimension_numbers = #tpu.dot_dimension_numbers<[1], [0], [0], [1], [0, 0, 1, 1], [], []>} : vector<8x8xf32>, vector<8x128xf32>, vector<8x128xf32> -> vector<8x128xf32>
    %c0_7 = arith.constant 0 : index
    %20 = arith.index_cast %1 : i32 to index
    %c0_8 = arith.constant 0 : index
    %21 = vector.load %arg3[%c0_7, %20, %c0_8] : memref<1x8x4xf32, #tpu.memory_space<vmem>>, vector<1x8x4xf32>
    %22 = vector.shape_cast %21 : vector<1x8x4xf32> to vector<8x4xf32>
    %23 = vector.extract_strided_slice %22 {offsets = [0, 0], sizes = [8, 1], strides = [1, 1]} : vector<8x4xf32> to vector<8x1xf32>
    %24 = vector.extract_strided_slice %22 {offsets = [0, 1], sizes = [8, 1], strides = [1, 1]} : vector<8x4xf32> to vector<8x1xf32>
    %25 = vector.extract_strided_slice %22 {offsets = [0, 2], sizes = [8, 1], strides = [1, 1]} : vector<8x4xf32> to vector<8x1xf32>
    %26 = vector.extract_strided_slice %22 {offsets = [0, 3], sizes = [8, 1], strides = [1, 1]} : vector<8x4xf32> to vector<8x1xf32>
    %c0_9 = arith.constant 0 : index
    %c8 = arith.constant 8 : index
    %c0_10 = arith.constant 0 : index
    %27 = vector.load %arg5[%c0_9, %c8, %c0_10] : memref<1x16x128xf32, #tpu.memory_space<vmem>>, vector<1x1x128xf32>
    %28 = vector.shape_cast %27 : vector<1x1x128xf32> to vector<1x128xf32>
    %c0_11 = arith.constant 0 : index
    %c9 = arith.constant 9 : index
    %c0_12 = arith.constant 0 : index
    %29 = vector.load %arg5[%c0_11, %c9, %c0_12] : memref<1x16x128xf32, #tpu.memory_space<vmem>>, vector<1x1x128xf32>
    %30 = vector.shape_cast %29 : vector<1x1x128xf32> to vector<1x128xf32>
    %c0_13 = arith.constant 0 : index
    %c10 = arith.constant 10 : index
    %c0_14 = arith.constant 0 : index
    %31 = vector.load %arg5[%c0_13, %c10, %c0_14] : memref<1x16x128xf32, #tpu.memory_space<vmem>>, vector<1x1x128xf32>
    %32 = vector.shape_cast %31 : vector<1x1x128xf32> to vector<1x128xf32>
    %c0_15 = arith.constant 0 : index
    %c11 = arith.constant 11 : index
    %c0_16 = arith.constant 0 : index
    %33 = vector.load %arg5[%c0_15, %c11, %c0_16] : memref<1x16x128xf32, #tpu.memory_space<vmem>>, vector<1x1x128xf32>
    %34 = vector.shape_cast %33 : vector<1x1x128xf32> to vector<1x128xf32>
    %35 = vector.broadcast %23 : vector<8x1xf32> to vector<8x128xf32>
    %36 = vector.broadcast %28 : vector<1x128xf32> to vector<8x128xf32>
    %37 = arith.subf %35, %36 : vector<8x128xf32>
    %38 = math.absf %37 : vector<8x128xf32>
    %39 = vector.broadcast %24 : vector<8x1xf32> to vector<8x128xf32>
    %40 = vector.broadcast %30 : vector<1x128xf32> to vector<8x128xf32>
    %41 = arith.subf %39, %40 : vector<8x128xf32>
    %42 = math.absf %41 : vector<8x128xf32>
    %43 = arith.addf %38, %42 : vector<8x128xf32>
    %44 = vector.broadcast %25 : vector<8x1xf32> to vector<8x128xf32>
    %45 = vector.broadcast %32 : vector<1x128xf32> to vector<8x128xf32>
    %46 = arith.subf %44, %45 : vector<8x128xf32>
    %47 = math.absf %46 : vector<8x128xf32>
    %48 = arith.addf %43, %47 : vector<8x128xf32>
    %49 = vector.broadcast %26 : vector<8x1xf32> to vector<8x128xf32>
    %50 = vector.broadcast %34 : vector<1x128xf32> to vector<8x128xf32>
    %51 = arith.subf %49, %50 : vector<8x128xf32>
    %52 = math.absf %51 : vector<8x128xf32>
    %53 = arith.addf %48, %52 : vector<8x128xf32>
    %cst_17 = arith.constant 1.000000e+00 : f32
    %54 = vector.broadcast %cst_17 : f32 to vector<8x128xf32>
    %55 = arith.mulf %54, %53 : vector<8x128xf32>
    %56 = arith.addf %19, %55 : vector<8x128xf32>
    %cst_18 = arith.constant 5.000000e-01 : f32
    %57 = vector.broadcast %cst_18 : f32 to vector<8x1xf32>
    %58 = arith.mulf %57, %25 : vector<8x1xf32>
    %59 = arith.subf %23, %58 : vector<8x1xf32>
    %cst_19 = arith.constant 5.000000e-01 : f32
    %60 = vector.broadcast %cst_19 : f32 to vector<8x1xf32>
    %61 = arith.mulf %60, %26 : vector<8x1xf32>
    %62 = arith.subf %24, %61 : vector<8x1xf32>
    %cst_20 = arith.constant 5.000000e-01 : f32
    %63 = vector.broadcast %cst_20 : f32 to vector<8x1xf32>
    %64 = arith.mulf %63, %25 : vector<8x1xf32>
    %65 = arith.addf %23, %64 : vector<8x1xf32>
    %cst_21 = arith.constant 5.000000e-01 : f32
    %66 = vector.broadcast %cst_21 : f32 to vector<8x1xf32>
    %67 = arith.mulf %66, %26 : vector<8x1xf32>
    %68 = arith.addf %24, %67 : vector<8x1xf32>
    %cst_22 = arith.constant 5.000000e-01 : f32
    %69 = vector.broadcast %cst_22 : f32 to vector<1x128xf32>
    %70 = arith.mulf %69, %32 : vector<1x128xf32>
    %71 = arith.subf %28, %70 : vector<1x128xf32>
    %cst_23 = arith.constant 5.000000e-01 : f32
    %72 = vector.broadcast %cst_23 : f32 to vector<1x128xf32>
    %73 = arith.mulf %72, %34 : vector<1x128xf32>
    %74 = arith.subf %30, %73 : vector<1x128xf32>
    %cst_24 = arith.constant 5.000000e-01 : f32
    %75 = vector.broadcast %cst_24 : f32 to vector<1x128xf32>
    %76 = arith.mulf %75, %32 : vector<1x128xf32>
    %77 = arith.addf %28, %76 : vector<1x128xf32>
    %cst_25 = arith.constant 5.000000e-01 : f32
    %78 = vector.broadcast %cst_25 : f32 to vector<1x128xf32>
    %79 = arith.mulf %78, %34 : vector<1x128xf32>
    %80 = arith.addf %30, %79 : vector<1x128xf32>
    %81 = arith.subf %65, %59 : vector<8x1xf32>
    %82 = arith.subf %68, %62 : vector<8x1xf32>
    %83 = arith.mulf %81, %82 : vector<8x1xf32>
    %84 = arith.subf %77, %71 : vector<1x128xf32>
    %85 = arith.subf %80, %74 : vector<1x128xf32>
    %86 = arith.mulf %84, %85 : vector<1x128xf32>
    %87 = vector.broadcast %65 : vector<8x1xf32> to vector<8x128xf32>
    %88 = vector.broadcast %77 : vector<1x128xf32> to vector<8x128xf32>
    %89 = arith.minimumf %87, %88 : vector<8x128xf32>
    %90 = vector.broadcast %59 : vector<8x1xf32> to vector<8x128xf32>
    %91 = vector.broadcast %71 : vector<1x128xf32> to vector<8x128xf32>
    %92 = arith.maximumf %90, %91 : vector<8x128xf32>
    %93 = arith.subf %89, %92 : vector<8x128xf32>
    %cst_26 = arith.constant 0.000000e+00 : f32
    %94 = vector.broadcast %cst_26 : f32 to vector<8x128xf32>
    %95 = arith.maximumf %93, %94 : vector<8x128xf32>
    %96 = vector.broadcast %68 : vector<8x1xf32> to vector<8x128xf32>
    %97 = vector.broadcast %80 : vector<1x128xf32> to vector<8x128xf32>
    %98 = arith.minimumf %96, %97 : vector<8x128xf32>
    %99 = vector.broadcast %62 : vector<8x1xf32> to vector<8x128xf32>
    %100 = vector.broadcast %74 : vector<1x128xf32> to vector<8x128xf32>
    %101 = arith.maximumf %99, %100 : vector<8x128xf32>
    %102 = arith.subf %98, %101 : vector<8x128xf32>
    %cst_27 = arith.constant 0.000000e+00 : f32
    %103 = vector.broadcast %cst_27 : f32 to vector<8x128xf32>
    %104 = arith.maximumf %102, %103 : vector<8x128xf32>
    %105 = arith.mulf %95, %104 : vector<8x128xf32>
    %106 = vector.broadcast %83 : vector<8x1xf32> to vector<8x128xf32>
    %107 = vector.broadcast %86 : vector<1x128xf32> to vector<8x128xf32>
    %108 = arith.addf %106, %107 : vector<8x128xf32>
    %109 = arith.subf %108, %105 : vector<8x128xf32>
    %110 = vector.broadcast %65 : vector<8x1xf32> to vector<8x128xf32>
    %111 = vector.broadcast %77 : vector<1x128xf32> to vector<8x128xf32>
    %112 = arith.maximumf %110, %111 : vector<8x128xf32>
    %113 = vector.broadcast %59 : vector<8x1xf32> to vector<8x128xf32>
    %114 = vector.broadcast %71 : vector<1x128xf32> to vector<8x128xf32>
    %115 = arith.minimumf %113, %114 : vector<8x128xf32>
    %116 = arith.subf %112, %115 : vector<8x128xf32>
    %117 = vector.broadcast %68 : vector<8x1xf32> to vector<8x128xf32>
    %118 = vector.broadcast %80 : vector<1x128xf32> to vector<8x128xf32>
    %119 = arith.maximumf %117, %118 : vector<8x128xf32>
    %120 = vector.broadcast %62 : vector<8x1xf32> to vector<8x128xf32>
    %121 = vector.broadcast %74 : vector<1x128xf32> to vector<8x128xf32>
    %122 = arith.minimumf %120, %121 : vector<8x128xf32>
    %123 = arith.subf %119, %122 : vector<8x128xf32>
    %124 = arith.mulf %116, %123 : vector<8x128xf32>
    %cst_28 = arith.constant 1.000000e-07 : f32
    %125 = vector.broadcast %cst_28 : f32 to vector<8x128xf32>
    %126 = arith.addf %109, %125 : vector<8x128xf32>
    %127 = tpu.reciprocal %126 {approx = true} : vector<8x128xf32> -> vector<8x128xf32>
    %128 = arith.mulf %105, %127 : vector<8x128xf32>
    %129 = arith.subf %124, %109 : vector<8x128xf32>
    %cst_29 = arith.constant 1.000000e-07 : f32
    %130 = vector.broadcast %cst_29 : f32 to vector<8x128xf32>
    %131 = arith.addf %124, %130 : vector<8x128xf32>
    %132 = tpu.reciprocal %131 {approx = true} : vector<8x128xf32> -> vector<8x128xf32>
    %133 = arith.mulf %129, %132 : vector<8x128xf32>
    %134 = arith.subf %128, %133 : vector<8x128xf32>
    %cst_30 = arith.constant 1.000000e+00 : f32
    %135 = vector.broadcast %cst_30 : f32 to vector<8x128xf32>
    %136 = arith.mulf %135, %134 : vector<8x128xf32>
    %137 = arith.subf %56, %136 : vector<8x128xf32>
    %c0_31 = arith.constant 0 : index
    %138 = arith.index_cast %1 : i32 to index
    %c0_32 = arith.constant 0 : index
    %139 = vector.load %arg4[%c0_31, %138, %c0_32] : memref<1x8x48xf32, #tpu.memory_space<vmem>>, vector<1x8x48xf32>
    %140 = vector.shape_cast %139 : vector<1x8x48xf32> to vector<8x48xf32>
    %cst_33 = arith.constant 0.000000e+00 : f32
    %141 = vector.broadcast %cst_33 : f32 to vector<8x128xf32>
    %cst_34 = arith.constant 0.000000e+00 : f32
    %142 = vector.broadcast %cst_34 : f32 to vector<8x128xf32>
    %143 = vector.extract_strided_slice %140 {offsets = [0, 0], sizes = [8, 1], strides = [1, 1]} : vector<8x48xf32> to vector<8x1xf32>
    %144 = vector.extract_strided_slice %140 {offsets = [0, 24], sizes = [8, 1], strides = [1, 1]} : vector<8x48xf32> to vector<8x1xf32>
    %c0_35 = arith.constant 0 : index
    %c0_36 = arith.constant 0 : index
    %c0_37 = arith.constant 0 : index
    %145 = vector.load %arg6[%c0_35, %c0_36, %c0_37] : memref<1x144x128xf32, #tpu.memory_space<vmem>>, vector<1x1x128xf32>
    %146 = vector.shape_cast %145 : vector<1x1x128xf32> to vector<1x128xf32>
    %c0_38 = arith.constant 0 : index
    %c24 = arith.constant 24 : index
    %c0_39 = arith.constant 0 : index
    %147 = vector.load %arg6[%c0_38, %c24, %c0_39] : memref<1x144x128xf32, #tpu.memory_space<vmem>>, vector<1x1x128xf32>
    %148 = vector.shape_cast %147 : vector<1x1x128xf32> to vector<1x128xf32>
    %c0_40 = arith.constant 0 : index
    %c48 = arith.constant 48 : index
    %c0_41 = arith.constant 0 : index
    %149 = vector.load %arg6[%c0_40, %c48, %c0_41] : memref<1x144x128xf32, #tpu.memory_space<vmem>>, vector<1x1x128xf32>
    %150 = vector.shape_cast %149 : vector<1x1x128xf32> to vector<1x128xf32>
    %c0_42 = arith.constant 0 : index
    %c72 = arith.constant 72 : index
    %c0_43 = arith.constant 0 : index
    %151 = vector.load %arg6[%c0_42, %c72, %c0_43] : memref<1x144x128xf32, #tpu.memory_space<vmem>>, vector<1x1x128xf32>
    %152 = vector.shape_cast %151 : vector<1x1x128xf32> to vector<1x128xf32>
    %c0_44 = arith.constant 0 : index
    %c96 = arith.constant 96 : index
    %c0_45 = arith.constant 0 : index
    %153 = vector.load %arg6[%c0_44, %c96, %c0_45] : memref<1x144x128xf32, #tpu.memory_space<vmem>>, vector<1x1x128xf32>
    %154 = vector.shape_cast %153 : vector<1x1x128xf32> to vector<1x128xf32>
    %c0_46 = arith.constant 0 : index
    %c120 = arith.constant 120 : index
    %c0_47 = arith.constant 0 : index
    %155 = vector.load %arg6[%c0_46, %c120, %c0_47] : memref<1x144x128xf32, #tpu.memory_space<vmem>>, vector<1x1x128xf32>
    %156 = vector.shape_cast %155 : vector<1x1x128xf32> to vector<1x128xf32>
    %157 = vector.broadcast %143 : vector<8x1xf32> to vector<8x128xf32>
    %158 = vector.broadcast %146 : vector<1x128xf32> to vector<8x128xf32>
    %159 = arith.subf %157, %158 : vector<8x128xf32>
    %160 = vector.broadcast %144 : vector<8x1xf32> to vector<8x128xf32>
    %161 = vector.broadcast %148 : vector<1x128xf32> to vector<8x128xf32>
    %162 = arith.subf %160, %161 : vector<8x128xf32>
    %163 = math.absf %159 : vector<8x128xf32>
    %164 = math.absf %162 : vector<8x128xf32>
    %165 = arith.addf %163, %164 : vector<8x128xf32>
    %166 = vector.broadcast %150 : vector<1x128xf32> to vector<8x128xf32>
    %167 = arith.mulf %166, %165 : vector<8x128xf32>
    %168 = arith.addf %141, %167 : vector<8x128xf32>
    %169 = arith.mulf %159, %159 : vector<8x128xf32>
    %170 = vector.broadcast %154 : vector<1x128xf32> to vector<8x128xf32>
    %171 = arith.mulf %169, %170 : vector<8x128xf32>
    %172 = arith.mulf %162, %162 : vector<8x128xf32>
    %173 = vector.broadcast %156 : vector<1x128xf32> to vector<8x128xf32>
    %174 = arith.mulf %172, %173 : vector<8x128xf32>
    %175 = arith.addf %171, %174 : vector<8x128xf32>
    %176 = math.exp %175 : vector<8x128xf32>
    %177 = vector.broadcast %152 : vector<1x128xf32> to vector<8x128xf32>
    %178 = arith.mulf %177, %176 : vector<8x128xf32>
    %179 = arith.addf %142, %178 : vector<8x128xf32>
    %180 = vector.extract_strided_slice %140 {offsets = [0, 1], sizes = [8, 1], strides = [1, 1]} : vector<8x48xf32> to vector<8x1xf32>
    %181 = vector.extract_strided_slice %140 {offsets = [0, 25], sizes = [8, 1], strides = [1, 1]} : vector<8x48xf32> to vector<8x1xf32>
    %c0_48 = arith.constant 0 : index
    %c1 = arith.constant 1 : index
    %c0_49 = arith.constant 0 : index
    %182 = vector.load %arg6[%c0_48, %c1, %c0_49] : memref<1x144x128xf32, #tpu.memory_space<vmem>>, vector<1x1x128xf32>
    %183 = vector.shape_cast %182 : vector<1x1x128xf32> to vector<1x128xf32>
    %c0_50 = arith.constant 0 : index
    %c25 = arith.constant 25 : index
    %c0_51 = arith.constant 0 : index
    %184 = vector.load %arg6[%c0_50, %c25, %c0_51] : memref<1x144x128xf32, #tpu.memory_space<vmem>>, vector<1x1x128xf32>
    %185 = vector.shape_cast %184 : vector<1x1x128xf32> to vector<1x128xf32>
    %c0_52 = arith.constant 0 : index
    %c49 = arith.constant 49 : index
    %c0_53 = arith.constant 0 : index
    %186 = vector.load %arg6[%c0_52, %c49, %c0_53] : memref<1x144x128xf32, #tpu.memory_space<vmem>>, vector<1x1x128xf32>
    %187 = vector.shape_cast %186 : vector<1x1x128xf32> to vector<1x128xf32>
    %c0_54 = arith.constant 0 : index
    %c73 = arith.constant 73 : index
    %c0_55 = arith.constant 0 : index
    %188 = vector.load %arg6[%c0_54, %c73, %c0_55] : memref<1x144x128xf32, #tpu.memory_space<vmem>>, vector<1x1x128xf32>
    %189 = vector.shape_cast %188 : vector<1x1x128xf32> to vector<1x128xf32>
    %c0_56 = arith.constant 0 : index
    %c97 = arith.constant 97 : index
    %c0_57 = arith.constant 0 : index
    %190 = vector.load %arg6[%c0_56, %c97, %c0_57] : memref<1x144x128xf32, #tpu.memory_space<vmem>>, vector<1x1x128xf32>
    %191 = vector.shape_cast %190 : vector<1x1x128xf32> to vector<1x128xf32>
    %c0_58 = arith.constant 0 : index
    %c121 = arith.constant 121 : index
    %c0_59 = arith.constant 0 : index
    %192 = vector.load %arg6[%c0_58, %c121, %c0_59] : memref<1x144x128xf32, #tpu.memory_space<vmem>>, vector<1x1x128xf32>
    %193 = vector.shape_cast %192 : vector<1x1x128xf32> to vector<1x128xf32>
    %194 = vector.broadcast %180 : vector<8x1xf32> to vector<8x128xf32>
    %195 = vector.broadcast %183 : vector<1x128xf32> to vector<8x128xf32>
    %196 = arith.subf %194, %195 : vector<8x128xf32>
    %197 = vector.broadcast %181 : vector<8x1xf32> to vector<8x128xf32>
    %198 = vector.broadcast %185 : vector<1x128xf32> to vector<8x128xf32>
    %199 = arith.subf %197, %198 : vector<8x128xf32>
    %200 = math.absf %196 : vector<8x128xf32>
    %201 = math.absf %199 : vector<8x128xf32>
    %202 = arith.addf %200, %201 : vector<8x128xf32>
    %203 = vector.broadcast %187 : vector<1x128xf32> to vector<8x128xf32>
    %204 = arith.mulf %203, %202 : vector<8x128xf32>
    %205 = arith.addf %168, %204 : vector<8x128xf32>
    %206 = arith.mulf %196, %196 : vector<8x128xf32>
    %207 = vector.broadcast %191 : vector<1x128xf32> to vector<8x128xf32>
    %208 = arith.mulf %206, %207 : vector<8x128xf32>
    %209 = arith.mulf %199, %199 : vector<8x128xf32>
    %210 = vector.broadcast %193 : vector<1x128xf32> to vector<8x128xf32>
    %211 = arith.mulf %209, %210 : vector<8x128xf32>
    %212 = arith.addf %208, %211 : vector<8x128xf32>
    %213 = math.exp %212 : vector<8x128xf32>
    %214 = vector.broadcast %189 : vector<1x128xf32> to vector<8x128xf32>
    %215 = arith.mulf %214, %213 : vector<8x128xf32>
    %216 = arith.addf %179, %215 : vector<8x128xf32>
    %217 = vector.extract_strided_slice %140 {offsets = [0, 2], sizes = [8, 1], strides = [1, 1]} : vector<8x48xf32> to vector<8x1xf32>
    %218 = vector.extract_strided_slice %140 {offsets = [0, 26], sizes = [8, 1], strides = [1, 1]} : vector<8x48xf32> to vector<8x1xf32>
    %c0_60 = arith.constant 0 : index
    %c2 = arith.constant 2 : index
    %c0_61 = arith.constant 0 : index
    %219 = vector.load %arg6[%c0_60, %c2, %c0_61] : memref<1x144x128xf32, #tpu.memory_space<vmem>>, vector<1x1x128xf32>
    %220 = vector.shape_cast %219 : vector<1x1x128xf32> to vector<1x128xf32>
    %c0_62 = arith.constant 0 : index
    %c26 = arith.constant 26 : index
    %c0_63 = arith.constant 0 : index
    %221 = vector.load %arg6[%c0_62, %c26, %c0_63] : memref<1x144x128xf32, #tpu.memory_space<vmem>>, vector<1x1x128xf32>
    %222 = vector.shape_cast %221 : vector<1x1x128xf32> to vector<1x128xf32>
    %c0_64 = arith.constant 0 : index
    %c50 = arith.constant 50 : index
    %c0_65 = arith.constant 0 : index
    %223 = vector.load %arg6[%c0_64, %c50, %c0_65] : memref<1x144x128xf32, #tpu.memory_space<vmem>>, vector<1x1x128xf32>
    %224 = vector.shape_cast %223 : vector<1x1x128xf32> to vector<1x128xf32>
    %c0_66 = arith.constant 0 : index
    %c74 = arith.constant 74 : index
    %c0_67 = arith.constant 0 : index
    %225 = vector.load %arg6[%c0_66, %c74, %c0_67] : memref<1x144x128xf32, #tpu.memory_space<vmem>>, vector<1x1x128xf32>
    %226 = vector.shape_cast %225 : vector<1x1x128xf32> to vector<1x128xf32>
    %c0_68 = arith.constant 0 : index
    %c98 = arith.constant 98 : index
    %c0_69 = arith.constant 0 : index
    %227 = vector.load %arg6[%c0_68, %c98, %c0_69] : memref<1x144x128xf32, #tpu.memory_space<vmem>>, vector<1x1x128xf32>
    %228 = vector.shape_cast %227 : vector<1x1x128xf32> to vector<1x128xf32>
    %c0_70 = arith.constant 0 : index
    %c122 = arith.constant 122 : index
    %c0_71 = arith.constant 0 : index
    %229 = vector.load %arg6[%c0_70, %c122, %c0_71] : memref<1x144x128xf32, #tpu.memory_space<vmem>>, vector<1x1x128xf32>
    %230 = vector.shape_cast %229 : vector<1x1x128xf32> to vector<1x128xf32>
    %231 = vector.broadcast %217 : vector<8x1xf32> to vector<8x128xf32>
    %232 = vector.broadcast %220 : vector<1x128xf32> to vector<8x128xf32>
    %233 = arith.subf %231, %232 : vector<8x128xf32>
    %234 = vector.broadcast %218 : vector<8x1xf32> to vector<8x128xf32>
    %235 = vector.broadcast %222 : vector<1x128xf32> to vector<8x128xf32>
    %236 = arith.subf %234, %235 : vector<8x128xf32>
    %237 = math.absf %233 : vector<8x128xf32>
    %238 = math.absf %236 : vector<8x128xf32>
    %239 = arith.addf %237, %238 : vector<8x128xf32>
    %240 = vector.broadcast %224 : vector<1x128xf32> to vector<8x128xf32>
    %241 = arith.mulf %240, %239 : vector<8x128xf32>
    %242 = arith.addf %205, %241 : vector<8x128xf32>
    %243 = arith.mulf %233, %233 : vector<8x128xf32>
    %244 = vector.broadcast %228 : vector<1x128xf32> to vector<8x128xf32>
    %245 = arith.mulf %243, %244 : vector<8x128xf32>
    %246 = arith.mulf %236, %236 : vector<8x128xf32>
    %247 = vector.broadcast %230 : vector<1x128xf32> to vector<8x128xf32>
    %248 = arith.mulf %246, %247 : vector<8x128xf32>
    %249 = arith.addf %245, %248 : vector<8x128xf32>
    %250 = math.exp %249 : vector<8x128xf32>
    %251 = vector.broadcast %226 : vector<1x128xf32> to vector<8x128xf32>
    %252 = arith.mulf %251, %250 : vector<8x128xf32>
    %253 = arith.addf %216, %252 : vector<8x128xf32>
    %254 = vector.extract_strided_slice %140 {offsets = [0, 3], sizes = [8, 1], strides = [1, 1]} : vector<8x48xf32> to vector<8x1xf32>
    %255 = vector.extract_strided_slice %140 {offsets = [0, 27], sizes = [8, 1], strides = [1, 1]} : vector<8x48xf32> to vector<8x1xf32>
    %c0_72 = arith.constant 0 : index
    %c3 = arith.constant 3 : index
    %c0_73 = arith.constant 0 : index
    %256 = vector.load %arg6[%c0_72, %c3, %c0_73] : memref<1x144x128xf32, #tpu.memory_space<vmem>>, vector<1x1x128xf32>
    %257 = vector.shape_cast %256 : vector<1x1x128xf32> to vector<1x128xf32>
    %c0_74 = arith.constant 0 : index
    %c27 = arith.constant 27 : index
    %c0_75 = arith.constant 0 : index
    %258 = vector.load %arg6[%c0_74, %c27, %c0_75] : memref<1x144x128xf32, #tpu.memory_space<vmem>>, vector<1x1x128xf32>
    %259 = vector.shape_cast %258 : vector<1x1x128xf32> to vector<1x128xf32>
    %c0_76 = arith.constant 0 : index
    %c51 = arith.constant 51 : index
    %c0_77 = arith.constant 0 : index
    %260 = vector.load %arg6[%c0_76, %c51, %c0_77] : memref<1x144x128xf32, #tpu.memory_space<vmem>>, vector<1x1x128xf32>
    %261 = vector.shape_cast %260 : vector<1x1x128xf32> to vector<1x128xf32>
    %c0_78 = arith.constant 0 : index
    %c75 = arith.constant 75 : index
    %c0_79 = arith.constant 0 : index
    %262 = vector.load %arg6[%c0_78, %c75, %c0_79] : memref<1x144x128xf32, #tpu.memory_space<vmem>>, vector<1x1x128xf32>
    %263 = vector.shape_cast %262 : vector<1x1x128xf32> to vector<1x128xf32>
    %c0_80 = arith.constant 0 : index
    %c99 = arith.constant 99 : index
    %c0_81 = arith.constant 0 : index
    %264 = vector.load %arg6[%c0_80, %c99, %c0_81] : memref<1x144x128xf32, #tpu.memory_space<vmem>>, vector<1x1x128xf32>
    %265 = vector.shape_cast %264 : vector<1x1x128xf32> to vector<1x128xf32>
    %c0_82 = arith.constant 0 : index
    %c123 = arith.constant 123 : index
    %c0_83 = arith.constant 0 : index
    %266 = vector.load %arg6[%c0_82, %c123, %c0_83] : memref<1x144x128xf32, #tpu.memory_space<vmem>>, vector<1x1x128xf32>
    %267 = vector.shape_cast %266 : vector<1x1x128xf32> to vector<1x128xf32>
    %268 = vector.broadcast %254 : vector<8x1xf32> to vector<8x128xf32>
    %269 = vector.broadcast %257 : vector<1x128xf32> to vector<8x128xf32>
    %270 = arith.subf %268, %269 : vector<8x128xf32>
    %271 = vector.broadcast %255 : vector<8x1xf32> to vector<8x128xf32>
    %272 = vector.broadcast %259 : vector<1x128xf32> to vector<8x128xf32>
    %273 = arith.subf %271, %272 : vector<8x128xf32>
    %274 = math.absf %270 : vector<8x128xf32>
    %275 = math.absf %273 : vector<8x128xf32>
    %276 = arith.addf %274, %275 : vector<8x128xf32>
    %277 = vector.broadcast %261 : vector<1x128xf32> to vector<8x128xf32>
    %278 = arith.mulf %277, %276 : vector<8x128xf32>
    %279 = arith.addf %242, %278 : vector<8x128xf32>
    %280 = arith.mulf %270, %270 : vector<8x128xf32>
    %281 = vector.broadcast %265 : vector<1x128xf32> to vector<8x128xf32>
    %282 = arith.mulf %280, %281 : vector<8x128xf32>
    %283 = arith.mulf %273, %273 : vector<8x128xf32>
    %284 = vector.broadcast %267 : vector<1x128xf32> to vector<8x128xf32>
    %285 = arith.mulf %283, %284 : vector<8x128xf32>
    %286 = arith.addf %282, %285 : vector<8x128xf32>
    %287 = math.exp %286 : vector<8x128xf32>
    %288 = vector.broadcast %263 : vector<1x128xf32> to vector<8x128xf32>
    %289 = arith.mulf %288, %287 : vector<8x128xf32>
    %290 = arith.addf %253, %289 : vector<8x128xf32>
    %291 = vector.extract_strided_slice %140 {offsets = [0, 4], sizes = [8, 1], strides = [1, 1]} : vector<8x48xf32> to vector<8x1xf32>
    %292 = vector.extract_strided_slice %140 {offsets = [0, 28], sizes = [8, 1], strides = [1, 1]} : vector<8x48xf32> to vector<8x1xf32>
    %c0_84 = arith.constant 0 : index
    %c4 = arith.constant 4 : index
    %c0_85 = arith.constant 0 : index
    %293 = vector.load %arg6[%c0_84, %c4, %c0_85] : memref<1x144x128xf32, #tpu.memory_space<vmem>>, vector<1x1x128xf32>
    %294 = vector.shape_cast %293 : vector<1x1x128xf32> to vector<1x128xf32>
    %c0_86 = arith.constant 0 : index
    %c28 = arith.constant 28 : index
    %c0_87 = arith.constant 0 : index
    %295 = vector.load %arg6[%c0_86, %c28, %c0_87] : memref<1x144x128xf32, #tpu.memory_space<vmem>>, vector<1x1x128xf32>
    %296 = vector.shape_cast %295 : vector<1x1x128xf32> to vector<1x128xf32>
    %c0_88 = arith.constant 0 : index
    %c52 = arith.constant 52 : index
    %c0_89 = arith.constant 0 : index
    %297 = vector.load %arg6[%c0_88, %c52, %c0_89] : memref<1x144x128xf32, #tpu.memory_space<vmem>>, vector<1x1x128xf32>
    %298 = vector.shape_cast %297 : vector<1x1x128xf32> to vector<1x128xf32>
    %c0_90 = arith.constant 0 : index
    %c76 = arith.constant 76 : index
    %c0_91 = arith.constant 0 : index
    %299 = vector.load %arg6[%c0_90, %c76, %c0_91] : memref<1x144x128xf32, #tpu.memory_space<vmem>>, vector<1x1x128xf32>
    %300 = vector.shape_cast %299 : vector<1x1x128xf32> to vector<1x128xf32>
    %c0_92 = arith.constant 0 : index
    %c100 = arith.constant 100 : index
    %c0_93 = arith.constant 0 : index
    %301 = vector.load %arg6[%c0_92, %c100, %c0_93] : memref<1x144x128xf32, #tpu.memory_space<vmem>>, vector<1x1x128xf32>
    %302 = vector.shape_cast %301 : vector<1x1x128xf32> to vector<1x128xf32>
    %c0_94 = arith.constant 0 : index
    %c124 = arith.constant 124 : index
    %c0_95 = arith.constant 0 : index
    %303 = vector.load %arg6[%c0_94, %c124, %c0_95] : memref<1x144x128xf32, #tpu.memory_space<vmem>>, vector<1x1x128xf32>
    %304 = vector.shape_cast %303 : vector<1x1x128xf32> to vector<1x128xf32>
    %305 = vector.broadcast %291 : vector<8x1xf32> to vector<8x128xf32>
    %306 = vector.broadcast %294 : vector<1x128xf32> to vector<8x128xf32>
    %307 = arith.subf %305, %306 : vector<8x128xf32>
    %308 = vector.broadcast %292 : vector<8x1xf32> to vector<8x128xf32>
    %309 = vector.broadcast %296 : vector<1x128xf32> to vector<8x128xf32>
    %310 = arith.subf %308, %309 : vector<8x128xf32>
    %311 = math.absf %307 : vector<8x128xf32>
    %312 = math.absf %310 : vector<8x128xf32>
    %313 = arith.addf %311, %312 : vector<8x128xf32>
    %314 = vector.broadcast %298 : vector<1x128xf32> to vector<8x128xf32>
    %315 = arith.mulf %314, %313 : vector<8x128xf32>
    %316 = arith.addf %279, %315 : vector<8x128xf32>
    %317 = arith.mulf %307, %307 : vector<8x128xf32>
    %318 = vector.broadcast %302 : vector<1x128xf32> to vector<8x128xf32>
    %319 = arith.mulf %317, %318 : vector<8x128xf32>
    %320 = arith.mulf %310, %310 : vector<8x128xf32>
    %321 = vector.broadcast %304 : vector<1x128xf32> to vector<8x128xf32>
    %322 = arith.mulf %320, %321 : vector<8x128xf32>
    %323 = arith.addf %319, %322 : vector<8x128xf32>
    %324 = math.exp %323 : vector<8x128xf32>
    %325 = vector.broadcast %300 : vector<1x128xf32> to vector<8x128xf32>
    %326 = arith.mulf %325, %324 : vector<8x128xf32>
    %327 = arith.addf %290, %326 : vector<8x128xf32>
    %328 = vector.extract_strided_slice %140 {offsets = [0, 5], sizes = [8, 1], strides = [1, 1]} : vector<8x48xf32> to vector<8x1xf32>
    %329 = vector.extract_strided_slice %140 {offsets = [0, 29], sizes = [8, 1], strides = [1, 1]} : vector<8x48xf32> to vector<8x1xf32>
    %c0_96 = arith.constant 0 : index
    %c5 = arith.constant 5 : index
    %c0_97 = arith.constant 0 : index
    %330 = vector.load %arg6[%c0_96, %c5, %c0_97] : memref<1x144x128xf32, #tpu.memory_space<vmem>>, vector<1x1x128xf32>
    %331 = vector.shape_cast %330 : vector<1x1x128xf32> to vector<1x128xf32>
    %c0_98 = arith.constant 0 : index
    %c29 = arith.constant 29 : index
    %c0_99 = arith.constant 0 : index
    %332 = vector.load %arg6[%c0_98, %c29, %c0_99] : memref<1x144x128xf32, #tpu.memory_space<vmem>>, vector<1x1x128xf32>
    %333 = vector.shape_cast %332 : vector<1x1x128xf32> to vector<1x128xf32>
    %c0_100 = arith.constant 0 : index
    %c53 = arith.constant 53 : index
    %c0_101 = arith.constant 0 : index
    %334 = vector.load %arg6[%c0_100, %c53, %c0_101] : memref<1x144x128xf32, #tpu.memory_space<vmem>>, vector<1x1x128xf32>
    %335 = vector.shape_cast %334 : vector<1x1x128xf32> to vector<1x128xf32>
    %c0_102 = arith.constant 0 : index
    %c77 = arith.constant 77 : index
    %c0_103 = arith.constant 0 : index
    %336 = vector.load %arg6[%c0_102, %c77, %c0_103] : memref<1x144x128xf32, #tpu.memory_space<vmem>>, vector<1x1x128xf32>
    %337 = vector.shape_cast %336 : vector<1x1x128xf32> to vector<1x128xf32>
    %c0_104 = arith.constant 0 : index
    %c101 = arith.constant 101 : index
    %c0_105 = arith.constant 0 : index
    %338 = vector.load %arg6[%c0_104, %c101, %c0_105] : memref<1x144x128xf32, #tpu.memory_space<vmem>>, vector<1x1x128xf32>
    %339 = vector.shape_cast %338 : vector<1x1x128xf32> to vector<1x128xf32>
    %c0_106 = arith.constant 0 : index
    %c125 = arith.constant 125 : index
    %c0_107 = arith.constant 0 : index
    %340 = vector.load %arg6[%c0_106, %c125, %c0_107] : memref<1x144x128xf32, #tpu.memory_space<vmem>>, vector<1x1x128xf32>
    %341 = vector.shape_cast %340 : vector<1x1x128xf32> to vector<1x128xf32>
    %342 = vector.broadcast %328 : vector<8x1xf32> to vector<8x128xf32>
    %343 = vector.broadcast %331 : vector<1x128xf32> to vector<8x128xf32>
    %344 = arith.subf %342, %343 : vector<8x128xf32>
    %345 = vector.broadcast %329 : vector<8x1xf32> to vector<8x128xf32>
    %346 = vector.broadcast %333 : vector<1x128xf32> to vector<8x128xf32>
    %347 = arith.subf %345, %346 : vector<8x128xf32>
    %348 = math.absf %344 : vector<8x128xf32>
    %349 = math.absf %347 : vector<8x128xf32>
    %350 = arith.addf %348, %349 : vector<8x128xf32>
    %351 = vector.broadcast %335 : vector<1x128xf32> to vector<8x128xf32>
    %352 = arith.mulf %351, %350 : vector<8x128xf32>
    %353 = arith.addf %316, %352 : vector<8x128xf32>
    %354 = arith.mulf %344, %344 : vector<8x128xf32>
    %355 = vector.broadcast %339 : vector<1x128xf32> to vector<8x128xf32>
    %356 = arith.mulf %354, %355 : vector<8x128xf32>
    %357 = arith.mulf %347, %347 : vector<8x128xf32>
    %358 = vector.broadcast %341 : vector<1x128xf32> to vector<8x128xf32>
    %359 = arith.mulf %357, %358 : vector<8x128xf32>
    %360 = arith.addf %356, %359 : vector<8x128xf32>
    %361 = math.exp %360 : vector<8x128xf32>
    %362 = vector.broadcast %337 : vector<1x128xf32> to vector<8x128xf32>
    %363 = arith.mulf %362, %361 : vector<8x128xf32>
    %364 = arith.addf %327, %363 : vector<8x128xf32>
    %365 = vector.extract_strided_slice %140 {offsets = [0, 6], sizes = [8, 1], strides = [1, 1]} : vector<8x48xf32> to vector<8x1xf32>
    %366 = vector.extract_strided_slice %140 {offsets = [0, 30], sizes = [8, 1], strides = [1, 1]} : vector<8x48xf32> to vector<8x1xf32>
    %c0_108 = arith.constant 0 : index
    %c6 = arith.constant 6 : index
    %c0_109 = arith.constant 0 : index
    %367 = vector.load %arg6[%c0_108, %c6, %c0_109] : memref<1x144x128xf32, #tpu.memory_space<vmem>>, vector<1x1x128xf32>
    %368 = vector.shape_cast %367 : vector<1x1x128xf32> to vector<1x128xf32>
    %c0_110 = arith.constant 0 : index
    %c30 = arith.constant 30 : index
    %c0_111 = arith.constant 0 : index
    %369 = vector.load %arg6[%c0_110, %c30, %c0_111] : memref<1x144x128xf32, #tpu.memory_space<vmem>>, vector<1x1x128xf32>
    %370 = vector.shape_cast %369 : vector<1x1x128xf32> to vector<1x128xf32>
    %c0_112 = arith.constant 0 : index
    %c54 = arith.constant 54 : index
    %c0_113 = arith.constant 0 : index
    %371 = vector.load %arg6[%c0_112, %c54, %c0_113] : memref<1x144x128xf32, #tpu.memory_space<vmem>>, vector<1x1x128xf32>
    %372 = vector.shape_cast %371 : vector<1x1x128xf32> to vector<1x128xf32>
    %c0_114 = arith.constant 0 : index
    %c78 = arith.constant 78 : index
    %c0_115 = arith.constant 0 : index
    %373 = vector.load %arg6[%c0_114, %c78, %c0_115] : memref<1x144x128xf32, #tpu.memory_space<vmem>>, vector<1x1x128xf32>
    %374 = vector.shape_cast %373 : vector<1x1x128xf32> to vector<1x128xf32>
    %c0_116 = arith.constant 0 : index
    %c102 = arith.constant 102 : index
    %c0_117 = arith.constant 0 : index
    %375 = vector.load %arg6[%c0_116, %c102, %c0_117] : memref<1x144x128xf32, #tpu.memory_space<vmem>>, vector<1x1x128xf32>
    %376 = vector.shape_cast %375 : vector<1x1x128xf32> to vector<1x128xf32>
    %c0_118 = arith.constant 0 : index
    %c126 = arith.constant 126 : index
    %c0_119 = arith.constant 0 : index
    %377 = vector.load %arg6[%c0_118, %c126, %c0_119] : memref<1x144x128xf32, #tpu.memory_space<vmem>>, vector<1x1x128xf32>
    %378 = vector.shape_cast %377 : vector<1x1x128xf32> to vector<1x128xf32>
    %379 = vector.broadcast %365 : vector<8x1xf32> to vector<8x128xf32>
    %380 = vector.broadcast %368 : vector<1x128xf32> to vector<8x128xf32>
    %381 = arith.subf %379, %380 : vector<8x128xf32>
    %382 = vector.broadcast %366 : vector<8x1xf32> to vector<8x128xf32>
    %383 = vector.broadcast %370 : vector<1x128xf32> to vector<8x128xf32>
    %384 = arith.subf %382, %383 : vector<8x128xf32>
    %385 = math.absf %381 : vector<8x128xf32>
    %386 = math.absf %384 : vector<8x128xf32>
    %387 = arith.addf %385, %386 : vector<8x128xf32>
    %388 = vector.broadcast %372 : vector<1x128xf32> to vector<8x128xf32>
    %389 = arith.mulf %388, %387 : vector<8x128xf32>
    %390 = arith.addf %353, %389 : vector<8x128xf32>
    %391 = arith.mulf %381, %381 : vector<8x128xf32>
    %392 = vector.broadcast %376 : vector<1x128xf32> to vector<8x128xf32>
    %393 = arith.mulf %391, %392 : vector<8x128xf32>
    %394 = arith.mulf %384, %384 : vector<8x128xf32>
    %395 = vector.broadcast %378 : vector<1x128xf32> to vector<8x128xf32>
    %396 = arith.mulf %394, %395 : vector<8x128xf32>
    %397 = arith.addf %393, %396 : vector<8x128xf32>
    %398 = math.exp %397 : vector<8x128xf32>
    %399 = vector.broadcast %374 : vector<1x128xf32> to vector<8x128xf32>
    %400 = arith.mulf %399, %398 : vector<8x128xf32>
    %401 = arith.addf %364, %400 : vector<8x128xf32>
    %402 = vector.extract_strided_slice %140 {offsets = [0, 7], sizes = [8, 1], strides = [1, 1]} : vector<8x48xf32> to vector<8x1xf32>
    %403 = vector.extract_strided_slice %140 {offsets = [0, 31], sizes = [8, 1], strides = [1, 1]} : vector<8x48xf32> to vector<8x1xf32>
    %c0_120 = arith.constant 0 : index
    %c7 = arith.constant 7 : index
    %c0_121 = arith.constant 0 : index
    %404 = vector.load %arg6[%c0_120, %c7, %c0_121] : memref<1x144x128xf32, #tpu.memory_space<vmem>>, vector<1x1x128xf32>
    %405 = vector.shape_cast %404 : vector<1x1x128xf32> to vector<1x128xf32>
    %c0_122 = arith.constant 0 : index
    %c31 = arith.constant 31 : index
    %c0_123 = arith.constant 0 : index
    %406 = vector.load %arg6[%c0_122, %c31, %c0_123] : memref<1x144x128xf32, #tpu.memory_space<vmem>>, vector<1x1x128xf32>
    %407 = vector.shape_cast %406 : vector<1x1x128xf32> to vector<1x128xf32>
    %c0_124 = arith.constant 0 : index
    %c55 = arith.constant 55 : index
    %c0_125 = arith.constant 0 : index
    %408 = vector.load %arg6[%c0_124, %c55, %c0_125] : memref<1x144x128xf32, #tpu.memory_space<vmem>>, vector<1x1x128xf32>
    %409 = vector.shape_cast %408 : vector<1x1x128xf32> to vector<1x128xf32>
    %c0_126 = arith.constant 0 : index
    %c79 = arith.constant 79 : index
    %c0_127 = arith.constant 0 : index
    %410 = vector.load %arg6[%c0_126, %c79, %c0_127] : memref<1x144x128xf32, #tpu.memory_space<vmem>>, vector<1x1x128xf32>
    %411 = vector.shape_cast %410 : vector<1x1x128xf32> to vector<1x128xf32>
    %c0_128 = arith.constant 0 : index
    %c103 = arith.constant 103 : index
    %c0_129 = arith.constant 0 : index
    %412 = vector.load %arg6[%c0_128, %c103, %c0_129] : memref<1x144x128xf32, #tpu.memory_space<vmem>>, vector<1x1x128xf32>
    %413 = vector.shape_cast %412 : vector<1x1x128xf32> to vector<1x128xf32>
    %c0_130 = arith.constant 0 : index
    %c127 = arith.constant 127 : index
    %c0_131 = arith.constant 0 : index
    %414 = vector.load %arg6[%c0_130, %c127, %c0_131] : memref<1x144x128xf32, #tpu.memory_space<vmem>>, vector<1x1x128xf32>
    %415 = vector.shape_cast %414 : vector<1x1x128xf32> to vector<1x128xf32>
    %416 = vector.broadcast %402 : vector<8x1xf32> to vector<8x128xf32>
    %417 = vector.broadcast %405 : vector<1x128xf32> to vector<8x128xf32>
    %418 = arith.subf %416, %417 : vector<8x128xf32>
    %419 = vector.broadcast %403 : vector<8x1xf32> to vector<8x128xf32>
    %420 = vector.broadcast %407 : vector<1x128xf32> to vector<8x128xf32>
    %421 = arith.subf %419, %420 : vector<8x128xf32>
    %422 = math.absf %418 : vector<8x128xf32>
    %423 = math.absf %421 : vector<8x128xf32>
    %424 = arith.addf %422, %423 : vector<8x128xf32>
    %425 = vector.broadcast %409 : vector<1x128xf32> to vector<8x128xf32>
    %426 = arith.mulf %425, %424 : vector<8x128xf32>
    %427 = arith.addf %390, %426 : vector<8x128xf32>
    %428 = arith.mulf %418, %418 : vector<8x128xf32>
    %429 = vector.broadcast %413 : vector<1x128xf32> to vector<8x128xf32>
    %430 = arith.mulf %428, %429 : vector<8x128xf32>
    %431 = arith.mulf %421, %421 : vector<8x128xf32>
    %432 = vector.broadcast %415 : vector<1x128xf32> to vector<8x128xf32>
    %433 = arith.mulf %431, %432 : vector<8x128xf32>
    %434 = arith.addf %430, %433 : vector<8x128xf32>
    %435 = math.exp %434 : vector<8x128xf32>
    %436 = vector.broadcast %411 : vector<1x128xf32> to vector<8x128xf32>
    %437 = arith.mulf %436, %435 : vector<8x128xf32>
    %438 = arith.addf %401, %437 : vector<8x128xf32>
    %439 = vector.extract_strided_slice %140 {offsets = [0, 8], sizes = [8, 1], strides = [1, 1]} : vector<8x48xf32> to vector<8x1xf32>
    %440 = vector.extract_strided_slice %140 {offsets = [0, 32], sizes = [8, 1], strides = [1, 1]} : vector<8x48xf32> to vector<8x1xf32>
    %c0_132 = arith.constant 0 : index
    %c8_133 = arith.constant 8 : index
    %c0_134 = arith.constant 0 : index
    %441 = vector.load %arg6[%c0_132, %c8_133, %c0_134] : memref<1x144x128xf32, #tpu.memory_space<vmem>>, vector<1x1x128xf32>
    %442 = vector.shape_cast %441 : vector<1x1x128xf32> to vector<1x128xf32>
    %c0_135 = arith.constant 0 : index
    %c32 = arith.constant 32 : index
    %c0_136 = arith.constant 0 : index
    %443 = vector.load %arg6[%c0_135, %c32, %c0_136] : memref<1x144x128xf32, #tpu.memory_space<vmem>>, vector<1x1x128xf32>
    %444 = vector.shape_cast %443 : vector<1x1x128xf32> to vector<1x128xf32>
    %c0_137 = arith.constant 0 : index
    %c56 = arith.constant 56 : index
    %c0_138 = arith.constant 0 : index
    %445 = vector.load %arg6[%c0_137, %c56, %c0_138] : memref<1x144x128xf32, #tpu.memory_space<vmem>>, vector<1x1x128xf32>
    %446 = vector.shape_cast %445 : vector<1x1x128xf32> to vector<1x128xf32>
    %c0_139 = arith.constant 0 : index
    %c80 = arith.constant 80 : index
    %c0_140 = arith.constant 0 : index
    %447 = vector.load %arg6[%c0_139, %c80, %c0_140] : memref<1x144x128xf32, #tpu.memory_space<vmem>>, vector<1x1x128xf32>
    %448 = vector.shape_cast %447 : vector<1x1x128xf32> to vector<1x128xf32>
    %c0_141 = arith.constant 0 : index
    %c104 = arith.constant 104 : index
    %c0_142 = arith.constant 0 : index
    %449 = vector.load %arg6[%c0_141, %c104, %c0_142] : memref<1x144x128xf32, #tpu.memory_space<vmem>>, vector<1x1x128xf32>
    %450 = vector.shape_cast %449 : vector<1x1x128xf32> to vector<1x128xf32>
    %c0_143 = arith.constant 0 : index
    %c128 = arith.constant 128 : index
    %c0_144 = arith.constant 0 : index
    %451 = vector.load %arg6[%c0_143, %c128, %c0_144] : memref<1x144x128xf32, #tpu.memory_space<vmem>>, vector<1x1x128xf32>
    %452 = vector.shape_cast %451 : vector<1x1x128xf32> to vector<1x128xf32>
    %453 = vector.broadcast %439 : vector<8x1xf32> to vector<8x128xf32>
    %454 = vector.broadcast %442 : vector<1x128xf32> to vector<8x128xf32>
    %455 = arith.subf %453, %454 : vector<8x128xf32>
    %456 = vector.broadcast %440 : vector<8x1xf32> to vector<8x128xf32>
    %457 = vector.broadcast %444 : vector<1x128xf32> to vector<8x128xf32>
    %458 = arith.subf %456, %457 : vector<8x128xf32>
    %459 = math.absf %455 : vector<8x128xf32>
    %460 = math.absf %458 : vector<8x128xf32>
    %461 = arith.addf %459, %460 : vector<8x128xf32>
    %462 = vector.broadcast %446 : vector<1x128xf32> to vector<8x128xf32>
    %463 = arith.mulf %462, %461 : vector<8x128xf32>
    %464 = arith.addf %427, %463 : vector<8x128xf32>
    %465 = arith.mulf %455, %455 : vector<8x128xf32>
    %466 = vector.broadcast %450 : vector<1x128xf32> to vector<8x128xf32>
    %467 = arith.mulf %465, %466 : vector<8x128xf32>
    %468 = arith.mulf %458, %458 : vector<8x128xf32>
    %469 = vector.broadcast %452 : vector<1x128xf32> to vector<8x128xf32>
    %470 = arith.mulf %468, %469 : vector<8x128xf32>
    %471 = arith.addf %467, %470 : vector<8x128xf32>
    %472 = math.exp %471 : vector<8x128xf32>
    %473 = vector.broadcast %448 : vector<1x128xf32> to vector<8x128xf32>
    %474 = arith.mulf %473, %472 : vector<8x128xf32>
    %475 = arith.addf %438, %474 : vector<8x128xf32>
    %476 = vector.extract_strided_slice %140 {offsets = [0, 9], sizes = [8, 1], strides = [1, 1]} : vector<8x48xf32> to vector<8x1xf32>
    %477 = vector.extract_strided_slice %140 {offsets = [0, 33], sizes = [8, 1], strides = [1, 1]} : vector<8x48xf32> to vector<8x1xf32>
    %c0_145 = arith.constant 0 : index
    %c9_146 = arith.constant 9 : index
    %c0_147 = arith.constant 0 : index
    %478 = vector.load %arg6[%c0_145, %c9_146, %c0_147] : memref<1x144x128xf32, #tpu.memory_space<vmem>>, vector<1x1x128xf32>
    %479 = vector.shape_cast %478 : vector<1x1x128xf32> to vector<1x128xf32>
    %c0_148 = arith.constant 0 : index
    %c33 = arith.constant 33 : index
    %c0_149 = arith.constant 0 : index
    %480 = vector.load %arg6[%c0_148, %c33, %c0_149] : memref<1x144x128xf32, #tpu.memory_space<vmem>>, vector<1x1x128xf32>
    %481 = vector.shape_cast %480 : vector<1x1x128xf32> to vector<1x128xf32>
    %c0_150 = arith.constant 0 : index
    %c57 = arith.constant 57 : index
    %c0_151 = arith.constant 0 : index
    %482 = vector.load %arg6[%c0_150, %c57, %c0_151] : memref<1x144x128xf32, #tpu.memory_space<vmem>>, vector<1x1x128xf32>
    %483 = vector.shape_cast %482 : vector<1x1x128xf32> to vector<1x128xf32>
    %c0_152 = arith.constant 0 : index
    %c81 = arith.constant 81 : index
    %c0_153 = arith.constant 0 : index
    %484 = vector.load %arg6[%c0_152, %c81, %c0_153] : memref<1x144x128xf32, #tpu.memory_space<vmem>>, vector<1x1x128xf32>
    %485 = vector.shape_cast %484 : vector<1x1x128xf32> to vector<1x128xf32>
    %c0_154 = arith.constant 0 : index
    %c105 = arith.constant 105 : index
    %c0_155 = arith.constant 0 : index
    %486 = vector.load %arg6[%c0_154, %c105, %c0_155] : memref<1x144x128xf32, #tpu.memory_space<vmem>>, vector<1x1x128xf32>
    %487 = vector.shape_cast %486 : vector<1x1x128xf32> to vector<1x128xf32>
    %c0_156 = arith.constant 0 : index
    %c129 = arith.constant 129 : index
    %c0_157 = arith.constant 0 : index
    %488 = vector.load %arg6[%c0_156, %c129, %c0_157] : memref<1x144x128xf32, #tpu.memory_space<vmem>>, vector<1x1x128xf32>
    %489 = vector.shape_cast %488 : vector<1x1x128xf32> to vector<1x128xf32>
    %490 = vector.broadcast %476 : vector<8x1xf32> to vector<8x128xf32>
    %491 = vector.broadcast %479 : vector<1x128xf32> to vector<8x128xf32>
    %492 = arith.subf %490, %491 : vector<8x128xf32>
    %493 = vector.broadcast %477 : vector<8x1xf32> to vector<8x128xf32>
    %494 = vector.broadcast %481 : vector<1x128xf32> to vector<8x128xf32>
    %495 = arith.subf %493, %494 : vector<8x128xf32>
    %496 = math.absf %492 : vector<8x128xf32>
    %497 = math.absf %495 : vector<8x128xf32>
    %498 = arith.addf %496, %497 : vector<8x128xf32>
    %499 = vector.broadcast %483 : vector<1x128xf32> to vector<8x128xf32>
    %500 = arith.mulf %499, %498 : vector<8x128xf32>
    %501 = arith.addf %464, %500 : vector<8x128xf32>
    %502 = arith.mulf %492, %492 : vector<8x128xf32>
    %503 = vector.broadcast %487 : vector<1x128xf32> to vector<8x128xf32>
    %504 = arith.mulf %502, %503 : vector<8x128xf32>
    %505 = arith.mulf %495, %495 : vector<8x128xf32>
    %506 = vector.broadcast %489 : vector<1x128xf32> to vector<8x128xf32>
    %507 = arith.mulf %505, %506 : vector<8x128xf32>
    %508 = arith.addf %504, %507 : vector<8x128xf32>
    %509 = math.exp %508 : vector<8x128xf32>
    %510 = vector.broadcast %485 : vector<1x128xf32> to vector<8x128xf32>
    %511 = arith.mulf %510, %509 : vector<8x128xf32>
    %512 = arith.addf %475, %511 : vector<8x128xf32>
    %513 = vector.extract_strided_slice %140 {offsets = [0, 10], sizes = [8, 1], strides = [1, 1]} : vector<8x48xf32> to vector<8x1xf32>
    %514 = vector.extract_strided_slice %140 {offsets = [0, 34], sizes = [8, 1], strides = [1, 1]} : vector<8x48xf32> to vector<8x1xf32>
    %c0_158 = arith.constant 0 : index
    %c10_159 = arith.constant 10 : index
    %c0_160 = arith.constant 0 : index
    %515 = vector.load %arg6[%c0_158, %c10_159, %c0_160] : memref<1x144x128xf32, #tpu.memory_space<vmem>>, vector<1x1x128xf32>
    %516 = vector.shape_cast %515 : vector<1x1x128xf32> to vector<1x128xf32>
    %c0_161 = arith.constant 0 : index
    %c34 = arith.constant 34 : index
    %c0_162 = arith.constant 0 : index
    %517 = vector.load %arg6[%c0_161, %c34, %c0_162] : memref<1x144x128xf32, #tpu.memory_space<vmem>>, vector<1x1x128xf32>
    %518 = vector.shape_cast %517 : vector<1x1x128xf32> to vector<1x128xf32>
    %c0_163 = arith.constant 0 : index
    %c58 = arith.constant 58 : index
    %c0_164 = arith.constant 0 : index
    %519 = vector.load %arg6[%c0_163, %c58, %c0_164] : memref<1x144x128xf32, #tpu.memory_space<vmem>>, vector<1x1x128xf32>
    %520 = vector.shape_cast %519 : vector<1x1x128xf32> to vector<1x128xf32>
    %c0_165 = arith.constant 0 : index
    %c82 = arith.constant 82 : index
    %c0_166 = arith.constant 0 : index
    %521 = vector.load %arg6[%c0_165, %c82, %c0_166] : memref<1x144x128xf32, #tpu.memory_space<vmem>>, vector<1x1x128xf32>
    %522 = vector.shape_cast %521 : vector<1x1x128xf32> to vector<1x128xf32>
    %c0_167 = arith.constant 0 : index
    %c106 = arith.constant 106 : index
    %c0_168 = arith.constant 0 : index
    %523 = vector.load %arg6[%c0_167, %c106, %c0_168] : memref<1x144x128xf32, #tpu.memory_space<vmem>>, vector<1x1x128xf32>
    %524 = vector.shape_cast %523 : vector<1x1x128xf32> to vector<1x128xf32>
    %c0_169 = arith.constant 0 : index
    %c130 = arith.constant 130 : index
    %c0_170 = arith.constant 0 : index
    %525 = vector.load %arg6[%c0_169, %c130, %c0_170] : memref<1x144x128xf32, #tpu.memory_space<vmem>>, vector<1x1x128xf32>
    %526 = vector.shape_cast %525 : vector<1x1x128xf32> to vector<1x128xf32>
    %527 = vector.broadcast %513 : vector<8x1xf32> to vector<8x128xf32>
    %528 = vector.broadcast %516 : vector<1x128xf32> to vector<8x128xf32>
    %529 = arith.subf %527, %528 : vector<8x128xf32>
    %530 = vector.broadcast %514 : vector<8x1xf32> to vector<8x128xf32>
    %531 = vector.broadcast %518 : vector<1x128xf32> to vector<8x128xf32>
    %532 = arith.subf %530, %531 : vector<8x128xf32>
    %533 = math.absf %529 : vector<8x128xf32>
    %534 = math.absf %532 : vector<8x128xf32>
    %535 = arith.addf %533, %534 : vector<8x128xf32>
    %536 = vector.broadcast %520 : vector<1x128xf32> to vector<8x128xf32>
    %537 = arith.mulf %536, %535 : vector<8x128xf32>
    %538 = arith.addf %501, %537 : vector<8x128xf32>
    %539 = arith.mulf %529, %529 : vector<8x128xf32>
    %540 = vector.broadcast %524 : vector<1x128xf32> to vector<8x128xf32>
    %541 = arith.mulf %539, %540 : vector<8x128xf32>
    %542 = arith.mulf %532, %532 : vector<8x128xf32>
    %543 = vector.broadcast %526 : vector<1x128xf32> to vector<8x128xf32>
    %544 = arith.mulf %542, %543 : vector<8x128xf32>
    %545 = arith.addf %541, %544 : vector<8x128xf32>
    %546 = math.exp %545 : vector<8x128xf32>
    %547 = vector.broadcast %522 : vector<1x128xf32> to vector<8x128xf32>
    %548 = arith.mulf %547, %546 : vector<8x128xf32>
    %549 = arith.addf %512, %548 : vector<8x128xf32>
    %550 = vector.extract_strided_slice %140 {offsets = [0, 11], sizes = [8, 1], strides = [1, 1]} : vector<8x48xf32> to vector<8x1xf32>
    %551 = vector.extract_strided_slice %140 {offsets = [0, 35], sizes = [8, 1], strides = [1, 1]} : vector<8x48xf32> to vector<8x1xf32>
    %c0_171 = arith.constant 0 : index
    %c11_172 = arith.constant 11 : index
    %c0_173 = arith.constant 0 : index
    %552 = vector.load %arg6[%c0_171, %c11_172, %c0_173] : memref<1x144x128xf32, #tpu.memory_space<vmem>>, vector<1x1x128xf32>
    %553 = vector.shape_cast %552 : vector<1x1x128xf32> to vector<1x128xf32>
    %c0_174 = arith.constant 0 : index
    %c35 = arith.constant 35 : index
    %c0_175 = arith.constant 0 : index
    %554 = vector.load %arg6[%c0_174, %c35, %c0_175] : memref<1x144x128xf32, #tpu.memory_space<vmem>>, vector<1x1x128xf32>
    %555 = vector.shape_cast %554 : vector<1x1x128xf32> to vector<1x128xf32>
    %c0_176 = arith.constant 0 : index
    %c59 = arith.constant 59 : index
    %c0_177 = arith.constant 0 : index
    %556 = vector.load %arg6[%c0_176, %c59, %c0_177] : memref<1x144x128xf32, #tpu.memory_space<vmem>>, vector<1x1x128xf32>
    %557 = vector.shape_cast %556 : vector<1x1x128xf32> to vector<1x128xf32>
    %c0_178 = arith.constant 0 : index
    %c83 = arith.constant 83 : index
    %c0_179 = arith.constant 0 : index
    %558 = vector.load %arg6[%c0_178, %c83, %c0_179] : memref<1x144x128xf32, #tpu.memory_space<vmem>>, vector<1x1x128xf32>
    %559 = vector.shape_cast %558 : vector<1x1x128xf32> to vector<1x128xf32>
    %c0_180 = arith.constant 0 : index
    %c107 = arith.constant 107 : index
    %c0_181 = arith.constant 0 : index
    %560 = vector.load %arg6[%c0_180, %c107, %c0_181] : memref<1x144x128xf32, #tpu.memory_space<vmem>>, vector<1x1x128xf32>
    %561 = vector.shape_cast %560 : vector<1x1x128xf32> to vector<1x128xf32>
    %c0_182 = arith.constant 0 : index
    %c131 = arith.constant 131 : index
    %c0_183 = arith.constant 0 : index
    %562 = vector.load %arg6[%c0_182, %c131, %c0_183] : memref<1x144x128xf32, #tpu.memory_space<vmem>>, vector<1x1x128xf32>
    %563 = vector.shape_cast %562 : vector<1x1x128xf32> to vector<1x128xf32>
    %564 = vector.broadcast %550 : vector<8x1xf32> to vector<8x128xf32>
    %565 = vector.broadcast %553 : vector<1x128xf32> to vector<8x128xf32>
    %566 = arith.subf %564, %565 : vector<8x128xf32>
    %567 = vector.broadcast %551 : vector<8x1xf32> to vector<8x128xf32>
    %568 = vector.broadcast %555 : vector<1x128xf32> to vector<8x128xf32>
    %569 = arith.subf %567, %568 : vector<8x128xf32>
    %570 = math.absf %566 : vector<8x128xf32>
    %571 = math.absf %569 : vector<8x128xf32>
    %572 = arith.addf %570, %571 : vector<8x128xf32>
    %573 = vector.broadcast %557 : vector<1x128xf32> to vector<8x128xf32>
    %574 = arith.mulf %573, %572 : vector<8x128xf32>
    %575 = arith.addf %538, %574 : vector<8x128xf32>
    %576 = arith.mulf %566, %566 : vector<8x128xf32>
    %577 = vector.broadcast %561 : vector<1x128xf32> to vector<8x128xf32>
    %578 = arith.mulf %576, %577 : vector<8x128xf32>
    %579 = arith.mulf %569, %569 : vector<8x128xf32>
    %580 = vector.broadcast %563 : vector<1x128xf32> to vector<8x128xf32>
    %581 = arith.mulf %579, %580 : vector<8x128xf32>
    %582 = arith.addf %578, %581 : vector<8x128xf32>
    %583 = math.exp %582 : vector<8x128xf32>
    %584 = vector.broadcast %559 : vector<1x128xf32> to vector<8x128xf32>
    %585 = arith.mulf %584, %583 : vector<8x128xf32>
    %586 = arith.addf %549, %585 : vector<8x128xf32>
    %587 = vector.extract_strided_slice %140 {offsets = [0, 12], sizes = [8, 1], strides = [1, 1]} : vector<8x48xf32> to vector<8x1xf32>
    %588 = vector.extract_strided_slice %140 {offsets = [0, 36], sizes = [8, 1], strides = [1, 1]} : vector<8x48xf32> to vector<8x1xf32>
    %c0_184 = arith.constant 0 : index
    %c12 = arith.constant 12 : index
    %c0_185 = arith.constant 0 : index
    %589 = vector.load %arg6[%c0_184, %c12, %c0_185] : memref<1x144x128xf32, #tpu.memory_space<vmem>>, vector<1x1x128xf32>
    %590 = vector.shape_cast %589 : vector<1x1x128xf32> to vector<1x128xf32>
    %c0_186 = arith.constant 0 : index
    %c36 = arith.constant 36 : index
    %c0_187 = arith.constant 0 : index
    %591 = vector.load %arg6[%c0_186, %c36, %c0_187] : memref<1x144x128xf32, #tpu.memory_space<vmem>>, vector<1x1x128xf32>
    %592 = vector.shape_cast %591 : vector<1x1x128xf32> to vector<1x128xf32>
    %c0_188 = arith.constant 0 : index
    %c60 = arith.constant 60 : index
    %c0_189 = arith.constant 0 : index
    %593 = vector.load %arg6[%c0_188, %c60, %c0_189] : memref<1x144x128xf32, #tpu.memory_space<vmem>>, vector<1x1x128xf32>
    %594 = vector.shape_cast %593 : vector<1x1x128xf32> to vector<1x128xf32>
    %c0_190 = arith.constant 0 : index
    %c84 = arith.constant 84 : index
    %c0_191 = arith.constant 0 : index
    %595 = vector.load %arg6[%c0_190, %c84, %c0_191] : memref<1x144x128xf32, #tpu.memory_space<vmem>>, vector<1x1x128xf32>
    %596 = vector.shape_cast %595 : vector<1x1x128xf32> to vector<1x128xf32>
    %c0_192 = arith.constant 0 : index
    %c108 = arith.constant 108 : index
    %c0_193 = arith.constant 0 : index
    %597 = vector.load %arg6[%c0_192, %c108, %c0_193] : memref<1x144x128xf32, #tpu.memory_space<vmem>>, vector<1x1x128xf32>
    %598 = vector.shape_cast %597 : vector<1x1x128xf32> to vector<1x128xf32>
    %c0_194 = arith.constant 0 : index
    %c132 = arith.constant 132 : index
    %c0_195 = arith.constant 0 : index
    %599 = vector.load %arg6[%c0_194, %c132, %c0_195] : memref<1x144x128xf32, #tpu.memory_space<vmem>>, vector<1x1x128xf32>
    %600 = vector.shape_cast %599 : vector<1x1x128xf32> to vector<1x128xf32>
    %601 = vector.broadcast %587 : vector<8x1xf32> to vector<8x128xf32>
    %602 = vector.broadcast %590 : vector<1x128xf32> to vector<8x128xf32>
    %603 = arith.subf %601, %602 : vector<8x128xf32>
    %604 = vector.broadcast %588 : vector<8x1xf32> to vector<8x128xf32>
    %605 = vector.broadcast %592 : vector<1x128xf32> to vector<8x128xf32>
    %606 = arith.subf %604, %605 : vector<8x128xf32>
    %607 = math.absf %603 : vector<8x128xf32>
    %608 = math.absf %606 : vector<8x128xf32>
    %609 = arith.addf %607, %608 : vector<8x128xf32>
    %610 = vector.broadcast %594 : vector<1x128xf32> to vector<8x128xf32>
    %611 = arith.mulf %610, %609 : vector<8x128xf32>
    %612 = arith.addf %575, %611 : vector<8x128xf32>
    %613 = arith.mulf %603, %603 : vector<8x128xf32>
    %614 = vector.broadcast %598 : vector<1x128xf32> to vector<8x128xf32>
    %615 = arith.mulf %613, %614 : vector<8x128xf32>
    %616 = arith.mulf %606, %606 : vector<8x128xf32>
    %617 = vector.broadcast %600 : vector<1x128xf32> to vector<8x128xf32>
    %618 = arith.mulf %616, %617 : vector<8x128xf32>
    %619 = arith.addf %615, %618 : vector<8x128xf32>
    %620 = math.exp %619 : vector<8x128xf32>
    %621 = vector.broadcast %596 : vector<1x128xf32> to vector<8x128xf32>
    %622 = arith.mulf %621, %620 : vector<8x128xf32>
    %623 = arith.addf %586, %622 : vector<8x128xf32>
    %624 = vector.extract_strided_slice %140 {offsets = [0, 13], sizes = [8, 1], strides = [1, 1]} : vector<8x48xf32> to vector<8x1xf32>
    %625 = vector.extract_strided_slice %140 {offsets = [0, 37], sizes = [8, 1], strides = [1, 1]} : vector<8x48xf32> to vector<8x1xf32>
    %c0_196 = arith.constant 0 : index
    %c13 = arith.constant 13 : index
    %c0_197 = arith.constant 0 : index
    %626 = vector.load %arg6[%c0_196, %c13, %c0_197] : memref<1x144x128xf32, #tpu.memory_space<vmem>>, vector<1x1x128xf32>
    %627 = vector.shape_cast %626 : vector<1x1x128xf32> to vector<1x128xf32>
    %c0_198 = arith.constant 0 : index
    %c37 = arith.constant 37 : index
    %c0_199 = arith.constant 0 : index
    %628 = vector.load %arg6[%c0_198, %c37, %c0_199] : memref<1x144x128xf32, #tpu.memory_space<vmem>>, vector<1x1x128xf32>
    %629 = vector.shape_cast %628 : vector<1x1x128xf32> to vector<1x128xf32>
    %c0_200 = arith.constant 0 : index
    %c61 = arith.constant 61 : index
    %c0_201 = arith.constant 0 : index
    %630 = vector.load %arg6[%c0_200, %c61, %c0_201] : memref<1x144x128xf32, #tpu.memory_space<vmem>>, vector<1x1x128xf32>
    %631 = vector.shape_cast %630 : vector<1x1x128xf32> to vector<1x128xf32>
    %c0_202 = arith.constant 0 : index
    %c85 = arith.constant 85 : index
    %c0_203 = arith.constant 0 : index
    %632 = vector.load %arg6[%c0_202, %c85, %c0_203] : memref<1x144x128xf32, #tpu.memory_space<vmem>>, vector<1x1x128xf32>
    %633 = vector.shape_cast %632 : vector<1x1x128xf32> to vector<1x128xf32>
    %c0_204 = arith.constant 0 : index
    %c109 = arith.constant 109 : index
    %c0_205 = arith.constant 0 : index
    %634 = vector.load %arg6[%c0_204, %c109, %c0_205] : memref<1x144x128xf32, #tpu.memory_space<vmem>>, vector<1x1x128xf32>
    %635 = vector.shape_cast %634 : vector<1x1x128xf32> to vector<1x128xf32>
    %c0_206 = arith.constant 0 : index
    %c133 = arith.constant 133 : index
    %c0_207 = arith.constant 0 : index
    %636 = vector.load %arg6[%c0_206, %c133, %c0_207] : memref<1x144x128xf32, #tpu.memory_space<vmem>>, vector<1x1x128xf32>
    %637 = vector.shape_cast %636 : vector<1x1x128xf32> to vector<1x128xf32>
    %638 = vector.broadcast %624 : vector<8x1xf32> to vector<8x128xf32>
    %639 = vector.broadcast %627 : vector<1x128xf32> to vector<8x128xf32>
    %640 = arith.subf %638, %639 : vector<8x128xf32>
    %641 = vector.broadcast %625 : vector<8x1xf32> to vector<8x128xf32>
    %642 = vector.broadcast %629 : vector<1x128xf32> to vector<8x128xf32>
    %643 = arith.subf %641, %642 : vector<8x128xf32>
    %644 = math.absf %640 : vector<8x128xf32>
    %645 = math.absf %643 : vector<8x128xf32>
    %646 = arith.addf %644, %645 : vector<8x128xf32>
    %647 = vector.broadcast %631 : vector<1x128xf32> to vector<8x128xf32>
    %648 = arith.mulf %647, %646 : vector<8x128xf32>
    %649 = arith.addf %612, %648 : vector<8x128xf32>
    %650 = arith.mulf %640, %640 : vector<8x128xf32>
    %651 = vector.broadcast %635 : vector<1x128xf32> to vector<8x128xf32>
    %652 = arith.mulf %650, %651 : vector<8x128xf32>
    %653 = arith.mulf %643, %643 : vector<8x128xf32>
    %654 = vector.broadcast %637 : vector<1x128xf32> to vector<8x128xf32>
    %655 = arith.mulf %653, %654 : vector<8x128xf32>
    %656 = arith.addf %652, %655 : vector<8x128xf32>
    %657 = math.exp %656 : vector<8x128xf32>
    %658 = vector.broadcast %633 : vector<1x128xf32> to vector<8x128xf32>
    %659 = arith.mulf %658, %657 : vector<8x128xf32>
    %660 = arith.addf %623, %659 : vector<8x128xf32>
    %661 = vector.extract_strided_slice %140 {offsets = [0, 14], sizes = [8, 1], strides = [1, 1]} : vector<8x48xf32> to vector<8x1xf32>
    %662 = vector.extract_strided_slice %140 {offsets = [0, 38], sizes = [8, 1], strides = [1, 1]} : vector<8x48xf32> to vector<8x1xf32>
    %c0_208 = arith.constant 0 : index
    %c14 = arith.constant 14 : index
    %c0_209 = arith.constant 0 : index
    %663 = vector.load %arg6[%c0_208, %c14, %c0_209] : memref<1x144x128xf32, #tpu.memory_space<vmem>>, vector<1x1x128xf32>
    %664 = vector.shape_cast %663 : vector<1x1x128xf32> to vector<1x128xf32>
    %c0_210 = arith.constant 0 : index
    %c38 = arith.constant 38 : index
    %c0_211 = arith.constant 0 : index
    %665 = vector.load %arg6[%c0_210, %c38, %c0_211] : memref<1x144x128xf32, #tpu.memory_space<vmem>>, vector<1x1x128xf32>
    %666 = vector.shape_cast %665 : vector<1x1x128xf32> to vector<1x128xf32>
    %c0_212 = arith.constant 0 : index
    %c62 = arith.constant 62 : index
    %c0_213 = arith.constant 0 : index
    %667 = vector.load %arg6[%c0_212, %c62, %c0_213] : memref<1x144x128xf32, #tpu.memory_space<vmem>>, vector<1x1x128xf32>
    %668 = vector.shape_cast %667 : vector<1x1x128xf32> to vector<1x128xf32>
    %c0_214 = arith.constant 0 : index
    %c86 = arith.constant 86 : index
    %c0_215 = arith.constant 0 : index
    %669 = vector.load %arg6[%c0_214, %c86, %c0_215] : memref<1x144x128xf32, #tpu.memory_space<vmem>>, vector<1x1x128xf32>
    %670 = vector.shape_cast %669 : vector<1x1x128xf32> to vector<1x128xf32>
    %c0_216 = arith.constant 0 : index
    %c110 = arith.constant 110 : index
    %c0_217 = arith.constant 0 : index
    %671 = vector.load %arg6[%c0_216, %c110, %c0_217] : memref<1x144x128xf32, #tpu.memory_space<vmem>>, vector<1x1x128xf32>
    %672 = vector.shape_cast %671 : vector<1x1x128xf32> to vector<1x128xf32>
    %c0_218 = arith.constant 0 : index
    %c134 = arith.constant 134 : index
    %c0_219 = arith.constant 0 : index
    %673 = vector.load %arg6[%c0_218, %c134, %c0_219] : memref<1x144x128xf32, #tpu.memory_space<vmem>>, vector<1x1x128xf32>
    %674 = vector.shape_cast %673 : vector<1x1x128xf32> to vector<1x128xf32>
    %675 = vector.broadcast %661 : vector<8x1xf32> to vector<8x128xf32>
    %676 = vector.broadcast %664 : vector<1x128xf32> to vector<8x128xf32>
    %677 = arith.subf %675, %676 : vector<8x128xf32>
    %678 = vector.broadcast %662 : vector<8x1xf32> to vector<8x128xf32>
    %679 = vector.broadcast %666 : vector<1x128xf32> to vector<8x128xf32>
    %680 = arith.subf %678, %679 : vector<8x128xf32>
    %681 = math.absf %677 : vector<8x128xf32>
    %682 = math.absf %680 : vector<8x128xf32>
    %683 = arith.addf %681, %682 : vector<8x128xf32>
    %684 = vector.broadcast %668 : vector<1x128xf32> to vector<8x128xf32>
    %685 = arith.mulf %684, %683 : vector<8x128xf32>
    %686 = arith.addf %649, %685 : vector<8x128xf32>
    %687 = arith.mulf %677, %677 : vector<8x128xf32>
    %688 = vector.broadcast %672 : vector<1x128xf32> to vector<8x128xf32>
    %689 = arith.mulf %687, %688 : vector<8x128xf32>
    %690 = arith.mulf %680, %680 : vector<8x128xf32>
    %691 = vector.broadcast %674 : vector<1x128xf32> to vector<8x128xf32>
    %692 = arith.mulf %690, %691 : vector<8x128xf32>
    %693 = arith.addf %689, %692 : vector<8x128xf32>
    %694 = math.exp %693 : vector<8x128xf32>
    %695 = vector.broadcast %670 : vector<1x128xf32> to vector<8x128xf32>
    %696 = arith.mulf %695, %694 : vector<8x128xf32>
    %697 = arith.addf %660, %696 : vector<8x128xf32>
    %698 = vector.extract_strided_slice %140 {offsets = [0, 15], sizes = [8, 1], strides = [1, 1]} : vector<8x48xf32> to vector<8x1xf32>
    %699 = vector.extract_strided_slice %140 {offsets = [0, 39], sizes = [8, 1], strides = [1, 1]} : vector<8x48xf32> to vector<8x1xf32>
    %c0_220 = arith.constant 0 : index
    %c15 = arith.constant 15 : index
    %c0_221 = arith.constant 0 : index
    %700 = vector.load %arg6[%c0_220, %c15, %c0_221] : memref<1x144x128xf32, #tpu.memory_space<vmem>>, vector<1x1x128xf32>
    %701 = vector.shape_cast %700 : vector<1x1x128xf32> to vector<1x128xf32>
    %c0_222 = arith.constant 0 : index
    %c39 = arith.constant 39 : index
    %c0_223 = arith.constant 0 : index
    %702 = vector.load %arg6[%c0_222, %c39, %c0_223] : memref<1x144x128xf32, #tpu.memory_space<vmem>>, vector<1x1x128xf32>
    %703 = vector.shape_cast %702 : vector<1x1x128xf32> to vector<1x128xf32>
    %c0_224 = arith.constant 0 : index
    %c63 = arith.constant 63 : index
    %c0_225 = arith.constant 0 : index
    %704 = vector.load %arg6[%c0_224, %c63, %c0_225] : memref<1x144x128xf32, #tpu.memory_space<vmem>>, vector<1x1x128xf32>
    %705 = vector.shape_cast %704 : vector<1x1x128xf32> to vector<1x128xf32>
    %c0_226 = arith.constant 0 : index
    %c87 = arith.constant 87 : index
    %c0_227 = arith.constant 0 : index
    %706 = vector.load %arg6[%c0_226, %c87, %c0_227] : memref<1x144x128xf32, #tpu.memory_space<vmem>>, vector<1x1x128xf32>
    %707 = vector.shape_cast %706 : vector<1x1x128xf32> to vector<1x128xf32>
    %c0_228 = arith.constant 0 : index
    %c111 = arith.constant 111 : index
    %c0_229 = arith.constant 0 : index
    %708 = vector.load %arg6[%c0_228, %c111, %c0_229] : memref<1x144x128xf32, #tpu.memory_space<vmem>>, vector<1x1x128xf32>
    %709 = vector.shape_cast %708 : vector<1x1x128xf32> to vector<1x128xf32>
    %c0_230 = arith.constant 0 : index
    %c135 = arith.constant 135 : index
    %c0_231 = arith.constant 0 : index
    %710 = vector.load %arg6[%c0_230, %c135, %c0_231] : memref<1x144x128xf32, #tpu.memory_space<vmem>>, vector<1x1x128xf32>
    %711 = vector.shape_cast %710 : vector<1x1x128xf32> to vector<1x128xf32>
    %712 = vector.broadcast %698 : vector<8x1xf32> to vector<8x128xf32>
    %713 = vector.broadcast %701 : vector<1x128xf32> to vector<8x128xf32>
    %714 = arith.subf %712, %713 : vector<8x128xf32>
    %715 = vector.broadcast %699 : vector<8x1xf32> to vector<8x128xf32>
    %716 = vector.broadcast %703 : vector<1x128xf32> to vector<8x128xf32>
    %717 = arith.subf %715, %716 : vector<8x128xf32>
    %718 = math.absf %714 : vector<8x128xf32>
    %719 = math.absf %717 : vector<8x128xf32>
    %720 = arith.addf %718, %719 : vector<8x128xf32>
    %721 = vector.broadcast %705 : vector<1x128xf32> to vector<8x128xf32>
    %722 = arith.mulf %721, %720 : vector<8x128xf32>
    %723 = arith.addf %686, %722 : vector<8x128xf32>
    %724 = arith.mulf %714, %714 : vector<8x128xf32>
    %725 = vector.broadcast %709 : vector<1x128xf32> to vector<8x128xf32>
    %726 = arith.mulf %724, %725 : vector<8x128xf32>
    %727 = arith.mulf %717, %717 : vector<8x128xf32>
    %728 = vector.broadcast %711 : vector<1x128xf32> to vector<8x128xf32>
    %729 = arith.mulf %727, %728 : vector<8x128xf32>
    %730 = arith.addf %726, %729 : vector<8x128xf32>
    %731 = math.exp %730 : vector<8x128xf32>
    %732 = vector.broadcast %707 : vector<1x128xf32> to vector<8x128xf32>
    %733 = arith.mulf %732, %731 : vector<8x128xf32>
    %734 = arith.addf %697, %733 : vector<8x128xf32>
    %735 = vector.extract_strided_slice %140 {offsets = [0, 16], sizes = [8, 1], strides = [1, 1]} : vector<8x48xf32> to vector<8x1xf32>
    %736 = vector.extract_strided_slice %140 {offsets = [0, 40], sizes = [8, 1], strides = [1, 1]} : vector<8x48xf32> to vector<8x1xf32>
    %c0_232 = arith.constant 0 : index
    %c16 = arith.constant 16 : index
    %c0_233 = arith.constant 0 : index
    %737 = vector.load %arg6[%c0_232, %c16, %c0_233] : memref<1x144x128xf32, #tpu.memory_space<vmem>>, vector<1x1x128xf32>
    %738 = vector.shape_cast %737 : vector<1x1x128xf32> to vector<1x128xf32>
    %c0_234 = arith.constant 0 : index
    %c40 = arith.constant 40 : index
    %c0_235 = arith.constant 0 : index
    %739 = vector.load %arg6[%c0_234, %c40, %c0_235] : memref<1x144x128xf32, #tpu.memory_space<vmem>>, vector<1x1x128xf32>
    %740 = vector.shape_cast %739 : vector<1x1x128xf32> to vector<1x128xf32>
    %c0_236 = arith.constant 0 : index
    %c64 = arith.constant 64 : index
    %c0_237 = arith.constant 0 : index
    %741 = vector.load %arg6[%c0_236, %c64, %c0_237] : memref<1x144x128xf32, #tpu.memory_space<vmem>>, vector<1x1x128xf32>
    %742 = vector.shape_cast %741 : vector<1x1x128xf32> to vector<1x128xf32>
    %c0_238 = arith.constant 0 : index
    %c88 = arith.constant 88 : index
    %c0_239 = arith.constant 0 : index
    %743 = vector.load %arg6[%c0_238, %c88, %c0_239] : memref<1x144x128xf32, #tpu.memory_space<vmem>>, vector<1x1x128xf32>
    %744 = vector.shape_cast %743 : vector<1x1x128xf32> to vector<1x128xf32>
    %c0_240 = arith.constant 0 : index
    %c112 = arith.constant 112 : index
    %c0_241 = arith.constant 0 : index
    %745 = vector.load %arg6[%c0_240, %c112, %c0_241] : memref<1x144x128xf32, #tpu.memory_space<vmem>>, vector<1x1x128xf32>
    %746 = vector.shape_cast %745 : vector<1x1x128xf32> to vector<1x128xf32>
    %c0_242 = arith.constant 0 : index
    %c136 = arith.constant 136 : index
    %c0_243 = arith.constant 0 : index
    %747 = vector.load %arg6[%c0_242, %c136, %c0_243] : memref<1x144x128xf32, #tpu.memory_space<vmem>>, vector<1x1x128xf32>
    %748 = vector.shape_cast %747 : vector<1x1x128xf32> to vector<1x128xf32>
    %749 = vector.broadcast %735 : vector<8x1xf32> to vector<8x128xf32>
    %750 = vector.broadcast %738 : vector<1x128xf32> to vector<8x128xf32>
    %751 = arith.subf %749, %750 : vector<8x128xf32>
    %752 = vector.broadcast %736 : vector<8x1xf32> to vector<8x128xf32>
    %753 = vector.broadcast %740 : vector<1x128xf32> to vector<8x128xf32>
    %754 = arith.subf %752, %753 : vector<8x128xf32>
    %755 = math.absf %751 : vector<8x128xf32>
    %756 = math.absf %754 : vector<8x128xf32>
    %757 = arith.addf %755, %756 : vector<8x128xf32>
    %758 = vector.broadcast %742 : vector<1x128xf32> to vector<8x128xf32>
    %759 = arith.mulf %758, %757 : vector<8x128xf32>
    %760 = arith.addf %723, %759 : vector<8x128xf32>
    %761 = arith.mulf %751, %751 : vector<8x128xf32>
    %762 = vector.broadcast %746 : vector<1x128xf32> to vector<8x128xf32>
    %763 = arith.mulf %761, %762 : vector<8x128xf32>
    %764 = arith.mulf %754, %754 : vector<8x128xf32>
    %765 = vector.broadcast %748 : vector<1x128xf32> to vector<8x128xf32>
    %766 = arith.mulf %764, %765 : vector<8x128xf32>
    %767 = arith.addf %763, %766 : vector<8x128xf32>
    %768 = math.exp %767 : vector<8x128xf32>
    %769 = vector.broadcast %744 : vector<1x128xf32> to vector<8x128xf32>
    %770 = arith.mulf %769, %768 : vector<8x128xf32>
    %771 = arith.addf %734, %770 : vector<8x128xf32>
    %772 = vector.extract_strided_slice %140 {offsets = [0, 17], sizes = [8, 1], strides = [1, 1]} : vector<8x48xf32> to vector<8x1xf32>
    %773 = vector.extract_strided_slice %140 {offsets = [0, 41], sizes = [8, 1], strides = [1, 1]} : vector<8x48xf32> to vector<8x1xf32>
    %c0_244 = arith.constant 0 : index
    %c17 = arith.constant 17 : index
    %c0_245 = arith.constant 0 : index
    %774 = vector.load %arg6[%c0_244, %c17, %c0_245] : memref<1x144x128xf32, #tpu.memory_space<vmem>>, vector<1x1x128xf32>
    %775 = vector.shape_cast %774 : vector<1x1x128xf32> to vector<1x128xf32>
    %c0_246 = arith.constant 0 : index
    %c41 = arith.constant 41 : index
    %c0_247 = arith.constant 0 : index
    %776 = vector.load %arg6[%c0_246, %c41, %c0_247] : memref<1x144x128xf32, #tpu.memory_space<vmem>>, vector<1x1x128xf32>
    %777 = vector.shape_cast %776 : vector<1x1x128xf32> to vector<1x128xf32>
    %c0_248 = arith.constant 0 : index
    %c65 = arith.constant 65 : index
    %c0_249 = arith.constant 0 : index
    %778 = vector.load %arg6[%c0_248, %c65, %c0_249] : memref<1x144x128xf32, #tpu.memory_space<vmem>>, vector<1x1x128xf32>
    %779 = vector.shape_cast %778 : vector<1x1x128xf32> to vector<1x128xf32>
    %c0_250 = arith.constant 0 : index
    %c89 = arith.constant 89 : index
    %c0_251 = arith.constant 0 : index
    %780 = vector.load %arg6[%c0_250, %c89, %c0_251] : memref<1x144x128xf32, #tpu.memory_space<vmem>>, vector<1x1x128xf32>
    %781 = vector.shape_cast %780 : vector<1x1x128xf32> to vector<1x128xf32>
    %c0_252 = arith.constant 0 : index
    %c113 = arith.constant 113 : index
    %c0_253 = arith.constant 0 : index
    %782 = vector.load %arg6[%c0_252, %c113, %c0_253] : memref<1x144x128xf32, #tpu.memory_space<vmem>>, vector<1x1x128xf32>
    %783 = vector.shape_cast %782 : vector<1x1x128xf32> to vector<1x128xf32>
    %c0_254 = arith.constant 0 : index
    %c137 = arith.constant 137 : index
    %c0_255 = arith.constant 0 : index
    %784 = vector.load %arg6[%c0_254, %c137, %c0_255] : memref<1x144x128xf32, #tpu.memory_space<vmem>>, vector<1x1x128xf32>
    %785 = vector.shape_cast %784 : vector<1x1x128xf32> to vector<1x128xf32>
    %786 = vector.broadcast %772 : vector<8x1xf32> to vector<8x128xf32>
    %787 = vector.broadcast %775 : vector<1x128xf32> to vector<8x128xf32>
    %788 = arith.subf %786, %787 : vector<8x128xf32>
    %789 = vector.broadcast %773 : vector<8x1xf32> to vector<8x128xf32>
    %790 = vector.broadcast %777 : vector<1x128xf32> to vector<8x128xf32>
    %791 = arith.subf %789, %790 : vector<8x128xf32>
    %792 = math.absf %788 : vector<8x128xf32>
    %793 = math.absf %791 : vector<8x128xf32>
    %794 = arith.addf %792, %793 : vector<8x128xf32>
    %795 = vector.broadcast %779 : vector<1x128xf32> to vector<8x128xf32>
    %796 = arith.mulf %795, %794 : vector<8x128xf32>
    %797 = arith.addf %760, %796 : vector<8x128xf32>
    %798 = arith.mulf %788, %788 : vector<8x128xf32>
    %799 = vector.broadcast %783 : vector<1x128xf32> to vector<8x128xf32>
    %800 = arith.mulf %798, %799 : vector<8x128xf32>
    %801 = arith.mulf %791, %791 : vector<8x128xf32>
    %802 = vector.broadcast %785 : vector<1x128xf32> to vector<8x128xf32>
    %803 = arith.mulf %801, %802 : vector<8x128xf32>
    %804 = arith.addf %800, %803 : vector<8x128xf32>
    %805 = math.exp %804 : vector<8x128xf32>
    %806 = vector.broadcast %781 : vector<1x128xf32> to vector<8x128xf32>
    %807 = arith.mulf %806, %805 : vector<8x128xf32>
    %808 = arith.addf %771, %807 : vector<8x128xf32>
    %809 = vector.extract_strided_slice %140 {offsets = [0, 18], sizes = [8, 1], strides = [1, 1]} : vector<8x48xf32> to vector<8x1xf32>
    %810 = vector.extract_strided_slice %140 {offsets = [0, 42], sizes = [8, 1], strides = [1, 1]} : vector<8x48xf32> to vector<8x1xf32>
    %c0_256 = arith.constant 0 : index
    %c18 = arith.constant 18 : index
    %c0_257 = arith.constant 0 : index
    %811 = vector.load %arg6[%c0_256, %c18, %c0_257] : memref<1x144x128xf32, #tpu.memory_space<vmem>>, vector<1x1x128xf32>
    %812 = vector.shape_cast %811 : vector<1x1x128xf32> to vector<1x128xf32>
    %c0_258 = arith.constant 0 : index
    %c42 = arith.constant 42 : index
    %c0_259 = arith.constant 0 : index
    %813 = vector.load %arg6[%c0_258, %c42, %c0_259] : memref<1x144x128xf32, #tpu.memory_space<vmem>>, vector<1x1x128xf32>
    %814 = vector.shape_cast %813 : vector<1x1x128xf32> to vector<1x128xf32>
    %c0_260 = arith.constant 0 : index
    %c66 = arith.constant 66 : index
    %c0_261 = arith.constant 0 : index
    %815 = vector.load %arg6[%c0_260, %c66, %c0_261] : memref<1x144x128xf32, #tpu.memory_space<vmem>>, vector<1x1x128xf32>
    %816 = vector.shape_cast %815 : vector<1x1x128xf32> to vector<1x128xf32>
    %c0_262 = arith.constant 0 : index
    %c90 = arith.constant 90 : index
    %c0_263 = arith.constant 0 : index
    %817 = vector.load %arg6[%c0_262, %c90, %c0_263] : memref<1x144x128xf32, #tpu.memory_space<vmem>>, vector<1x1x128xf32>
    %818 = vector.shape_cast %817 : vector<1x1x128xf32> to vector<1x128xf32>
    %c0_264 = arith.constant 0 : index
    %c114 = arith.constant 114 : index
    %c0_265 = arith.constant 0 : index
    %819 = vector.load %arg6[%c0_264, %c114, %c0_265] : memref<1x144x128xf32, #tpu.memory_space<vmem>>, vector<1x1x128xf32>
    %820 = vector.shape_cast %819 : vector<1x1x128xf32> to vector<1x128xf32>
    %c0_266 = arith.constant 0 : index
    %c138 = arith.constant 138 : index
    %c0_267 = arith.constant 0 : index
    %821 = vector.load %arg6[%c0_266, %c138, %c0_267] : memref<1x144x128xf32, #tpu.memory_space<vmem>>, vector<1x1x128xf32>
    %822 = vector.shape_cast %821 : vector<1x1x128xf32> to vector<1x128xf32>
    %823 = vector.broadcast %809 : vector<8x1xf32> to vector<8x128xf32>
    %824 = vector.broadcast %812 : vector<1x128xf32> to vector<8x128xf32>
    %825 = arith.subf %823, %824 : vector<8x128xf32>
    %826 = vector.broadcast %810 : vector<8x1xf32> to vector<8x128xf32>
    %827 = vector.broadcast %814 : vector<1x128xf32> to vector<8x128xf32>
    %828 = arith.subf %826, %827 : vector<8x128xf32>
    %829 = math.absf %825 : vector<8x128xf32>
    %830 = math.absf %828 : vector<8x128xf32>
    %831 = arith.addf %829, %830 : vector<8x128xf32>
    %832 = vector.broadcast %816 : vector<1x128xf32> to vector<8x128xf32>
    %833 = arith.mulf %832, %831 : vector<8x128xf32>
    %834 = arith.addf %797, %833 : vector<8x128xf32>
    %835 = arith.mulf %825, %825 : vector<8x128xf32>
    %836 = vector.broadcast %820 : vector<1x128xf32> to vector<8x128xf32>
    %837 = arith.mulf %835, %836 : vector<8x128xf32>
    %838 = arith.mulf %828, %828 : vector<8x128xf32>
    %839 = vector.broadcast %822 : vector<1x128xf32> to vector<8x128xf32>
    %840 = arith.mulf %838, %839 : vector<8x128xf32>
    %841 = arith.addf %837, %840 : vector<8x128xf32>
    %842 = math.exp %841 : vector<8x128xf32>
    %843 = vector.broadcast %818 : vector<1x128xf32> to vector<8x128xf32>
    %844 = arith.mulf %843, %842 : vector<8x128xf32>
    %845 = arith.addf %808, %844 : vector<8x128xf32>
    %c0_268 = arith.constant 0 : index
    %c12_269 = arith.constant 12 : index
    %c0_270 = arith.constant 0 : index
    %846 = vector.load %arg5[%c0_268, %c12_269, %c0_270] : memref<1x16x128xf32, #tpu.memory_space<vmem>>, vector<1x1x128xf32>
    %847 = vector.shape_cast %846 : vector<1x1x128xf32> to vector<1x128xf32>
    %848 = arith.addf %137, %834 : vector<8x128xf32>
    %849 = arith.addf %848, %845 : vector<8x128xf32>
    %850 = vector.broadcast %847 : vector<1x128xf32> to vector<8x128xf32>
    %851 = arith.addf %849, %850 : vector<8x128xf32>
    %c0_271 = arith.constant 0 : index
    %852 = arith.index_cast %1 : i32 to index
    %c0_272 = arith.constant 0 : index
    %853 = vector.load %arg7[%c0_271, %852, %c0_272] : memref<1x8x128xf32, #tpu.memory_space<vmem>>, vector<1x8x128xf32>
    %854 = vector.shape_cast %853 : vector<1x8x128xf32> to vector<8x128xf32>
    %855 = vector.shape_cast %851 : vector<8x128xf32> to vector<1x8x128xf32>
    tpu.vector_store %arg7[%c0_271, %852, %c0_272], %855 {strides = array<i32>} : memref<1x8x128xf32, #tpu.memory_space<vmem>>, vector<1x8x128xf32>,
    %c1_i32 = arith.constant 1 : i32
    return
  }
  func.func @transform_0(%arg0: i32, %arg1: i32) -> (i32, i32, i32) {
    %c0_i32 = arith.constant 0 : i32
    %c0_i32_0 = arith.constant 0 : i32
    return %arg0, %arg1, %c0_i32 : i32, i32, i32
  }
  func.func @transform_1(%arg0: i32, %arg1: i32) -> (i32, i32, i32) {
    %c0_i32 = arith.constant 0 : i32
    %c0_i32_0 = arith.constant 0 : i32
    return %arg0, %arg1, %c0_i32 : i32, i32, i32
  }
  func.func @transform_2(%arg0: i32, %arg1: i32) -> (i32, i32, i32) {
    %c0_i32 = arith.constant 0 : i32
    %c0_i32_0 = arith.constant 0 : i32
    return %arg0, %arg1, %c0_i32 : i32, i32, i32
  }
  func.func @transform_3(%arg0: i32, %arg1: i32) -> (i32, i32, i32) {
    %c0_i32 = arith.constant 0 : i32
    %c0_i32_0 = arith.constant 0 : i32
    %c0_i32_1 = arith.constant 0 : i32
    return %arg0, %c0_i32, %c0_i32_0 : i32, i32, i32
  }
  func.func @transform_4(%arg0: i32, %arg1: i32) -> (i32, i32, i32) {
    %c0_i32 = arith.constant 0 : i32
    %c0_i32_0 = arith.constant 0 : i32
    %c0_i32_1 = arith.constant 0 : i32
    return %arg0, %c0_i32, %c0_i32_0 : i32, i32, i32
  }
  func.func @transform_5(%arg0: i32, %arg1: i32) -> (i32, i32, i32) {
    %c0_i32 = arith.constant 0 : i32
    %c0_i32_0 = arith.constant 0 : i32
    return %arg0, %arg1, %c0_i32 : i32, i32, i32
  }
}

</mosaic_0001>

<llo_original>
// kernel: tpu_custom_call.1
$region0: #{tpu_custom_call.1}
  #allocation0 [shape = 'u32[]', space=smem, size = 0x4, offset = 0x4, fixed_abs, tag = 'smem constant byte address 0x4 - core index']
  #allocation1 [shape = 'u32[144,128]{1,0:T(1,128)}', space=vmem, size = 0x12000, scoped, tag = 'internal scratch']
  %s0 = inlined_call_operand.vmem [shape: f32[2,8,8], index: 0, kind: input, shape index: {}]
  %s1 = inlined_call_operand.vmem [shape: f32[2,8,4], index: 1, kind: input, shape index: {}]
  %s2 = inlined_call_operand.hbm [shape: f32[2,8,48], index: 2, kind: input, shape index: {}]
  %s3 = inlined_call_operand.hbm [shape: f32[2,16,128], index: 3, kind: input, shape index: {}]
  %s4 = inlined_call_operand.hbm [shape: f32[2,144,128], index: 4, kind: input, shape index: {}]
  %s5 = inlined_call_operand.hbm [shape: f32[2,8,128], index: 5, kind: output, shape index: {}]
  %s6 = sld [smem:[#allocation0]]
  $region65: #{tpu_custom_call.1} parent=0
    _
  %s8 = ssub.s32 1, %s6
  %s9 = scalar_select 0, %s8, %s6
  $region1: #{tpu_custom_call.1} parent=0
    #allocation2 [shape = 'u8[8192]{0}', space=vmem, size = 0x2000, scoped, tag = 'input window, operand 2']
    #allocation3 [shape = 's32[2]{0}', space=sflag, size = 0x8, scoped, tag = 'scoped memory for tpu_custom_call.1']
    #allocation4 [shape = 's32[2]{0}', space=sflag, size = 0x8, scoped, tag = 'scoped memory for tpu_custom_call.1']
    #allocation5 [shape = 'u8[16384]{0}', space=vmem, size = 0x4000, scoped, tag = 'input window, operand 3']
    #allocation6 [shape = 's32[2]{0}', space=sflag, size = 0x8, scoped, tag = 'scoped memory for tpu_custom_call.1']
    #allocation7 [shape = 'u8[147456]{0}', space=vmem, size = 0x24000, scoped, tag = 'input window, operand 4']
    #allocation8 [shape = 'u8[8192]{0}', space=vmem, size = 0x2000, scoped, tag = 'output window, operand 0']
    %10 = vsyncpa [#allocation3], 0
    %s11 = scalar_lea.sflag [#allocation3], 1
    %12 = vsyncpa %s11, 0
    %13 = vsyncpa [#allocation6], 0
    %s14 = scalar_lea.sflag [#allocation6], 1
    %15 = vsyncpa %s14, 0
    %16 = vsyncpa [#allocation4], 0
    %s17 = scalar_lea.sflag [#allocation4], 1
    %18 = vsyncpa %s17, 0
    loop: start=0, step=1, limit=4
    $region2: #{tpu_custom_call.1} parent=1 // loop_pre_header
      _
    $region3: #{tpu_custom_call.1} parent=1 // loop_header
      %s20 = sphi 0, %s24
      %p21 = scmp.ge.s32.totalorder %s20, 4
      %s27 = sphi 0, %s39
      %s28 = sphi 0, %s35
      %s29 = sphi 0, %s27
      %s30 = sphi 0, %s28
      %s31 = sphi 0, %s29
      %s32 = sphi 0, %s30
      %s44 = sphi 0, %s46
      %s47 = sphi 0, %s44
      %s48 = sphi 0, %s47
      %s64 = sphi 0, %s48
      %s72 = sphi 0, %s74
      %s75 = sphi 0, %s72
      %s76 = sphi 0, %s75
      %s92 = sphi 0, %s76
      %s100 = sphi 0, %s102
      %s103 = sphi 0, %s100
      %s104 = sphi 0, %s103
      %s120 = sphi 0, %s104
      %s126 = sphi 0, %s128
      %s129 = sphi 0, %s126
      %s130 = sphi 0, %s129
      %s146 = sphi 0, %s130
      %s152 = sphi 0, %s154
      %s155 = sphi 0, %s152
      %s156 = sphi 0, %s155
      %s172 = sphi 0, %s156
      %s180 = sphi 0, %s182
      %s183 = sphi 0, %s180
      %s184 = sphi 0, %s183
      %s200 = sphi 0, %s184
    $region4: #{tpu_custom_call.1} parent=1 // loop_header_branch
      %23 = sbr.rel (%p21) target = $region8
    $region5: #{tpu_custom_call.1} parent=1 // loop_body
      %s25 = ssub.s32 %s20, 1
      %s26 = ssub.s32 %s20, 2
      %s33 = sadd.s32 1, %s28
      %p34 = scmp.ge.s32.totalorder %s33, 1
      %s35 = scalar_select %p34, 0, %s33
      %s36 = sadd.s32 1, %s27
      %s37 = scalar_select %p34, %s36, %s27
      %p38 = scmp.ge.s32.totalorder %s37, 2
      %s39 = scalar_select %p38, 0, %s37
      %s40 = ssub.s32 %s27, %s39
      %s41 = ssub.s32 %s28, %s35
      %s42 = sor.u32 %s40, %s41
      %p43 = scmp.eq.s32.totalorder %s42, 0
      %s45 = sadd.s32 %s44, 1
      %s46 = scalar_select %p43, %s44, %s45
      %p49 = pneg %p43
      %p50 = scmp.eq.s32.totalorder %s20, 1
      %p51 = por %p49, %p50
      %p52 = scmp.ne.s32.totalorder %s44, %s47
      %p53 = scmp.eq.s32.totalorder %s20, 0
      %p54 = por %p52, %p53
      %p55 = scmp.ne.s32.totalorder %s44, %s47
      %p56 = scmp.eq.s32.totalorder %s25, 1
      %p57 = por %p55, %p56
      %p58 = scmp.ne.s32.totalorder %s47, %s48
      %p59 = scmp.eq.s32.totalorder %s25, 0
      %p60 = por %p58, %p59
      %p61 = scmp.ne.s32.totalorder %s47, %s48
      %p62 = scmp.eq.s32.totalorder %s26, 1
      %p63 = por %p61, %p62
      %p65 = scmp.ne.s32.totalorder %s48, %s64
      %p66 = scmp.eq.s32.totalorder %s26, 0
      %p67 = por %p65, %p66
      %s68 = ssub.s32 %s27, %s39
      %s69 = ssub.s32 %s28, %s35
      %s70 = sor.u32 %s68, %s69
      %p71 = scmp.eq.s32.totalorder %s70, 0
      %s73 = sadd.s32 %s72, 1
      %s74 = scalar_select %p71, %s72, %s73
      %p77 = pneg %p71
      %p78 = scmp.eq.s32.totalorder %s20, 1
      %p79 = por %p77, %p78
      %p80 = scmp.ne.s32.totalorder %s72, %s75
      %p81 = scmp.eq.s32.totalorder %s20, 0
      %p82 = por %p80, %p81
      %p83 = scmp.ne.s32.totalorder %s72, %s75
      %p84 = scmp.eq.s32.totalorder %s25, 1
      %p85 = por %p83, %p84
      %p86 = scmp.ne.s32.totalorder %s75, %s76
      %p87 = scmp.eq.s32.totalorder %s25, 0
      %p88 = por %p86, %p87
      %p89 = scmp.ne.s32.totalorder %s75, %s76
      %p90 = scmp.eq.s32.totalorder %s26, 1
      %p91 = por %p89, %p90
      %p93 = scmp.ne.s32.totalorder %s76, %s92
      %p94 = scmp.eq.s32.totalorder %s26, 0
      %p95 = por %p93, %p94
      %s96 = ssub.s32 %s27, %s39
      %s97 = ssub.s32 %s28, %s35
      %s98 = sor.u32 %s96, %s97
      %p99 = scmp.eq.s32.totalorder %s98, 0
      %s101 = sadd.s32 %s100, 1
      %s102 = scalar_select %p99, %s100, %s101
      %p105 = pneg %p99
      %p106 = scmp.eq.s32.totalorder %s20, 1
      %p107 = por %p105, %p106
      %p108 = scmp.ne.s32.totalorder %s100, %s103
      %p109 = scmp.eq.s32.totalorder %s20, 0
      %p110 = por %p108, %p109
      %p111 = scmp.ne.s32.totalorder %s100, %s103
      %p112 = scmp.eq.s32.totalorder %s25, 1
      %p113 = por %p111, %p112
      %p114 = scmp.ne.s32.totalorder %s103, %s104
      %p115 = scmp.eq.s32.totalorder %s25, 0
      %p116 = por %p114, %p115
      %p117 = scmp.ne.s32.totalorder %s103, %s104
      %p118 = scmp.eq.s32.totalorder %s26, 1
      %p119 = por %p117, %p118
      %p121 = scmp.ne.s32.totalorder %s104, %s120
      %p122 = scmp.eq.s32.totalorder %s26, 0
      %p123 = por %p121, %p122
      %s124 = ssub.s32 %s27, %s39
      %p125 = scmp.eq.s32.totalorder %s124, 0
      %s127 = sadd.s32 %s126, 1
      %s128 = scalar_select %p125, %s126, %s127
      %p131 = pneg %p125
      %p132 = scmp.eq.s32.totalorder %s20, 1
      %p133 = por %p131, %p132
      %p134 = scmp.ne.s32.totalorder %s126, %s129
      %p135 = scmp.eq.s32.totalorder %s20, 0
      %p136 = por %p134, %p135
      %p137 = scmp.ne.s32.totalorder %s126, %s129
      %p138 = scmp.eq.s32.totalorder %s25, 1
      %p139 = por %p137, %p138
      %p140 = scmp.ne.s32.totalorder %s129, %s130
      %p141 = scmp.eq.s32.totalorder %s25, 0
      %p142 = por %p140, %p141
      %p143 = scmp.ne.s32.totalorder %s129, %s130
      %p144 = scmp.eq.s32.totalorder %s26, 1
      %p145 = por %p143, %p144
      %p147 = scmp.ne.s32.totalorder %s130, %s146
      %p148 = scmp.eq.s32.totalorder %s26, 0
      %p149 = por %p147, %p148
      %s150 = ssub.s32 %s27, %s39
      %p151 = scmp.eq.s32.totalorder %s150, 0
      %s153 = sadd.s32 %s152, 1
      %s154 = scalar_select %p151, %s152, %s153
      %p157 = pneg %p151
      %p158 = scmp.eq.s32.totalorder %s20, 1
      %p159 = por %p157, %p158
      %p160 = scmp.ne.s32.totalorder %s152, %s155
      %p161 = scmp.eq.s32.totalorder %s20, 0
      %p162 = por %p160, %p161
      %p163 = scmp.ne.s32.totalorder %s152, %s155
      %p164 = scmp.eq.s32.totalorder %s25, 1
      %p165 = por %p163, %p164
      %p166 = scmp.ne.s32.totalorder %s155, %s156
      %p167 = scmp.eq.s32.totalorder %s25, 0
      %p168 = por %p166, %p167
      %p169 = scmp.ne.s32.totalorder %s155, %s156
      %p170 = scmp.eq.s32.totalorder %s26, 1
      %p171 = por %p169, %p170
      %p173 = scmp.ne.s32.totalorder %s156, %s172
      %p174 = scmp.eq.s32.totalorder %s26, 0
      %p175 = por %p173, %p174
      %s176 = ssub.s32 %s27, %s39
      %s177 = ssub.s32 %s28, %s35
      %s178 = sor.u32 %s176, %s177
      %p179 = scmp.eq.s32.totalorder %s178, 0
      %s181 = sadd.s32 %s180, 1
      %s182 = scalar_select %p179, %s180, %s181
      %p185 = pneg %p179
      %p186 = scmp.eq.s32.totalorder %s20, 1
      %p187 = por %p185, %p186
      %p188 = scmp.ne.s32.totalorder %s180, %s183
      %p189 = scmp.eq.s32.totalorder %s20, 0
      %p190 = por %p188, %p189
      %p191 = scmp.ne.s32.totalorder %s180, %s183
      %p192 = scmp.eq.s32.totalorder %s25, 1
      %p193 = por %p191, %p192
      %p194 = scmp.ne.s32.totalorder %s183, %s184
      %p195 = scmp.eq.s32.totalorder %s25, 0
      %p196 = por %p194, %p195
      %p197 = scmp.ne.s32.totalorder %s183, %s184
      %p198 = scmp.eq.s32.totalorder %s26, 1
      %p199 = por %p197, %p198
      %p201 = scmp.ne.s32.totalorder %s184, %s200
      %p202 = scmp.eq.s32.totalorder %s26, 0
      %p203 = por %p201, %p202
      %p204 = scmp.le.s32.totalorder 1, %s20
      %p205 = scmp.lt.s32.totalorder %s20, 3
      %p206 = pnand %p204, %p205
      %p207 = pneg %p206
      // Predicated region
      $region9: #{tpu_custom_call.1} parent=5 // pred_check
        _
      $region10: #{tpu_custom_call.1} parent=5 // pred_check_branch
        %209 = sbr.rel (%p206) target = $region12
      $region11: #{tpu_custom_call.1} parent=5 // pred_region
        %s210 = ssub.s32 %s20, 1
      $region12: #{tpu_custom_call.1} parent=5 // pred_fallthru
        _
      %p211 = scmp.lt.s32.totalorder %s20, 2
      // Predicated region
      $region13: #{tpu_custom_call.1} parent=5 // pred_check
        %p212 = pneg %p211
      $region14: #{tpu_custom_call.1} parent=5 // pred_check_branch
        %214 = sbr.rel (%p212) target = $region16
      $region15: #{tpu_custom_call.1} parent=5 // pred_region
        // Predicated region
        $region17: #{tpu_custom_call.1} parent=15 // pred_check
          %p215 = pneg %p54
        $region18: #{tpu_custom_call.1} parent=15 // pred_check_branch
          %217 = sbr.rel (%p215) target = $region20
        $region19: #{tpu_custom_call.1} parent=15 // pred_region
          %p218 = scmp.lt.s32.totalorder %s27, 1
          %s219 = scalar_select %p218, %s27, 1
          %p220 = scmp.lt.s32.totalorder %s28, 0
          %s221 = scalar_select %p220, %s28, 0
          %s222 = sadd.s32 %s221, %s219
          %s223 = smul.addr %s222, 8
          %s224 = scalar_lea.vmem %s0, %s223
        $region20: #{tpu_custom_call.1} parent=15 // pred_fallthru
          _
        // Predicated region
        $region21: #{tpu_custom_call.1} parent=15 // pred_check
          %p225 = pneg %p82
        $region22: #{tpu_custom_call.1} parent=15 // pred_check_branch
          %227 = sbr.rel (%p225) target = $region24
        $region23: #{tpu_custom_call.1} parent=15 // pred_region
          %p228 = scmp.lt.s32.totalorder %s27, 1
          %s229 = scalar_select %p228, %s27, 1
          %p230 = scmp.lt.s32.totalorder %s28, 0
          %s231 = scalar_select %p230, %s28, 0
          %s232 = sadd.s32 %s231, %s229
          %s233 = smul.addr %s232, 8
          %s234 = scalar_lea.vmem %s1, %s233
        $region24: #{tpu_custom_call.1} parent=15 // pred_fallthru
          _
        // Predicated region
        $region25: #{tpu_custom_call.1} parent=15 // pred_check
          %p235 = pneg %p110
        $region26: #{tpu_custom_call.1} parent=15 // pred_check_branch
          %237 = sbr.rel (%p235) target = $region28
        $region27: #{tpu_custom_call.1} parent=15 // pred_region
          %s238 = sand.u32 %s100, 1
          %s239 = scalar_lea.sflag [#allocation3], %s238
          %s240 = sand.u32 %s100, 1
          %s241 = smul.addr %s240, 8
          %s242 = scalar_lea.vmem [#allocation2], %s241
          %s244 = ssub.s32 128, 128
          %245 = vsyncadd %s239, %s244
          %s246 = sadd.s32 %s28, %s27
          %s247 = smul.addr %s246, 128
          %s248 = scalar_lea.hbm %s2, %s247
          %s250 = sshll.u32 %s242, 4
          %s251 = int_to_ptr.vmem [resolvable:$true] %s250
          %253 = dma.hbm_to_vmem [thread:$0]  %s248, 128, %s251, %s239
        $region28: #{tpu_custom_call.1} parent=15 // pred_fallthru
          _
        // Predicated region
        $region29: #{tpu_custom_call.1} parent=15 // pred_check
          %p254 = pneg %p136
        $region30: #{tpu_custom_call.1} parent=15 // pred_check_branch
          %256 = sbr.rel (%p254) target = $region32
        $region31: #{tpu_custom_call.1} parent=15 // pred_region
          %s257 = sand.u32 %s20, 1
          %s258 = scalar_lea.sflag [#allocation6], %s257
          %s259 = sand.u32 %s126, 1
          %s260 = smul.addr %s259, 16
          %s261 = scalar_lea.vmem [#allocation5], %s260
          %s263 = ssub.s32 256, 256
          %264 = vsyncadd %s258, %s263
          %s265 = smul.addr %s27, 2
          %s266 = smul.addr %s265, 128
          %s267 = scalar_lea.hbm %s3, %s266
          %s268 = sshll.u32 %s261, 4
          %s269 = int_to_ptr.vmem [resolvable:$true] %s268
          %274 = dma.hbm_to_vmem [thread:$0]  %s267, 256, %s269, %s258, 128, 128, 8
        $region32: #{tpu_custom_call.1} parent=15 // pred_fallthru
          _
        // Predicated region
        $region33: #{tpu_custom_call.1} parent=15 // pred_check
          %p275 = pneg %p162
        $region34: #{tpu_custom_call.1} parent=15 // pred_check_branch
          %277 = sbr.rel (%p275) target = $region36
        $region35: #{tpu_custom_call.1} parent=15 // pred_region
          %s278 = sand.u32 %s20, 1
          %s279 = scalar_lea.sflag [#allocation6], %s278
          %s280 = sand.u32 %s152, 1
          %s281 = smul.addr %s280, 144
          %s282 = scalar_lea.vmem [#allocation7], %s281
          %s284 = ssub.s32 2304, 2304
          %285 = vsyncadd %s279, %s284
          %s286 = smul.addr %s27, 18
          %s287 = smul.addr %s286, 128
          %s288 = scalar_lea.hbm %s4, %s287
          %s289 = sshll.u32 %s282, 4
          %s290 = int_to_ptr.vmem [resolvable:$true] %s289
          %295 = dma.hbm_to_vmem [thread:$0]  %s288, 2304, %s290, %s279, 128, 128, 8
        $region36: #{tpu_custom_call.1} parent=15 // pred_fallthru
          _
      $region16: #{tpu_custom_call.1} parent=5 // pred_fallthru
        _
      %p296 = scmp.le.s32.totalorder 1, %s20
      %p297 = scmp.lt.s32.totalorder %s20, 3
      %p298 = pnand %p296, %p297
      %p299 = pneg %p298
      // Predicated region
      $region37: #{tpu_custom_call.1} parent=5 // pred_check
        _
      $region38: #{tpu_custom_call.1} parent=5 // pred_check_branch
        %301 = sbr.rel (%p298) target = $region40
      $region39: #{tpu_custom_call.1} parent=5 // pred_region
        %s302 = ssub.s32 %s20, 1
        %s303 = sand.u32 %s103, 1
        %s304 = scalar_lea.sflag [#allocation3], %s303
        %s305 = sand.u32 %s103, 1
        %s306 = smul.addr %s305, 8
        %s307 = scalar_lea.vmem [#allocation2], %s306
        // Predicated region
        $region41: #{tpu_custom_call.1} parent=39 // pred_check
          %p308 = pneg %p116
        $region42: #{tpu_custom_call.1} parent=39 // pred_check_branch
          %310 = sbr.rel (%p308) target = $region44
        $region43: #{tpu_custom_call.1} parent=39 // pred_region
          %311 = dma.done %s304, 128
        $region44: #{tpu_custom_call.1} parent=39 // pred_fallthru
          _
        %s312 = sand.u32 %s25, 1
        %s313 = scalar_lea.sflag [#allocation6], %s312
        %s314 = sand.u32 %s129, 1
        %s315 = smul.addr %s314, 16
        %s316 = scalar_lea.vmem [#allocation5], %s315
        // Predicated region
        $region45: #{tpu_custom_call.1} parent=39 // pred_check
          %p317 = pneg %p142
        $region46: #{tpu_custom_call.1} parent=39 // pred_check_branch
          %319 = sbr.rel (%p317) target = $region48
        $region47: #{tpu_custom_call.1} parent=39 // pred_region
          %320 = dma.done %s313, 256
        $region48: #{tpu_custom_call.1} parent=39 // pred_fallthru
          _
        %s321 = sand.u32 %s25, 1
        %s322 = scalar_lea.sflag [#allocation6], %s321
        %s323 = sand.u32 %s155, 1
        %s324 = smul.addr %s323, 144
        %s325 = scalar_lea.vmem [#allocation7], %s324
        // Predicated region
        $region49: #{tpu_custom_call.1} parent=39 // pred_check
          %p326 = pneg %p168
        $region50: #{tpu_custom_call.1} parent=39 // pred_check_branch
          %328 = sbr.rel (%p326) target = $region52
        $region51: #{tpu_custom_call.1} parent=39 // pred_region
          %329 = dma.done %s322, 2304
        $region52: #{tpu_custom_call.1} parent=39 // pred_fallthru
          _
        %p330 = scmp.lt.s32.totalorder %s29, 1
        %s331 = scalar_select %p330, %s29, 1
        %p332 = scmp.lt.s32.totalorder %s30, 0
        %s333 = scalar_select %p332, %s30, 0
        %s334 = sadd.s32 %s333, %s331
        %s335 = smul.addr %s334, 8
        %s336 = scalar_lea.vmem %s0, %s335
        %p337 = pneg %p60
        %p338 = pneg %p57
        %p339 = scmp.lt.s32.totalorder %s29, 1
        %s340 = scalar_select %p339, %s29, 1
        %p341 = scmp.lt.s32.totalorder %s30, 0
        %s342 = scalar_select %p341, %s30, 0
        %s343 = sadd.s32 %s342, %s340
        %s344 = smul.addr %s343, 8
        %s345 = scalar_lea.vmem %s1, %s344
        %p346 = pneg %p88
        %p347 = pneg %p85
        %s348 = sand.u32 %s103, 1
        %s349 = scalar_lea.sflag [#allocation3], %s348
        %s350 = sand.u32 %s103, 1
        %s351 = smul.addr %s350, 8
        %s352 = scalar_lea.vmem [#allocation2], %s351
        %p353 = pneg %p116
        %p354 = pneg %p113
        %s355 = sand.u32 %s25, 1
        %s356 = scalar_lea.sflag [#allocation6], %s355
        %s357 = sand.u32 %s129, 1
        %s358 = smul.addr %s357, 16
        %s359 = scalar_lea.vmem [#allocation5], %s358
        %p360 = pneg %p142
        %p361 = pneg %p139
        %s362 = sand.u32 %s25, 1
        %s363 = scalar_lea.sflag [#allocation6], %s362
        %s364 = sand.u32 %s155, 1
        %s365 = smul.addr %s364, 144
        %s366 = scalar_lea.vmem [#allocation7], %s365
        %p367 = pneg %p168
        %p368 = pneg %p165
        %p369 = pneg %p196
        %p370 = pneg %p193
        %s371 = sand.u32 %s183, 1
        %s372 = scalar_lea.sflag [#allocation4], %s371
        %s373 = sand.u32 %s183, 1
        %s374 = smul.addr %s373, 8
        %s375 = scalar_lea.vmem [#allocation8], %s374
        %p376 = scmp.lt.s32.totalorder %s29, 1
        %s377 = scalar_select %p376, %s29, 1
        %p378 = scmp.lt.s32.totalorder %s30, 0
        %s379 = scalar_select %p378, %s30, 0
        %s380 = sadd.s32 %s379, %s377
        %s381 = smul.addr %s380, 8
        %s382 = scalar_lea.vmem %s0, %s381
        %p383 = scmp.lt.s32.totalorder %s29, 1
        %s384 = scalar_select %p383, %s29, 1
        %p385 = scmp.lt.s32.totalorder %s30, 0
        %s386 = scalar_select %p385, %s30, 0
        %s387 = sadd.s32 %s386, %s384
        %s388 = smul.addr %s387, 8
        %s389 = scalar_lea.vmem %s1, %s388
        %v390 = vld [vmem:[%s382] sm:$0xff]
        %vm391 = vcmask 64512
        %v392 = vsel %vm391, %v390, -inf
        %393 = vmax.xlane.f32.xlu0 %v392
        %v394 = vpop.xlane.xlu0 %393
        %v395 = vsub.f32 %v390, %v394
        %v396 = vmul.f32 %v395, 1.442695
        %v397 = vpow.pop %v396
        %v398 = vsel %vm391, %v397, 0.0
        %399 = vadd.xlane.f32.xlu0 %v398
        %v400 = vpop.xlane.xlu0 %399
        %v401 = vrcp.pop %v400
        %v402 = vmul.f32 %v397, %v401
        %v403 = vsub.f32 0.0, %v402
        %v404 = vld [vmem:[%s316] sm:$0xff]
        %v405 = vld [vmem:[%s389] sm:$0xff]
        %v406 = vld [vmem:[%s316 + $0x8] sm:$0x1]
        %v407 = vld [vmem:[%s316 + $0x9] sm:$0x1]
        %v408 = vld [vmem:[%s316 + $0xa] sm:$0x1]
        %v409 = vld [vmem:[%s316 + $0xb] sm:$0x1]
        %411 = vset.pattern.permute.xlu0 0
        %412 = vperm.xlu0 %411, %v405
        %v413 = vpop.permute.xlu0 %412
        %v415 = vlaneseq
        %v416 = vshrl.u32 %v415, 7
        %v417 = vsub.s32 0, %v416
        %v418 = vrot.slane %v406, %v417
        %v419 = vsub.f32 %v413, %v418
        %v420 = vand.u32 2147483647, %v419
        %421 = vset.pattern.permute.xlu0 1
        %422 = vperm.xlu0 %421, %v405
        %v423 = vpop.permute.xlu0 %422
        %v425 = vlaneseq
        %v426 = vshrl.u32 %v425, 7
        %v427 = vsub.s32 0, %v426
        %v428 = vrot.slane %v407, %v427
        %v429 = vsub.f32 %v423, %v428
        %v430 = vand.u32 2147483647, %v429
        %v431 = vadd.f32 %v420, %v430
        %432 = vset.pattern.permute.xlu0 2
        %433 = vperm.xlu0 %432, %v405
        %v434 = vpop.permute.xlu0 %433
        %v436 = vlaneseq
        %v437 = vshrl.u32 %v436, 7
        %v438 = vsub.s32 0, %v437
        %v439 = vrot.slane %v408, %v438
        %v440 = vsub.f32 %v434, %v439
        %v441 = vand.u32 2147483647, %v440
        %v442 = vadd.f32 %v431, %v441
        %443 = vset.pattern.permute.xlu0 3
        %444 = vperm.xlu0 %443, %v405
        %v445 = vpop.permute.xlu0 %444
        %v447 = vlaneseq
        %v448 = vshrl.u32 %v447, 7
        %v449 = vsub.s32 0, %v448
        %v450 = vrot.slane %v409, %v449
        %v451 = vsub.f32 %v445, %v450
        %v452 = vand.u32 2147483647, %v451
        %v453 = vadd.f32 %v442, %v452
        %v455 = vsel %vm391, %v403, 0
        %457 = vmatprep.subr.mxu0 0.0
        %458 = vmatpush1.msra.mxu0 0.0
        %459 = vmatprep.subr.mxu0 0.0
        %460 = vmatpush1.msra.mxu0 0.0
        %461 = vmatprep.subr.mxu0 0.0
        %462 = vmatpush1.msra.mxu0 0.0
        %463 = vmatprep.subr.mxu0 0.0
        %464 = vmatpush1.msra.mxu0 0.0
        %465 = vmatprep.subr.mxu0 0.0
        %466 = vmatpush1.msra.mxu0 0.0
        %467 = vmatprep.subr.mxu0 0.0
        %468 = vmatpush1.msra.mxu0 0.0
        %469 = vmatprep.subr.mxu0 0.0
        %470 = vmatpush1.msra.mxu0 0.0
        %471 = vmatprep.subr.mxu0 0.0
        %472 = vmatpush1.msra.mxu0 0.0
        %473 = vmatprep.subr.mxu0 0.0
        %474 = vmatpush1.msra.mxu0 0.0
        %475 = vmatprep.subr.mxu0 0.0
        %476 = vmatpush1.msra.mxu0 0.0
        %477 = vmatprep.subr.mxu0 0.0
        %478 = vmatpush1.msra.mxu0 0.0
        %479 = vmatprep.subr.mxu0 0.0
        %480 = vmatpush1.msra.mxu0 0.0
        %481 = vmatprep.subr.mxu0 0.0
        %482 = vmatpush1.msra.mxu0 0.0
        %483 = vmatprep.subr.mxu0 0.0
        %484 = vmatpush1.msra.mxu0 0.0
        %485 = vmatprep.subr.mxu0 0.0
        %486 = vmatpush1.msra.mxu0 0.0
        %487 = vmatprep.subr.mxu0 0.0
        %488 = vmatpush1.msra.mxu0 %v404
        %489 = vmatprep.subr.mxu0 0.0
        %490 = vmatpush2.msra.mxu0 0.0
        %491 = vmatprep.subr.mxu0 0.0
        %492 = vmatpush2.msra.mxu0 0.0
        %493 = vmatprep.subr.mxu0 0.0
        %494 = vmatpush2.msra.mxu0 0.0
        %495 = vmatprep.subr.mxu0 0.0
        %496 = vmatpush2.msra.mxu0 0.0
        %497 = vmatprep.subr.mxu0 0.0
        %498 = vmatpush2.msra.mxu0 0.0
        %499 = vmatprep.subr.mxu0 0.0
        %500 = vmatpush2.msra.mxu0 0.0
        %501 = vmatprep.subr.mxu0 0.0
        %502 = vmatpush2.msra.mxu0 0.0
        %503 = vmatprep.subr.mxu0 0.0
        %504 = vmatpush2.msra.mxu0 0.0
        %505 = vmatprep.subr.mxu0 0.0
        %506 = vmatpush2.msra.mxu0 0.0
        %507 = vmatprep.subr.mxu0 0.0
        %508 = vmatpush2.msra.mxu0 0.0
        %509 = vmatprep.subr.mxu0 0.0
        %510 = vmatpush2.msra.mxu0 0.0
        %511 = vmatprep.subr.mxu0 0.0
        %512 = vmatpush2.msra.mxu0 0.0
        %513 = vmatprep.subr.mxu0 0.0
        %514 = vmatpush2.msra.mxu0 0.0
        %515 = vmatprep.subr.mxu0 0.0
        %516 = vmatpush2.msra.mxu0 0.0
        %517 = vmatprep.subr.mxu0 0.0
        %518 = vmatpush2.msra.mxu0 0.0
        %519 = vmatprep.subr.mxu0 0.0
        %520 = vmatpush2.msra.mxu0 0.0
        %521 = vmatprep.mubr.f32.mxu0 0.0
        %522 = vmatmul.mubr.f32.gmra.mxu0 %v455
        %v523 = vpop.f32.mrf.mxu0
        %v524 = vadd.f32 %v453, %v523
        %v525 = vpop.f32.mrf.mxu0
        %526 = vdwg.mxu0
        %v527 = vmul.f32 %v405, 0.5
        %529 = vrot.lane.b32.xlu0 %v527, 126
        %v530 = vpop.permute.xlu0 %529
        %v532 = vsub.f32 %v405, %v530
        %v533 = vadd.f32 %v405, %v530
        %v534 = vmul.f32 %v408, 0.5
        %v535 = vsub.f32 %v406, %v534
        %v536 = vmul.f32 %v409, 0.5
        %v537 = vsub.f32 %v407, %v536
        %v538 = vadd.f32 %v406, %v534
        %v539 = vadd.f32 %v407, %v536
        %v540 = vsub.f32 %v533, %v532
        %542 = vrot.lane.b32.xlu0 %v540, 127
        %v543 = vpop.permute.xlu0 %542
        %v545 = vmul.f32 %v540, %v543
        %v546 = vsub.f32 %v538, %v535
        %v547 = vsub.f32 %v539, %v537
        %v548 = vmul.f32 %v546, %v547
        %550 = vset.pattern.permute.xlu0 0
        %551 = vperm.xlu0 %550, %v533
        %v552 = vpop.permute.xlu0 %551
        %v554 = vlaneseq
        %v555 = vshrl.u32 %v554, 7
        %v556 = vsub.s32 0, %v555
        %v557 = vrot.slane %v538, %v556
        %v558 = vmin.f32 %v552, %v557
        %560 = vset.pattern.permute.xlu0 0
        %561 = vperm.xlu0 %560, %v532
        %v562 = vpop.permute.xlu0 %561
        %v564 = vlaneseq
        %v565 = vshrl.u32 %v564, 7
        %v566 = vsub.s32 0, %v565
        %v567 = vrot.slane %v535, %v566
        %v568 = vmax.f32 %v562, %v567
        %v569 = vsub.f32 %v558, %v568
        %v570 = vmax.f32 %v569, 0.0
        %571 = vset.pattern.permute.xlu0 1
        %572 = vperm.xlu0 %571, %v533
        %v573 = vpop.permute.xlu0 %572
        %v575 = vlaneseq
        %v576 = vshrl.u32 %v575, 7
        %v577 = vsub.s32 0, %v576
        %v578 = vrot.slane %v539, %v577
        %v579 = vmin.f32 %v573, %v578
        %580 = vset.pattern.permute.xlu0 1
        %581 = vperm.xlu0 %580, %v532
        %v582 = vpop.permute.xlu0 %581
        %v584 = vlaneseq
        %v585 = vshrl.u32 %v584, 7
        %v586 = vsub.s32 0, %v585
        %v587 = vrot.slane %v537, %v586
        %v588 = vmax.f32 %v582, %v587
        %v589 = vsub.f32 %v579, %v588
        %v590 = vmax.f32 %v589, 0.0
        %v591 = vmul.f32 %v570, %v590
        %593 = vset.pattern.permute.xlu0 0
        %594 = vperm.xlu0 %593, %v545
        %v595 = vpop.permute.xlu0 %594
        %v597 = vlaneseq
        %v598 = vshrl.u32 %v597, 7
        %v599 = vsub.s32 0, %v598
        %v600 = vrot.slane %v548, %v599
        %v601 = vadd.f32 %v595, %v600
        %v602 = vsub.f32 %v601, %v591
        %v603 = vmax.f32 %v552, %v557
        %v604 = vmin.f32 %v562, %v567
        %v605 = vsub.f32 %v603, %v604
        %v606 = vmax.f32 %v573, %v578
        %v607 = vmin.f32 %v582, %v587
        %v608 = vsub.f32 %v606, %v607
        %v609 = vmul.f32 %v605, %v608
        %v610 = vadd.f32 %v602, 1e-07
        %v611 = vrcp.pop %v610
        %v612 = vmul.f32 %v591, %v611
        %v613 = vsub.f32 %v609, %v602
        %v614 = vadd.f32 %v609, 1e-07
        %v615 = vrcp.pop %v614
        %v616 = vmul.f32 %v613, %v615
        %v617 = vsub.f32 %v612, %v616
        %v618 = vsub.f32 %v524, %v617
        %v619 = vld [vmem:[%s307] sm:$0xff]
        %v620 = vld [vmem:[%s325] sm:$0x1]
        %v621 = vld [vmem:[%s325 + $0x18] sm:$0x1]
        %v622 = vld [vmem:[%s325 + $0x30] sm:$0x1]
        %v623 = vld [vmem:[%s325 + $0x48] sm:$0x1]
        %v624 = vld [vmem:[%s325 + $0x60] sm:$0x1]
        %v625 = vld [vmem:[%s325 + $0x78] sm:$0x1]
        %627 = vset.pattern.permute.xlu0 0
        %628 = vperm.xlu0 %627, %v619
        %v629 = vpop.permute.xlu0 %628
        %v631 = vlaneseq
        %v632 = vshrl.u32 %v631, 7
        %v633 = vsub.s32 0, %v632
        %v634 = vrot.slane %v620, %v633
        %v635 = vsub.f32 %v629, %v634
        %636 = vset.pattern.permute.xlu0 24
        %637 = vperm.xlu0 %636, %v619
        %v638 = vpop.permute.xlu0 %637
        %v640 = vlaneseq
        %v641 = vshrl.u32 %v640, 7
        %v642 = vsub.s32 0, %v641
        %v643 = vrot.slane %v621, %v642
        %v644 = vsub.f32 %v638, %v643
        %v645 = vand.u32 2147483647, %v635
        %v646 = vand.u32 2147483647, %v644
        %v647 = vadd.f32 %v645, %v646
        %v648 = vlaneseq
        %v649 = vshrl.u32 %v648, 7
        %v650 = vsub.s32 0, %v649
        %v651 = vrot.slane %v622, %v650
        %v652 = vmul.f32 %v651, %v647
        %v653 = vadd.f32 %v652, 0.0
        %v654 = vmul.f32 %v635, %v635
        %v655 = vlaneseq
        %v656 = vshrl.u32 %v655, 7
        %v657 = vsub.s32 0, %v656
        %v658 = vrot.slane %v624, %v657
        %v659 = vmul.f32 %v654, %v658
        %v660 = vmul.f32 %v644, %v644
        %v661 = vlaneseq
        %v662 = vshrl.u32 %v661, 7
        %v663 = vsub.s32 0, %v662
        %v664 = vrot.slane %v625, %v663
        %v665 = vmul.f32 %v660, %v664
        %v666 = vadd.f32 %v659, %v665
        %v667 = vmul.f32 %v666, 1.442695
        %v668 = vpow.pop %v667
        %v669 = vlaneseq
        %v670 = vshrl.u32 %v669, 7
        %v671 = vsub.s32 0, %v670
        %v672 = vrot.slane %v623, %v671
        %v673 = vmul.f32 %v672, %v668
        %v674 = vadd.f32 %v673, 0.0
        %v675 = vld [vmem:[%s325 + $0x1] sm:$0x1]
        %v676 = vld [vmem:[%s325 + $0x19] sm:$0x1]
        %v677 = vld [vmem:[%s325 + $0x31] sm:$0x1]
        %v678 = vld [vmem:[%s325 + $0x49] sm:$0x1]
        %v679 = vld [vmem:[%s325 + $0x61] sm:$0x1]
        %v680 = vld [vmem:[%s325 + $0x79] sm:$0x1]
        %681 = vset.pattern.permute.xlu0 1
        %682 = vperm.xlu0 %681, %v619
        %v683 = vpop.permute.xlu0 %682
        %v685 = vlaneseq
        %v686 = vshrl.u32 %v685, 7
        %v687 = vsub.s32 0, %v686
        %v688 = vrot.slane %v675, %v687
        %v689 = vsub.f32 %v683, %v688
        %690 = vset.pattern.permute.xlu0 25
        %691 = vperm.xlu0 %690, %v619
        %v692 = vpop.permute.xlu0 %691
        %v694 = vlaneseq
        %v695 = vshrl.u32 %v694, 7
        %v696 = vsub.s32 0, %v695
        %v697 = vrot.slane %v676, %v696
        %v698 = vsub.f32 %v692, %v697
        %v699 = vand.u32 2147483647, %v689
        %v700 = vand.u32 2147483647, %v698
        %v701 = vadd.f32 %v699, %v700
        %v702 = vlaneseq
        %v703 = vshrl.u32 %v702, 7
        %v704 = vsub.s32 0, %v703
        %v705 = vrot.slane %v677, %v704
        %v706 = vmul.f32 %v705, %v701
        %v707 = vadd.f32 %v653, %v706
        %v708 = vmul.f32 %v689, %v689
        %v709 = vlaneseq
        %v710 = vshrl.u32 %v709, 7
        %v711 = vsub.s32 0, %v710
        %v712 = vrot.slane %v679, %v711
        %v713 = vmul.f32 %v708, %v712
        %v714 = vmul.f32 %v698, %v698
        %v715 = vlaneseq
        %v716 = vshrl.u32 %v715, 7
        %v717 = vsub.s32 0, %v716
        %v718 = vrot.slane %v680, %v717
        %v719 = vmul.f32 %v714, %v718
        %v720 = vadd.f32 %v713, %v719
        %v721 = vmul.f32 %v720, 1.442695
        %v722 = vpow.pop %v721
        %v723 = vlaneseq
        %v724 = vshrl.u32 %v723, 7
        %v725 = vsub.s32 0, %v724
        %v726 = vrot.slane %v678, %v725
        %v727 = vmul.f32 %v726, %v722
        %v728 = vadd.f32 %v674, %v727
        %v729 = vld [vmem:[%s325 + $0x2] sm:$0x1]
        %v730 = vld [vmem:[%s325 + $0x1a] sm:$0x1]
        %v731 = vld [vmem:[%s325 + $0x32] sm:$0x1]
        %v732 = vld [vmem:[%s325 + $0x4a] sm:$0x1]
        %v733 = vld [vmem:[%s325 + $0x62] sm:$0x1]
        %v734 = vld [vmem:[%s325 + $0x7a] sm:$0x1]
        %735 = vset.pattern.permute.xlu0 2
        %736 = vperm.xlu0 %735, %v619
        %v737 = vpop.permute.xlu0 %736
        %v739 = vlaneseq
        %v740 = vshrl.u32 %v739, 7
        %v741 = vsub.s32 0, %v740
        %v742 = vrot.slane %v729, %v741
        %v743 = vsub.f32 %v737, %v742
        %744 = vset.pattern.permute.xlu0 26
        %745 = vperm.xlu0 %744, %v619
        %v746 = vpop.permute.xlu0 %745
        %v748 = vlaneseq
        %v749 = vshrl.u32 %v748, 7
        %v750 = vsub.s32 0, %v749
        %v751 = vrot.slane %v730, %v750
        %v752 = vsub.f32 %v746, %v751
        %v753 = vand.u32 2147483647, %v743
        %v754 = vand.u32 2147483647, %v752
        %v755 = vadd.f32 %v753, %v754
        %v756 = vlaneseq
        %v757 = vshrl.u32 %v756, 7
        %v758 = vsub.s32 0, %v757
        %v759 = vrot.slane %v731, %v758
        %v760 = vmul.f32 %v759, %v755
        %v761 = vadd.f32 %v707, %v760
        %v762 = vmul.f32 %v743, %v743
        %v763 = vlaneseq
        %v764 = vshrl.u32 %v763, 7
        %v765 = vsub.s32 0, %v764
        %v766 = vrot.slane %v733, %v765
        %v767 = vmul.f32 %v762, %v766
        %v768 = vmul.f32 %v752, %v752
        %v769 = vlaneseq
        %v770 = vshrl.u32 %v769, 7
        %v771 = vsub.s32 0, %v770
        %v772 = vrot.slane %v734, %v771
        %v773 = vmul.f32 %v768, %v772
        %v774 = vadd.f32 %v767, %v773
        %v775 = vmul.f32 %v774, 1.442695
        %v776 = vpow.pop %v775
        %v777 = vlaneseq
        %v778 = vshrl.u32 %v777, 7
        %v779 = vsub.s32 0, %v778
        %v780 = vrot.slane %v732, %v779
        %v781 = vmul.f32 %v780, %v776
        %v782 = vadd.f32 %v728, %v781
        %v783 = vld [vmem:[%s325 + $0x3] sm:$0x1]
        %v784 = vld [vmem:[%s325 + $0x1b] sm:$0x1]
        %v785 = vld [vmem:[%s325 + $0x33] sm:$0x1]
        %v786 = vld [vmem:[%s325 + $0x4b] sm:$0x1]
        %v787 = vld [vmem:[%s325 + $0x63] sm:$0x1]
        %v788 = vld [vmem:[%s325 + $0x7b] sm:$0x1]
        %789 = vset.pattern.permute.xlu0 3
        %790 = vperm.xlu0 %789, %v619
        %v791 = vpop.permute.xlu0 %790
        %v793 = vlaneseq
        %v794 = vshrl.u32 %v793, 7
        %v795 = vsub.s32 0, %v794
        %v796 = vrot.slane %v783, %v795
        %v797 = vsub.f32 %v791, %v796
        %798 = vset.pattern.permute.xlu0 27
        %799 = vperm.xlu0 %798, %v619
        %v800 = vpop.permute.xlu0 %799
        %v802 = vlaneseq
        %v803 = vshrl.u32 %v802, 7
        %v804 = vsub.s32 0, %v803
        %v805 = vrot.slane %v784, %v804
        %v806 = vsub.f32 %v800, %v805
        %v807 = vand.u32 2147483647, %v797
        %v808 = vand.u32 2147483647, %v806
        %v809 = vadd.f32 %v807, %v808
        %v810 = vlaneseq
        %v811 = vshrl.u32 %v810, 7
        %v812 = vsub.s32 0, %v811
        %v813 = vrot.slane %v785, %v812
        %v814 = vmul.f32 %v813, %v809
        %v815 = vadd.f32 %v761, %v814
        %v816 = vmul.f32 %v797, %v797
        %v817 = vlaneseq
        %v818 = vshrl.u32 %v817, 7
        %v819 = vsub.s32 0, %v818
        %v820 = vrot.slane %v787, %v819
        %v821 = vmul.f32 %v816, %v820
        %v822 = vmul.f32 %v806, %v806
        %v823 = vlaneseq
        %v824 = vshrl.u32 %v823, 7
        %v825 = vsub.s32 0, %v824
        %v826 = vrot.slane %v788, %v825
        %v827 = vmul.f32 %v822, %v826
        %v828 = vadd.f32 %v821, %v827
        %v829 = vmul.f32 %v828, 1.442695
        %v830 = vpow.pop %v829
        %v831 = vlaneseq
        %v832 = vshrl.u32 %v831, 7
        %v833 = vsub.s32 0, %v832
        %v834 = vrot.slane %v786, %v833
        %v835 = vmul.f32 %v834, %v830
        %v836 = vadd.f32 %v782, %v835
        %v837 = vld [vmem:[%s325 + $0x4] sm:$0x1]
        %v838 = vld [vmem:[%s325 + $0x1c] sm:$0x1]
        %v839 = vld [vmem:[%s325 + $0x34] sm:$0x1]
        %v840 = vld [vmem:[%s325 + $0x4c] sm:$0x1]
        %v841 = vld [vmem:[%s325 + $0x64] sm:$0x1]
        %v842 = vld [vmem:[%s325 + $0x7c] sm:$0x1]
        %843 = vset.pattern.permute.xlu0 4
        %844 = vperm.xlu0 %843, %v619
        %v845 = vpop.permute.xlu0 %844
        %v847 = vlaneseq
        %v848 = vshrl.u32 %v847, 7
        %v849 = vsub.s32 0, %v848
        %v850 = vrot.slane %v837, %v849
        %v851 = vsub.f32 %v845, %v850
        %852 = vset.pattern.permute.xlu0 28
        %853 = vperm.xlu0 %852, %v619
        %v854 = vpop.permute.xlu0 %853
        %v856 = vlaneseq
        %v857 = vshrl.u32 %v856, 7
        %v858 = vsub.s32 0, %v857
        %v859 = vrot.slane %v838, %v858
        %v860 = vsub.f32 %v854, %v859
        %v861 = vand.u32 2147483647, %v851
        %v862 = vand.u32 2147483647, %v860
        %v863 = vadd.f32 %v861, %v862
        %v864 = vlaneseq
        %v865 = vshrl.u32 %v864, 7
        %v866 = vsub.s32 0, %v865
        %v867 = vrot.slane %v839, %v866
        %v868 = vmul.f32 %v867, %v863
        %v869 = vadd.f32 %v815, %v868
        %v870 = vmul.f32 %v851, %v851
        %v871 = vlaneseq
        %v872 = vshrl.u32 %v871, 7
        %v873 = vsub.s32 0, %v872
        %v874 = vrot.slane %v841, %v873
        %v875 = vmul.f32 %v870, %v874
        %v876 = vmul.f32 %v860, %v860
        %v877 = vlaneseq
        %v878 = vshrl.u32 %v877, 7
        %v879 = vsub.s32 0, %v878
        %v880 = vrot.slane %v842, %v879
        %v881 = vmul.f32 %v876, %v880
        %v882 = vadd.f32 %v875, %v881
        %v883 = vmul.f32 %v882, 1.442695
        %v884 = vpow.pop %v883
        %v885 = vlaneseq
        %v886 = vshrl.u32 %v885, 7
        %v887 = vsub.s32 0, %v886
        %v888 = vrot.slane %v840, %v887
        %v889 = vmul.f32 %v888, %v884
        %v890 = vadd.f32 %v836, %v889
        %v891 = vld [vmem:[%s325 + $0x5] sm:$0x1]
        %v892 = vld [vmem:[%s325 + $0x1d] sm:$0x1]
        %v893 = vld [vmem:[%s325 + $0x35] sm:$0x1]
        %v894 = vld [vmem:[%s325 + $0x4d] sm:$0x1]
        %v895 = vld [vmem:[%s325 + $0x65] sm:$0x1]
        %v896 = vld [vmem:[%s325 + $0x7d] sm:$0x1]
        %897 = vset.pattern.permute.xlu0 5
        %898 = vperm.xlu0 %897, %v619
        %v899 = vpop.permute.xlu0 %898
        %v901 = vlaneseq
        %v902 = vshrl.u32 %v901, 7
        %v903 = vsub.s32 0, %v902
        %v904 = vrot.slane %v891, %v903
        %v905 = vsub.f32 %v899, %v904
        %906 = vset.pattern.permute.xlu0 29
        %907 = vperm.xlu0 %906, %v619
        %v908 = vpop.permute.xlu0 %907
        %v910 = vlaneseq
        %v911 = vshrl.u32 %v910, 7
        %v912 = vsub.s32 0, %v911
        %v913 = vrot.slane %v892, %v912
        %v914 = vsub.f32 %v908, %v913
        %v915 = vand.u32 2147483647, %v905
        %v916 = vand.u32 2147483647, %v914
        %v917 = vadd.f32 %v915, %v916
        %v918 = vlaneseq
        %v919 = vshrl.u32 %v918, 7
        %v920 = vsub.s32 0, %v919
        %v921 = vrot.slane %v893, %v920
        %v922 = vmul.f32 %v921, %v917
        %v923 = vadd.f32 %v869, %v922
        %v924 = vmul.f32 %v905, %v905
        %v925 = vlaneseq
        %v926 = vshrl.u32 %v925, 7
        %v927 = vsub.s32 0, %v926
        %v928 = vrot.slane %v895, %v927
        %v929 = vmul.f32 %v924, %v928
        %v930 = vmul.f32 %v914, %v914
        %v931 = vlaneseq
        %v932 = vshrl.u32 %v931, 7
        %v933 = vsub.s32 0, %v932
        %v934 = vrot.slane %v896, %v933
        %v935 = vmul.f32 %v930, %v934
        %v936 = vadd.f32 %v929, %v935
        %v937 = vmul.f32 %v936, 1.442695
        %v938 = vpow.pop %v937
        %v939 = vlaneseq
        %v940 = vshrl.u32 %v939, 7
        %v941 = vsub.s32 0, %v940
        %v942 = vrot.slane %v894, %v941
        %v943 = vmul.f32 %v942, %v938
        %v944 = vadd.f32 %v890, %v943
        %v945 = vld [vmem:[%s325 + $0x6] sm:$0x1]
        %v946 = vld [vmem:[%s325 + $0x1e] sm:$0x1]
        %v947 = vld [vmem:[%s325 + $0x36] sm:$0x1]
        %v948 = vld [vmem:[%s325 + $0x4e] sm:$0x1]
        %v949 = vld [vmem:[%s325 + $0x66] sm:$0x1]
        %v950 = vld [vmem:[%s325 + $0x7e] sm:$0x1]
        %951 = vset.pattern.permute.xlu0 6
        %952 = vperm.xlu0 %951, %v619
        %v953 = vpop.permute.xlu0 %952
        %v955 = vlaneseq
        %v956 = vshrl.u32 %v955, 7
        %v957 = vsub.s32 0, %v956
        %v958 = vrot.slane %v945, %v957
        %v959 = vsub.f32 %v953, %v958
        %960 = vset.pattern.permute.xlu0 30
        %961 = vperm.xlu0 %960, %v619
        %v962 = vpop.permute.xlu0 %961
        %v964 = vlaneseq
        %v965 = vshrl.u32 %v964, 7
        %v966 = vsub.s32 0, %v965
        %v967 = vrot.slane %v946, %v966
        %v968 = vsub.f32 %v962, %v967
        %v969 = vand.u32 2147483647, %v959
        %v970 = vand.u32 2147483647, %v968
        %v971 = vadd.f32 %v969, %v970
        %v972 = vlaneseq
        %v973 = vshrl.u32 %v972, 7
        %v974 = vsub.s32 0, %v973
        %v975 = vrot.slane %v947, %v974
        %v976 = vmul.f32 %v975, %v971
        %v977 = vadd.f32 %v923, %v976
        %v978 = vmul.f32 %v959, %v959
        %v979 = vlaneseq
        %v980 = vshrl.u32 %v979, 7
        %v981 = vsub.s32 0, %v980
        %v982 = vrot.slane %v949, %v981
        %v983 = vmul.f32 %v978, %v982
        %v984 = vmul.f32 %v968, %v968
        %v985 = vlaneseq
        %v986 = vshrl.u32 %v985, 7
        %v987 = vsub.s32 0, %v986
        %v988 = vrot.slane %v950, %v987
        %v989 = vmul.f32 %v984, %v988
        %v990 = vadd.f32 %v983, %v989
        %v991 = vmul.f32 %v990, 1.442695
        %v992 = vpow.pop %v991
        %v993 = vlaneseq
        %v994 = vshrl.u32 %v993, 7
        %v995 = vsub.s32 0, %v994
        %v996 = vrot.slane %v948, %v995
        %v997 = vmul.f32 %v996, %v992
        %v998 = vadd.f32 %v944, %v997
        %v999 = vld [vmem:[%s325 + $0x7] sm:$0x1]
        %v1000 = vld [vmem:[%s325 + $0x1f] sm:$0x1]
        %v1001 = vld [vmem:[%s325 + $0x37] sm:$0x1]
        %v1002 = vld [vmem:[%s325 + $0x4f] sm:$0x1]
        %v1003 = vld [vmem:[%s325 + $0x67] sm:$0x1]
        %v1004 = vld [vmem:[%s325 + $0x7f] sm:$0x1]
        %1005 = vset.pattern.permute.xlu0 7
        %1006 = vperm.xlu0 %1005, %v619
        %v1007 = vpop.permute.xlu0 %1006
        %v1009 = vlaneseq
        %v1010 = vshrl.u32 %v1009, 7
        %v1011 = vsub.s32 0, %v1010
        %v1012 = vrot.slane %v999, %v1011
        %v1013 = vsub.f32 %v1007, %v1012
        %1014 = vset.pattern.permute.xlu0 31
        %1015 = vperm.xlu0 %1014, %v619
        %v1016 = vpop.permute.xlu0 %1015
        %v1018 = vlaneseq
        %v1019 = vshrl.u32 %v1018, 7
        %v1020 = vsub.s32 0, %v1019
        %v1021 = vrot.slane %v1000, %v1020
        %v1022 = vsub.f32 %v1016, %v1021
        %v1023 = vand.u32 2147483647, %v1013
        %v1024 = vand.u32 2147483647, %v1022
        %v1025 = vadd.f32 %v1023, %v1024
        %v1026 = vlaneseq
        %v1027 = vshrl.u32 %v1026, 7
        %v1028 = vsub.s32 0, %v1027
        %v1029 = vrot.slane %v1001, %v1028
        %v1030 = vmul.f32 %v1029, %v1025
        %v1031 = vadd.f32 %v977, %v1030
        %v1032 = vmul.f32 %v1013, %v1013
        %v1033 = vlaneseq
        %v1034 = vshrl.u32 %v1033, 7
        %v1035 = vsub.s32 0, %v1034
        %v1036 = vrot.slane %v1003, %v1035
        %v1037 = vmul.f32 %v1032, %v1036
        %v1038 = vmul.f32 %v1022, %v1022
        %v1039 = vlaneseq
        %v1040 = vshrl.u32 %v1039, 7
        %v1041 = vsub.s32 0, %v1040
        %v1042 = vrot.slane %v1004, %v1041
        %v1043 = vmul.f32 %v1038, %v1042
        %v1044 = vadd.f32 %v1037, %v1043
        %v1045 = vmul.f32 %v1044, 1.442695
        %v1046 = vpow.pop %v1045
        %v1047 = vlaneseq
        %v1048 = vshrl.u32 %v1047, 7
        %v1049 = vsub.s32 0, %v1048
        %v1050 = vrot.slane %v1002, %v1049
        %v1051 = vmul.f32 %v1050, %v1046
        %v1052 = vadd.f32 %v998, %v1051
        %v1053 = vld [vmem:[%s325 + $0x8] sm:$0x1]
        %v1054 = vld [vmem:[%s325 + $0x20] sm:$0x1]
        %v1055 = vld [vmem:[%s325 + $0x38] sm:$0x1]
        %v1056 = vld [vmem:[%s325 + $0x50] sm:$0x1]
        %v1057 = vld [vmem:[%s325 + $0x68] sm:$0x1]
        %v1058 = vld [vmem:[%s325 + $0x80] sm:$0x1]
        %1059 = vset.pattern.permute.xlu0 8
        %1060 = vperm.xlu0 %1059, %v619
        %v1061 = vpop.permute.xlu0 %1060
        %v1063 = vlaneseq
        %v1064 = vshrl.u32 %v1063, 7
        %v1065 = vsub.s32 0, %v1064
        %v1066 = vrot.slane %v1053, %v1065
        %v1067 = vsub.f32 %v1061, %v1066
        %1068 = vset.pattern.permute.xlu0 32
        %1069 = vperm.xlu0 %1068, %v619
        %v1070 = vpop.permute.xlu0 %1069
        %v1072 = vlaneseq
        %v1073 = vshrl.u32 %v1072, 7
        %v1074 = vsub.s32 0, %v1073
        %v1075 = vrot.slane %v1054, %v1074
        %v1076 = vsub.f32 %v1070, %v1075
        %v1077 = vand.u32 2147483647, %v1067
        %v1078 = vand.u32 2147483647, %v1076
        %v1079 = vadd.f32 %v1077, %v1078
        %v1080 = vlaneseq
        %v1081 = vshrl.u32 %v1080, 7
        %v1082 = vsub.s32 0, %v1081
        %v1083 = vrot.slane %v1055, %v1082
        %v1084 = vmul.f32 %v1083, %v1079
        %v1085 = vadd.f32 %v1031, %v1084
        %v1086 = vmul.f32 %v1067, %v1067
        %v1087 = vlaneseq
        %v1088 = vshrl.u32 %v1087, 7
        %v1089 = vsub.s32 0, %v1088
        %v1090 = vrot.slane %v1057, %v1089
        %v1091 = vmul.f32 %v1086, %v1090
        %v1092 = vmul.f32 %v1076, %v1076
        %v1093 = vlaneseq
        %v1094 = vshrl.u32 %v1093, 7
        %v1095 = vsub.s32 0, %v1094
        %v1096 = vrot.slane %v1058, %v1095
        %v1097 = vmul.f32 %v1092, %v1096
        %v1098 = vadd.f32 %v1091, %v1097
        %v1099 = vmul.f32 %v1098, 1.442695
        %v1100 = vpow.pop %v1099
        %v1101 = vlaneseq
        %v1102 = vshrl.u32 %v1101, 7
        %v1103 = vsub.s32 0, %v1102
        %v1104 = vrot.slane %v1056, %v1103
        %v1105 = vmul.f32 %v1104, %v1100
        %v1106 = vadd.f32 %v1052, %v1105
        %v1107 = vld [vmem:[%s325 + $0x9] sm:$0x1]
        %v1108 = vld [vmem:[%s325 + $0x21] sm:$0x1]
        %v1109 = vld [vmem:[%s325 + $0x39] sm:$0x1]
        %v1110 = vld [vmem:[%s325 + $0x51] sm:$0x1]
        %v1111 = vld [vmem:[%s325 + $0x69] sm:$0x1]
        %v1112 = vld [vmem:[%s325 + $0x81] sm:$0x1]
        %1113 = vset.pattern.permute.xlu0 9
        %1114 = vperm.xlu0 %1113, %v619
        %v1115 = vpop.permute.xlu0 %1114
        %v1117 = vlaneseq
        %v1118 = vshrl.u32 %v1117, 7
        %v1119 = vsub.s32 0, %v1118
        %v1120 = vrot.slane %v1107, %v1119
        %v1121 = vsub.f32 %v1115, %v1120
        %1122 = vset.pattern.permute.xlu0 33
        %1123 = vperm.xlu0 %1122, %v619
        %v1124 = vpop.permute.xlu0 %1123
        %v1126 = vlaneseq
        %v1127 = vshrl.u32 %v1126, 7
        %v1128 = vsub.s32 0, %v1127
        %v1129 = vrot.slane %v1108, %v1128
        %v1130 = vsub.f32 %v1124, %v1129
        %v1131 = vand.u32 2147483647, %v1121
        %v1132 = vand.u32 2147483647, %v1130
        %v1133 = vadd.f32 %v1131, %v1132
        %v1134 = vlaneseq
        %v1135 = vshrl.u32 %v1134, 7
        %v1136 = vsub.s32 0, %v1135
        %v1137 = vrot.slane %v1109, %v1136
        %v1138 = vmul.f32 %v1137, %v1133
        %v1139 = vadd.f32 %v1085, %v1138
        %v1140 = vmul.f32 %v1121, %v1121
        %v1141 = vlaneseq
        %v1142 = vshrl.u32 %v1141, 7
        %v1143 = vsub.s32 0, %v1142
        %v1144 = vrot.slane %v1111, %v1143
        %v1145 = vmul.f32 %v1140, %v1144
        %v1146 = vmul.f32 %v1130, %v1130
        %v1147 = vlaneseq
        %v1148 = vshrl.u32 %v1147, 7
        %v1149 = vsub.s32 0, %v1148
        %v1150 = vrot.slane %v1112, %v1149
        %v1151 = vmul.f32 %v1146, %v1150
        %v1152 = vadd.f32 %v1145, %v1151
        %v1153 = vmul.f32 %v1152, 1.442695
        %v1154 = vpow.pop %v1153
        %v1155 = vlaneseq
        %v1156 = vshrl.u32 %v1155, 7
        %v1157 = vsub.s32 0, %v1156
        %v1158 = vrot.slane %v1110, %v1157
        %v1159 = vmul.f32 %v1158, %v1154
        %v1160 = vadd.f32 %v1106, %v1159
        %v1161 = vld [vmem:[%s325 + $0xa] sm:$0x1]
        %v1162 = vld [vmem:[%s325 + $0x22] sm:$0x1]
        %v1163 = vld [vmem:[%s325 + $0x3a] sm:$0x1]
        %v1164 = vld [vmem:[%s325 + $0x52] sm:$0x1]
        %v1165 = vld [vmem:[%s325 + $0x6a] sm:$0x1]
        %v1166 = vld [vmem:[%s325 + $0x82] sm:$0x1]
        %1167 = vset.pattern.permute.xlu0 10
        %1168 = vperm.xlu0 %1167, %v619
        %v1169 = vpop.permute.xlu0 %1168
        %v1171 = vlaneseq
        %v1172 = vshrl.u32 %v1171, 7
        %v1173 = vsub.s32 0, %v1172
        %v1174 = vrot.slane %v1161, %v1173
        %v1175 = vsub.f32 %v1169, %v1174
        %1176 = vset.pattern.permute.xlu0 34
        %1177 = vperm.xlu0 %1176, %v619
        %v1178 = vpop.permute.xlu0 %1177
        %v1180 = vlaneseq
        %v1181 = vshrl.u32 %v1180, 7
        %v1182 = vsub.s32 0, %v1181
        %v1183 = vrot.slane %v1162, %v1182
        %v1184 = vsub.f32 %v1178, %v1183
        %v1185 = vand.u32 2147483647, %v1175
        %v1186 = vand.u32 2147483647, %v1184
        %v1187 = vadd.f32 %v1185, %v1186
        %v1188 = vlaneseq
        %v1189 = vshrl.u32 %v1188, 7
        %v1190 = vsub.s32 0, %v1189
        %v1191 = vrot.slane %v1163, %v1190
        %v1192 = vmul.f32 %v1191, %v1187
        %v1193 = vadd.f32 %v1139, %v1192
        %v1194 = vmul.f32 %v1175, %v1175
        %v1195 = vlaneseq
        %v1196 = vshrl.u32 %v1195, 7
        %v1197 = vsub.s32 0, %v1196
        %v1198 = vrot.slane %v1165, %v1197
        %v1199 = vmul.f32 %v1194, %v1198
        %v1200 = vmul.f32 %v1184, %v1184
        %v1201 = vlaneseq
        %v1202 = vshrl.u32 %v1201, 7
        %v1203 = vsub.s32 0, %v1202
        %v1204 = vrot.slane %v1166, %v1203
        %v1205 = vmul.f32 %v1200, %v1204
        %v1206 = vadd.f32 %v1199, %v1205
        %v1207 = vmul.f32 %v1206, 1.442695
        %v1208 = vpow.pop %v1207
        %v1209 = vlaneseq
        %v1210 = vshrl.u32 %v1209, 7
        %v1211 = vsub.s32 0, %v1210
        %v1212 = vrot.slane %v1164, %v1211
        %v1213 = vmul.f32 %v1212, %v1208
        %v1214 = vadd.f32 %v1160, %v1213
        %v1215 = vld [vmem:[%s325 + $0xb] sm:$0x1]
        %v1216 = vld [vmem:[%s325 + $0x23] sm:$0x1]
        %v1217 = vld [vmem:[%s325 + $0x3b] sm:$0x1]
        %v1218 = vld [vmem:[%s325 + $0x53] sm:$0x1]
        %v1219 = vld [vmem:[%s325 + $0x6b] sm:$0x1]
        %v1220 = vld [vmem:[%s325 + $0x83] sm:$0x1]
        %1221 = vset.pattern.permute.xlu0 11
        %1222 = vperm.xlu0 %1221, %v619
        %v1223 = vpop.permute.xlu0 %1222
        %v1225 = vlaneseq
        %v1226 = vshrl.u32 %v1225, 7
        %v1227 = vsub.s32 0, %v1226
        %v1228 = vrot.slane %v1215, %v1227
        %v1229 = vsub.f32 %v1223, %v1228
        %1230 = vset.pattern.permute.xlu0 35
        %1231 = vperm.xlu0 %1230, %v619
        %v1232 = vpop.permute.xlu0 %1231
        %v1234 = vlaneseq
        %v1235 = vshrl.u32 %v1234, 7
        %v1236 = vsub.s32 0, %v1235
        %v1237 = vrot.slane %v1216, %v1236
        %v1238 = vsub.f32 %v1232, %v1237
        %v1239 = vand.u32 2147483647, %v1229
        %v1240 = vand.u32 2147483647, %v1238
        %v1241 = vadd.f32 %v1239, %v1240
        %v1242 = vlaneseq
        %v1243 = vshrl.u32 %v1242, 7
        %v1244 = vsub.s32 0, %v1243
        %v1245 = vrot.slane %v1217, %v1244
        %v1246 = vmul.f32 %v1245, %v1241
        %v1247 = vadd.f32 %v1193, %v1246
        %v1248 = vmul.f32 %v1229, %v1229
        %v1249 = vlaneseq
        %v1250 = vshrl.u32 %v1249, 7
        %v1251 = vsub.s32 0, %v1250
        %v1252 = vrot.slane %v1219, %v1251
        %v1253 = vmul.f32 %v1248, %v1252
        %v1254 = vmul.f32 %v1238, %v1238
        %v1255 = vlaneseq
        %v1256 = vshrl.u32 %v1255, 7
        %v1257 = vsub.s32 0, %v1256
        %v1258 = vrot.slane %v1220, %v1257
        %v1259 = vmul.f32 %v1254, %v1258
        %v1260 = vadd.f32 %v1253, %v1259
        %v1261 = vmul.f32 %v1260, 1.442695
        %v1262 = vpow.pop %v1261
        %v1263 = vlaneseq
        %v1264 = vshrl.u32 %v1263, 7
        %v1265 = vsub.s32 0, %v1264
        %v1266 = vrot.slane %v1218, %v1265
        %v1267 = vmul.f32 %v1266, %v1262
        %v1268 = vadd.f32 %v1214, %v1267
        %v1269 = vld [vmem:[%s325 + $0xc] sm:$0x1]
        %v1270 = vld [vmem:[%s325 + $0x24] sm:$0x1]
        %v1271 = vld [vmem:[%s325 + $0x3c] sm:$0x1]
        %v1272 = vld [vmem:[%s325 + $0x54] sm:$0x1]
        %v1273 = vld [vmem:[%s325 + $0x6c] sm:$0x1]
        %v1274 = vld [vmem:[%s325 + $0x84] sm:$0x1]
        %1275 = vset.pattern.permute.xlu0 12
        %1276 = vperm.xlu0 %1275, %v619
        %v1277 = vpop.permute.xlu0 %1276
        %v1279 = vlaneseq
        %v1280 = vshrl.u32 %v1279, 7
        %v1281 = vsub.s32 0, %v1280
        %v1282 = vrot.slane %v1269, %v1281
        %v1283 = vsub.f32 %v1277, %v1282
        %1284 = vset.pattern.permute.xlu0 36
        %1285 = vperm.xlu0 %1284, %v619
        %v1286 = vpop.permute.xlu0 %1285
        %v1288 = vlaneseq
        %v1289 = vshrl.u32 %v1288, 7
        %v1290 = vsub.s32 0, %v1289
        %v1291 = vrot.slane %v1270, %v1290
        %v1292 = vsub.f32 %v1286, %v1291
        %v1293 = vand.u32 2147483647, %v1283
        %v1294 = vand.u32 2147483647, %v1292
        %v1295 = vadd.f32 %v1293, %v1294
        %v1296 = vlaneseq
        %v1297 = vshrl.u32 %v1296, 7
        %v1298 = vsub.s32 0, %v1297
        %v1299 = vrot.slane %v1271, %v1298
        %v1300 = vmul.f32 %v1299, %v1295
        %v1301 = vadd.f32 %v1247, %v1300
        %v1302 = vmul.f32 %v1283, %v1283
        %v1303 = vlaneseq
        %v1304 = vshrl.u32 %v1303, 7
        %v1305 = vsub.s32 0, %v1304
        %v1306 = vrot.slane %v1273, %v1305
        %v1307 = vmul.f32 %v1302, %v1306
        %v1308 = vmul.f32 %v1292, %v1292
        %v1309 = vlaneseq
        %v1310 = vshrl.u32 %v1309, 7
        %v1311 = vsub.s32 0, %v1310
        %v1312 = vrot.slane %v1274, %v1311
        %v1313 = vmul.f32 %v1308, %v1312
        %v1314 = vadd.f32 %v1307, %v1313
        %v1315 = vmul.f32 %v1314, 1.442695
        %v1316 = vpow.pop %v1315
        %v1317 = vlaneseq
        %v1318 = vshrl.u32 %v1317, 7
        %v1319 = vsub.s32 0, %v1318
        %v1320 = vrot.slane %v1272, %v1319
        %v1321 = vmul.f32 %v1320, %v1316
        %v1322 = vadd.f32 %v1268, %v1321
        %v1323 = vld [vmem:[%s325 + $0xd] sm:$0x1]
        %v1324 = vld [vmem:[%s325 + $0x25] sm:$0x1]
        %v1325 = vld [vmem:[%s325 + $0x3d] sm:$0x1]
        %v1326 = vld [vmem:[%s325 + $0x55] sm:$0x1]
        %v1327 = vld [vmem:[%s325 + $0x6d] sm:$0x1]
        %v1328 = vld [vmem:[%s325 + $0x85] sm:$0x1]
        %1329 = vset.pattern.permute.xlu0 13
        %1330 = vperm.xlu0 %1329, %v619
        %v1331 = vpop.permute.xlu0 %1330
        %v1333 = vlaneseq
        %v1334 = vshrl.u32 %v1333, 7
        %v1335 = vsub.s32 0, %v1334
        %v1336 = vrot.slane %v1323, %v1335
        %v1337 = vsub.f32 %v1331, %v1336
        %1338 = vset.pattern.permute.xlu0 37
        %1339 = vperm.xlu0 %1338, %v619
        %v1340 = vpop.permute.xlu0 %1339
        %v1342 = vlaneseq
        %v1343 = vshrl.u32 %v1342, 7
        %v1344 = vsub.s32 0, %v1343
        %v1345 = vrot.slane %v1324, %v1344
        %v1346 = vsub.f32 %v1340, %v1345
        %v1347 = vand.u32 2147483647, %v1337
        %v1348 = vand.u32 2147483647, %v1346
        %v1349 = vadd.f32 %v1347, %v1348
        %v1350 = vlaneseq
        %v1351 = vshrl.u32 %v1350, 7
        %v1352 = vsub.s32 0, %v1351
        %v1353 = vrot.slane %v1325, %v1352
        %v1354 = vmul.f32 %v1353, %v1349
        %v1355 = vadd.f32 %v1301, %v1354
        %v1356 = vmul.f32 %v1337, %v1337
        %v1357 = vlaneseq
        %v1358 = vshrl.u32 %v1357, 7
        %v1359 = vsub.s32 0, %v1358
        %v1360 = vrot.slane %v1327, %v1359
        %v1361 = vmul.f32 %v1356, %v1360
        %v1362 = vmul.f32 %v1346, %v1346
        %v1363 = vlaneseq
        %v1364 = vshrl.u32 %v1363, 7
        %v1365 = vsub.s32 0, %v1364
        %v1366 = vrot.slane %v1328, %v1365
        %v1367 = vmul.f32 %v1362, %v1366
        %v1368 = vadd.f32 %v1361, %v1367
        %v1369 = vmul.f32 %v1368, 1.442695
        %v1370 = vpow.pop %v1369
        %v1371 = vlaneseq
        %v1372 = vshrl.u32 %v1371, 7
        %v1373 = vsub.s32 0, %v1372
        %v1374 = vrot.slane %v1326, %v1373
        %v1375 = vmul.f32 %v1374, %v1370
        %v1376 = vadd.f32 %v1322, %v1375
        %v1377 = vld [vmem:[%s325 + $0xe] sm:$0x1]
        %v1378 = vld [vmem:[%s325 + $0x26] sm:$0x1]
        %v1379 = vld [vmem:[%s325 + $0x3e] sm:$0x1]
        %v1380 = vld [vmem:[%s325 + $0x56] sm:$0x1]
        %v1381 = vld [vmem:[%s325 + $0x6e] sm:$0x1]
        %v1382 = vld [vmem:[%s325 + $0x86] sm:$0x1]
        %1383 = vset.pattern.permute.xlu0 14
        %1384 = vperm.xlu0 %1383, %v619
        %v1385 = vpop.permute.xlu0 %1384
        %v1387 = vlaneseq
        %v1388 = vshrl.u32 %v1387, 7
        %v1389 = vsub.s32 0, %v1388
        %v1390 = vrot.slane %v1377, %v1389
        %v1391 = vsub.f32 %v1385, %v1390
        %1392 = vset.pattern.permute.xlu0 38
        %1393 = vperm.xlu0 %1392, %v619
        %v1394 = vpop.permute.xlu0 %1393
        %v1396 = vlaneseq
        %v1397 = vshrl.u32 %v1396, 7
        %v1398 = vsub.s32 0, %v1397
        %v1399 = vrot.slane %v1378, %v1398
        %v1400 = vsub.f32 %v1394, %v1399
        %v1401 = vand.u32 2147483647, %v1391
        %v1402 = vand.u32 2147483647, %v1400
        %v1403 = vadd.f32 %v1401, %v1402
        %v1404 = vlaneseq
        %v1405 = vshrl.u32 %v1404, 7
        %v1406 = vsub.s32 0, %v1405
        %v1407 = vrot.slane %v1379, %v1406
        %v1408 = vmul.f32 %v1407, %v1403
        %v1409 = vadd.f32 %v1355, %v1408
        %v1410 = vmul.f32 %v1391, %v1391
        %v1411 = vlaneseq
        %v1412 = vshrl.u32 %v1411, 7
        %v1413 = vsub.s32 0, %v1412
        %v1414 = vrot.slane %v1381, %v1413
        %v1415 = vmul.f32 %v1410, %v1414
        %v1416 = vmul.f32 %v1400, %v1400
        %v1417 = vlaneseq
        %v1418 = vshrl.u32 %v1417, 7
        %v1419 = vsub.s32 0, %v1418
        %v1420 = vrot.slane %v1382, %v1419
        %v1421 = vmul.f32 %v1416, %v1420
        %v1422 = vadd.f32 %v1415, %v1421
        %v1423 = vmul.f32 %v1422, 1.442695
        %v1424 = vpow.pop %v1423
        %v1425 = vlaneseq
        %v1426 = vshrl.u32 %v1425, 7
        %v1427 = vsub.s32 0, %v1426
        %v1428 = vrot.slane %v1380, %v1427
        %v1429 = vmul.f32 %v1428, %v1424
        %v1430 = vadd.f32 %v1376, %v1429
        %v1431 = vld [vmem:[%s325 + $0xf] sm:$0x1]
        %v1432 = vld [vmem:[%s325 + $0x27] sm:$0x1]
        %v1433 = vld [vmem:[%s325 + $0x3f] sm:$0x1]
        %v1434 = vld [vmem:[%s325 + $0x57] sm:$0x1]
        %v1435 = vld [vmem:[%s325 + $0x6f] sm:$0x1]
        %v1436 = vld [vmem:[%s325 + $0x87] sm:$0x1]
        %1437 = vset.pattern.permute.xlu0 15
        %1438 = vperm.xlu0 %1437, %v619
        %v1439 = vpop.permute.xlu0 %1438
        %v1441 = vlaneseq
        %v1442 = vshrl.u32 %v1441, 7
        %v1443 = vsub.s32 0, %v1442
        %v1444 = vrot.slane %v1431, %v1443
        %v1445 = vsub.f32 %v1439, %v1444
        %1446 = vset.pattern.permute.xlu0 39
        %1447 = vperm.xlu0 %1446, %v619
        %v1448 = vpop.permute.xlu0 %1447
        %v1450 = vlaneseq
        %v1451 = vshrl.u32 %v1450, 7
        %v1452 = vsub.s32 0, %v1451
        %v1453 = vrot.slane %v1432, %v1452
        %v1454 = vsub.f32 %v1448, %v1453
        %v1455 = vand.u32 2147483647, %v1445
        %v1456 = vand.u32 2147483647, %v1454
        %v1457 = vadd.f32 %v1455, %v1456
        %v1458 = vlaneseq
        %v1459 = vshrl.u32 %v1458, 7
        %v1460 = vsub.s32 0, %v1459
        %v1461 = vrot.slane %v1433, %v1460
        %v1462 = vmul.f32 %v1461, %v1457
        %v1463 = vadd.f32 %v1409, %v1462
        %v1464 = vmul.f32 %v1445, %v1445
        %v1465 = vlaneseq
        %v1466 = vshrl.u32 %v1465, 7
        %v1467 = vsub.s32 0, %v1466
        %v1468 = vrot.slane %v1435, %v1467
        %v1469 = vmul.f32 %v1464, %v1468
        %v1470 = vmul.f32 %v1454, %v1454
        %v1471 = vlaneseq
        %v1472 = vshrl.u32 %v1471, 7
        %v1473 = vsub.s32 0, %v1472
        %v1474 = vrot.slane %v1436, %v1473
        %v1475 = vmul.f32 %v1470, %v1474
        %v1476 = vadd.f32 %v1469, %v1475
        %v1477 = vmul.f32 %v1476, 1.442695
        %v1478 = vpow.pop %v1477
        %v1479 = vlaneseq
        %v1480 = vshrl.u32 %v1479, 7
        %v1481 = vsub.s32 0, %v1480
        %v1482 = vrot.slane %v1434, %v1481
        %v1483 = vmul.f32 %v1482, %v1478
        %v1484 = vadd.f32 %v1430, %v1483
        %v1485 = vld [vmem:[%s325 + $0x10] sm:$0x1]
        %v1486 = vld [vmem:[%s325 + $0x28] sm:$0x1]
        %v1487 = vld [vmem:[%s325 + $0x40] sm:$0x1]
        %v1488 = vld [vmem:[%s325 + $0x58] sm:$0x1]
        %v1489 = vld [vmem:[%s325 + $0x70] sm:$0x1]
        %v1490 = vld [vmem:[%s325 + $0x88] sm:$0x1]
        %1491 = vset.pattern.permute.xlu0 16
        %1492 = vperm.xlu0 %1491, %v619
        %v1493 = vpop.permute.xlu0 %1492
        %v1495 = vlaneseq
        %v1496 = vshrl.u32 %v1495, 7
        %v1497 = vsub.s32 0, %v1496
        %v1498 = vrot.slane %v1485, %v1497
        %v1499 = vsub.f32 %v1493, %v1498
        %1500 = vset.pattern.permute.xlu0 40
        %1501 = vperm.xlu0 %1500, %v619
        %v1502 = vpop.permute.xlu0 %1501
        %v1504 = vlaneseq
        %v1505 = vshrl.u32 %v1504, 7
        %v1506 = vsub.s32 0, %v1505
        %v1507 = vrot.slane %v1486, %v1506
        %v1508 = vsub.f32 %v1502, %v1507
        %v1509 = vand.u32 2147483647, %v1499
        %v1510 = vand.u32 2147483647, %v1508
        %v1511 = vadd.f32 %v1509, %v1510
        %v1512 = vlaneseq
        %v1513 = vshrl.u32 %v1512, 7
        %v1514 = vsub.s32 0, %v1513
        %v1515 = vrot.slane %v1487, %v1514
        %v1516 = vmul.f32 %v1515, %v1511
        %v1517 = vadd.f32 %v1463, %v1516
        %v1518 = vmul.f32 %v1499, %v1499
        %v1519 = vlaneseq
        %v1520 = vshrl.u32 %v1519, 7
        %v1521 = vsub.s32 0, %v1520
        %v1522 = vrot.slane %v1489, %v1521
        %v1523 = vmul.f32 %v1518, %v1522
        %v1524 = vmul.f32 %v1508, %v1508
        %v1525 = vlaneseq
        %v1526 = vshrl.u32 %v1525, 7
        %v1527 = vsub.s32 0, %v1526
        %v1528 = vrot.slane %v1490, %v1527
        %v1529 = vmul.f32 %v1524, %v1528
        %v1530 = vadd.f32 %v1523, %v1529
        %v1531 = vmul.f32 %v1530, 1.442695
        %v1532 = vpow.pop %v1531
        %v1533 = vlaneseq
        %v1534 = vshrl.u32 %v1533, 7
        %v1535 = vsub.s32 0, %v1534
        %v1536 = vrot.slane %v1488, %v1535
        %v1537 = vmul.f32 %v1536, %v1532
        %v1538 = vadd.f32 %v1484, %v1537
        %v1539 = vld [vmem:[%s325 + $0x11] sm:$0x1]
        %v1540 = vld [vmem:[%s325 + $0x29] sm:$0x1]
        %v1541 = vld [vmem:[%s325 + $0x41] sm:$0x1]
        %v1542 = vld [vmem:[%s325 + $0x59] sm:$0x1]
        %v1543 = vld [vmem:[%s325 + $0x71] sm:$0x1]
        %v1544 = vld [vmem:[%s325 + $0x89] sm:$0x1]
        %1545 = vset.pattern.permute.xlu0 17
        %1546 = vperm.xlu0 %1545, %v619
        %v1547 = vpop.permute.xlu0 %1546
        %v1549 = vlaneseq
        %v1550 = vshrl.u32 %v1549, 7
        %v1551 = vsub.s32 0, %v1550
        %v1552 = vrot.slane %v1539, %v1551
        %v1553 = vsub.f32 %v1547, %v1552
        %1554 = vset.pattern.permute.xlu0 41
        %1555 = vperm.xlu0 %1554, %v619
        %v1556 = vpop.permute.xlu0 %1555
        %v1558 = vlaneseq
        %v1559 = vshrl.u32 %v1558, 7
        %v1560 = vsub.s32 0, %v1559
        %v1561 = vrot.slane %v1540, %v1560
        %v1562 = vsub.f32 %v1556, %v1561
        %v1563 = vand.u32 2147483647, %v1553
        %v1564 = vand.u32 2147483647, %v1562
        %v1565 = vadd.f32 %v1563, %v1564
        %v1566 = vlaneseq
        %v1567 = vshrl.u32 %v1566, 7
        %v1568 = vsub.s32 0, %v1567
        %v1569 = vrot.slane %v1541, %v1568
        %v1570 = vmul.f32 %v1569, %v1565
        %v1571 = vadd.f32 %v1517, %v1570
        %v1572 = vmul.f32 %v1553, %v1553
        %v1573 = vlaneseq
        %v1574 = vshrl.u32 %v1573, 7
        %v1575 = vsub.s32 0, %v1574
        %v1576 = vrot.slane %v1543, %v1575
        %v1577 = vmul.f32 %v1572, %v1576
        %v1578 = vmul.f32 %v1562, %v1562
        %v1579 = vlaneseq
        %v1580 = vshrl.u32 %v1579, 7
        %v1581 = vsub.s32 0, %v1580
        %v1582 = vrot.slane %v1544, %v1581
        %v1583 = vmul.f32 %v1578, %v1582
        %v1584 = vadd.f32 %v1577, %v1583
        %v1585 = vmul.f32 %v1584, 1.442695
        %v1586 = vpow.pop %v1585
        %v1587 = vlaneseq
        %v1588 = vshrl.u32 %v1587, 7
        %v1589 = vsub.s32 0, %v1588
        %v1590 = vrot.slane %v1542, %v1589
        %v1591 = vmul.f32 %v1590, %v1586
        %v1592 = vadd.f32 %v1538, %v1591
        %v1593 = vld [vmem:[%s325 + $0x12] sm:$0x1]
        %v1594 = vld [vmem:[%s325 + $0x2a] sm:$0x1]
        %v1595 = vld [vmem:[%s325 + $0x42] sm:$0x1]
        %v1596 = vld [vmem:[%s325 + $0x5a] sm:$0x1]
        %v1597 = vld [vmem:[%s325 + $0x72] sm:$0x1]
        %v1598 = vld [vmem:[%s325 + $0x8a] sm:$0x1]
        %1599 = vset.pattern.permute.xlu0 18
        %1600 = vperm.xlu0 %1599, %v619
        %v1601 = vpop.permute.xlu0 %1600
        %v1603 = vlaneseq
        %v1604 = vshrl.u32 %v1603, 7
        %v1605 = vsub.s32 0, %v1604
        %v1606 = vrot.slane %v1593, %v1605
        %v1607 = vsub.f32 %v1601, %v1606
        %1608 = vset.pattern.permute.xlu0 42
        %1609 = vperm.xlu0 %1608, %v619
        %v1610 = vpop.permute.xlu0 %1609
        %v1612 = vlaneseq
        %v1613 = vshrl.u32 %v1612, 7
        %v1614 = vsub.s32 0, %v1613
        %v1615 = vrot.slane %v1594, %v1614
        %v1616 = vsub.f32 %v1610, %v1615
        %v1617 = vand.u32 2147483647, %v1607
        %v1618 = vand.u32 2147483647, %v1616
        %v1619 = vadd.f32 %v1617, %v1618
        %v1620 = vlaneseq
        %v1621 = vshrl.u32 %v1620, 7
        %v1622 = vsub.s32 0, %v1621
        %v1623 = vrot.slane %v1595, %v1622
        %v1624 = vmul.f32 %v1623, %v1619
        %v1625 = vadd.f32 %v1571, %v1624
        %v1626 = vmul.f32 %v1607, %v1607
        %v1627 = vlaneseq
        %v1628 = vshrl.u32 %v1627, 7
        %v1629 = vsub.s32 0, %v1628
        %v1630 = vrot.slane %v1597, %v1629
        %v1631 = vmul.f32 %v1626, %v1630
        %v1632 = vmul.f32 %v1616, %v1616
        %v1633 = vlaneseq
        %v1634 = vshrl.u32 %v1633, 7
        %v1635 = vsub.s32 0, %v1634
        %v1636 = vrot.slane %v1598, %v1635
        %v1637 = vmul.f32 %v1632, %v1636
        %v1638 = vadd.f32 %v1631, %v1637
        %v1639 = vmul.f32 %v1638, 1.442695
        %v1640 = vpow.pop %v1639
        %v1641 = vlaneseq
        %v1642 = vshrl.u32 %v1641, 7
        %v1643 = vsub.s32 0, %v1642
        %v1644 = vrot.slane %v1596, %v1643
        %v1645 = vmul.f32 %v1644, %v1640
        %v1646 = vadd.f32 %v1592, %v1645
        %v1647 = vld [vmem:[%s316 + $0xc] sm:$0x1]
        %v1648 = vadd.f32 %v618, %v1625
        %v1649 = vadd.f32 %v1648, %v1646
        %v1650 = vlaneseq
        %v1651 = vshrl.u32 %v1650, 7
        %v1652 = vsub.s32 0, %v1651
        %v1653 = vrot.slane %v1647, %v1652
        %v1654 = vadd.f32 %v1649, %v1653
        %1655 = vst [vmem:[%s375] sm:$0xff] %v1654
        %s1656 = sand.u32 %s183, 1
        %s1657 = scalar_lea.sflag [#allocation4], %s1656
        %s1658 = sand.u32 %s183, 1
        %s1659 = smul.addr %s1658, 8
        %s1660 = scalar_lea.vmem [#allocation8], %s1659
        // Predicated region
        $region53: #{tpu_custom_call.1} parent=39 // pred_check
          %p1661 = pneg %p193
        $region54: #{tpu_custom_call.1} parent=39 // pred_check_branch
          %1663 = sbr.rel (%p1661) target = $region56
        $region55: #{tpu_custom_call.1} parent=39 // pred_region
          %s1665 = ssub.s32 128, 128
          %1666 = vsyncadd %s1657, %s1665
          %s1667 = sadd.s32 %s30, %s29
          %s1668 = smul.addr %s1667, 128
          %s1669 = scalar_lea.hbm %s5, %s1668
          %s1671 = sshll.u32 %s1660, 4
          %s1672 = int_to_ptr.vmem [resolvable:$true] %s1671
          %1674 = dma.vmem_to_hbm [thread:$0]  %s1672, 128, %s1669, %s1657
        $region56: #{tpu_custom_call.1} parent=39 // pred_fallthru
          _
      $region40: #{tpu_custom_call.1} parent=5 // pred_fallthru
        _
      %p1675 = scmp.le.s32.totalorder 2, %s20
      // Predicated region
      $region57: #{tpu_custom_call.1} parent=5 // pred_check
        %p1676 = pneg %p1675
      $region58: #{tpu_custom_call.1} parent=5 // pred_check_branch
        %1678 = sbr.rel (%p1676) target = $region60
      $region59: #{tpu_custom_call.1} parent=5 // pred_region
        %s1679 = ssub.s32 %s20, 2
        // Predicated region
        $region61: #{tpu_custom_call.1} parent=59 // pred_check
          %p1680 = pneg %p199
        $region62: #{tpu_custom_call.1} parent=59 // pred_check_branch
          %1682 = sbr.rel (%p1680) target = $region64
        $region63: #{tpu_custom_call.1} parent=59 // pred_region
          %s1683 = sand.u32 %s184, 1
          %s1684 = scalar_lea.sflag [#allocation4], %s1683
          %s1685 = sand.u32 %s184, 1
          %s1686 = smul.addr %s1685, 8
          %s1687 = scalar_lea.vmem [#allocation8], %s1686
          %1688 = dma.done %s1684, 128
        $region64: #{tpu_custom_call.1} parent=59 // pred_fallthru
          _
      $region60: #{tpu_custom_call.1} parent=5 // pred_fallthru
        _
    $region6: #{tpu_custom_call.1} parent=1 // loop_footer
      %s24 = sadd.s32 1, %s20
    $region7: #{tpu_custom_call.1} parent=1 // loop_footer_branch
      %19 = sbr.rel target = $region3
    $region8: #{tpu_custom_call.1} parent=1 // loop_exit
      _
    %1689 = vsyncpa [#allocation3], 1
    %s1690 = scalar_lea.sflag [#allocation3], 1
    %1691 = vsyncpa %s1690, 1
    %1692 = vsyncpa [#allocation6], 1
    %s1693 = scalar_lea.sflag [#allocation6], 1
    %1694 = vsyncpa %s1693, 1
    %1695 = vsyncpa [#allocation4], 1
    %s1696 = scalar_lea.sflag [#allocation4], 1
    %1697 = vsyncpa %s1696, 1

</llo_original>
